<compile_context>
chip_gen: v7x
topology: tpu7x:2x2x1
jax: 0.10.0
libtpu: 0.0.40
codegen_flags: <defaults>
</compile_context>

<pallas_src>
import functools
import math

import jax
import jax.numpy as jnp
import numpy as np
from jax.experimental import pallas as pl
from jax.experimental.pallas import tpu as pltpu

EPS = 1e-6


# ----------------------------------------------------------------------------
# math shared by the Pallas kernel body and the pure-JAX reference
# ----------------------------------------------------------------------------
def _layer_norm(x, a, b):
    # Matches the module's LayerNorm: mean over last dim, std with Bessel's
    # correction (N-1), eps added to the STD (not the variance).
    n = x.shape[-1]
    mean = jnp.mean(x, axis=-1, keepdims=True)
    var = jnp.sum((x - mean) ** 2, axis=-1, keepdims=True) / (n - 1)
    return a * (x - mean) / (jnp.sqrt(var) + EPS) + b


def _attention_core(q, k, v, mask, wo, bo, n_heads):
    # q: (Sq, D) f32, already scaled by 1/sqrt(d_k); k, v: (Sk, D) f32.
    # mask: (Sq, Sk) int (1 = attend, 0 = masked, torch masked_fill semantics).
    Sq, D = q.shape
    d_k = D // n_heads
    keep = mask != 0

    # Cast ONCE per tensor (not per head); bf16 MXU inputs, f32 accumulation.
    q_bf = q.astype(jnp.bfloat16)
    k_bf = k.astype(jnp.bfloat16)
    v_bf = v.astype(jnp.bfloat16)

    ctx_heads = []
    for h in range(n_heads):
        sl = slice(h * d_k, (h + 1) * d_k)
        s = jnp.einsum('qd,kd->qk', q_bf[:, sl], k_bf[:, sl],
                       preferred_element_type=jnp.float32)          # (Sq, Sk)
        s = jnp.where(keep, s, -1e9)
        s = s - jnp.max(s, axis=-1, keepdims=True)
        p = jnp.exp(s)
        p = p / jnp.sum(p, axis=-1, keepdims=True)                   # exact
        ctx_heads.append(jnp.dot(p.astype(jnp.bfloat16), v_bf[:, sl],
                                 preferred_element_type=jnp.float32))

    # Single K=D output projection instead of H tiny K=d_k dots.
    ctx = jnp.concatenate(ctx_heads, axis=-1)                        # (Sq, D)
    return jnp.dot(ctx.astype(jnp.bfloat16), wo,
                   preferred_element_type=jnp.float32) + bo


def _self_attn(xn, mask, wqkv, bqkv, wo, bo, *, n_heads, scale):
    D = xn.shape[-1]
    qkv = jnp.dot(xn.astype(jnp.bfloat16), wqkv,
                  preferred_element_type=jnp.float32) + bqkv         # (Sq, 3D)
    q = qkv[:, :D] * scale           # fold 1/sqrt(d_k) into q (one small pass)
    k = qkv[:, D:2 * D]
    v = qkv[:, 2 * D:]
    return _attention_core(q, k, v, mask, wo, bo, n_heads)


def _cross_attn(xn, mem, mask, wq, bq, wkv, bkv, wo, bo, *, n_heads, scale):
    D = xn.shape[-1]
    q = (jnp.dot(xn.astype(jnp.bfloat16), wq,
                 preferred_element_type=jnp.float32) + bq) * scale   # (Sq, D)
    kv = jnp.dot(mem.astype(jnp.bfloat16), wkv,
                 preferred_element_type=jnp.float32) + bkv           # (Sk, 2D)
    return _attention_core(q, kv[:, :D], kv[:, D:], mask, wo, bo, n_heads)


def _ffn(x, w1, b1, w2, b2):
    h = jnp.maximum(
        jnp.dot(x.astype(jnp.bfloat16), w1,
                preferred_element_type=jnp.float32) + b1, 0.0)
    return jnp.dot(h.astype(jnp.bfloat16), w2,
                   preferred_element_type=jnp.float32) + b2


def _decoder_layer_math(x, mem, src_mask, tgt_mask, p, n_heads):
    # Dropout is identity (eval mode).
    d_k = x.shape[-1] // n_heads
    scale = 1.0 / math.sqrt(d_k)
    # sublayer 0: x + self_attn(LN(x), LN(x), LN(x), tgt_mask)
    xn = _layer_norm(x, *p["ln0"])
    x = x + _self_attn(xn, tgt_mask, *p["self_attn"], n_heads=n_heads, scale=scale)
    # sublayer 1: x + src_attn(LN(x), memory, memory, src_mask)
    xn = _layer_norm(x, *p["ln1"])
    x = x + _cross_attn(xn, mem, src_mask, *p["src_attn"],
                        n_heads=n_heads, scale=scale)
    # sublayer 2: x + FFN(LN(x))
    xn = _layer_norm(x, *p["ln2"])
    return x + _ffn(xn, *p["ffn"])


# ----------------------------------------------------------------------------
# parameter plumbing (one flat ordering shared by kernel and reference)
# ----------------------------------------------------------------------------
def _flat_params(params):
    return (list(params["self_attn"]) + list(params["src_attn"])
            + list(params["ffn"])
            + list(params["ln0"]) + list(params["ln1"]) + list(params["ln2"]))


def _pack_params(sa_wqkv, sa_bqkv, sa_wo, sa_bo,
                 ca_wq, ca_bq, ca_wkv, ca_bkv, ca_wo, ca_bo,
                 w1, b1, w2, b2,
                 ln0_a, ln0_b, ln1_a, ln1_b, ln2_a, ln2_b):
    return {
        "self_attn": (sa_wqkv, sa_bqkv, sa_wo, sa_bo),
        "src_attn": (ca_wq, ca_bq, ca_wkv, ca_bkv, ca_wo, ca_bo),
        "ffn": (w1, b1, w2, b2),
        "ln0": (ln0_a, ln0_b), "ln1": (ln1_a, ln1_b), "ln2": (ln2_a, ln2_b),
    }


# ----------------------------------------------------------------------------
# Pallas kernel (one fused body per batch element)
# ----------------------------------------------------------------------------
def _decoder_layer_kernel(n_heads, x_ref, mem_ref, src_mask_ref, tgt_mask_ref,
                          *rest):
    param_refs, o_ref = rest[:-1], rest[-1]
    p = _pack_params(*(r[...] for r in param_refs))
    o_ref[0] = _decoder_layer_math(x_ref[0], mem_ref[0],
                                   src_mask_ref[0], tgt_mask_ref[0],
                                   p, n_heads)


def decoder_layer(x, memory, src_mask, tgt_mask, params, n_heads):
    B, Sq, D = x.shape
    Sk = memory.shape[1]
    d_ff = params["ffn"][0].shape[1]
    flat = _flat_params(params)

    def full_spec(p):
        return pl.BlockSpec(p.shape, lambda b, _nd=p.ndim: (0,) * _nd)

    in_specs = ([pl.BlockSpec((1, Sq, D), lambda b: (b, 0, 0)),
                 pl.BlockSpec((1, Sk, D), lambda b: (b, 0, 0)),
                 pl.BlockSpec((1, Sq, Sk), lambda b: (b, 0, 0)),
                 pl.BlockSpec((1, Sq, Sq), lambda b: (b, 0, 0))]
                + [full_spec(p) for p in flat])

    flops = 2 * B * (Sq * D * 3 * D            # fused QKV
                     + 2 * Sq * Sq * D         # self-attn scores + ctx
                     + Sq * D * D              # self-attn Wo
                     + Sq * D * D              # cross-attn Q
                     + Sk * D * 2 * D          # cross-attn fused KV
                     + 2 * Sq * Sk * D         # cross-attn scores + ctx
                     + Sq * D * D              # cross-attn Wo
                     + 2 * Sq * D * d_ff)      # FFN
    transcendentals = B * Sq * (Sq + Sk)       # softmax exps
    param_bytes = sum(int(np.prod(p.shape)) * p.dtype.itemsize for p in flat)
    bytes_accessed = (8 * B * Sq * D            # x in + out (f32)
                      + 4 * B * Sk * D          # memory (f32)
                      + B * Sq * (Sq + Sk)      # int8 masks
                      + param_bytes)

    kernel = functools.partial(_decoder_layer_kernel, n_heads)
    return pl.pallas_call(
        kernel,
        out_shape=jax.ShapeDtypeStruct((B, Sq, D), jnp.float32),
        grid=(B,),
        in_specs=in_specs,
        out_specs=pl.BlockSpec((1, Sq, D), lambda b: (b, 0, 0)),
        compiler_params=pltpu.CompilerParams(
            dimension_semantics=("parallel",),
            vmem_limit_bytes=32 * 1024 * 1024),
        cost_estimate=pl.CostEstimate(flops=flops,
                                      transcendentals=transcendentals,
                                      bytes_accessed=bytes_accessed),
    )(x, memory, src_mask.astype(jnp.int8), tgt_mask.astype(jnp.int8), *flat)


# ----------------------------------------------------------------------------
# pure-JAX reference (identical math, run per batch element under XLA)
# ----------------------------------------------------------------------------
def decoder_layer_ref(x, memory, src_mask, tgt_mask, params, n_heads):
    src_i8 = src_mask.astype(jnp.int8)
    tgt_i8 = tgt_mask.astype(jnp.int8)
    outs = [_decoder_layer_math(x[b], memory[b], src_i8[b], tgt_i8[b],
                                params, n_heads)
            for b in range(x.shape[0])]
    return jnp.stack(outs)


# ----------------------------------------------------------------------------
# deterministic parameter construction (bf16 weights, fused QKV / KV layouts)
# ----------------------------------------------------------------------------
def init_params(key, d_model, d_ff):
    ks = jax.random.split(key, 20)

    def wmat(k, din, dout):
        return (0.1 * jax.random.normal(k, (din, dout), jnp.float32)
                ).astype(jnp.bfloat16)

    def bvec(k, dout):
        return 0.02 * jax.random.normal(k, (1, dout), jnp.float32)

    def ln(ka, kb):
        return (1.0 + 0.1 * jax.random.normal(ka, (1, d_model), jnp.float32),
                0.05 * jax.random.normal(kb, (1, d_model), jnp.float32))

    return {
        # self-attn: fused Wq|Wk|Wv (D, 3D), output projection (D, D)
        "self_attn": (wmat(ks[0], d_model, 3 * d_model), bvec(ks[1], 3 * d_model),
                      wmat(ks[2], d_model, d_model), bvec(ks[3], d_model)),
        # cross-attn: Wq separate (query from x), fused Wk|Wv (D, 2D) over memory
        "src_attn": (wmat(ks[4], d_model, d_model), bvec(ks[5], d_model),
                     wmat(ks[6], d_model, 2 * d_model), bvec(ks[7], 2 * d_model),
                     wmat(ks[8], d_model, d_model), bvec(ks[9], d_model)),
        "ffn": (wmat(ks[10], d_model, d_ff), bvec(ks[11], d_ff),
                wmat(ks[12], d_ff, d_model), bvec(ks[13], d_model)),
        "ln0": ln(ks[14], ks[15]),
        "ln1": ln(ks[16], ks[17]),
        "ln2": ln(ks[18], ks[19]),
    }


# ----------------------------------------------------------------------------
if __name__ == "__main__":
    base_key = jax.random.PRNGKey(0)

    def run_case(case_idx, B, S_tgt, S_src, D, H, D_ff):
        key = jax.random.fold_in(base_key, case_idx)
        k_x, k_m, k_p = jax.random.split(key, 3)
        x = jax.random.normal(k_x, (B, S_tgt, D), jnp.float32)
        memory = jax.random.normal(k_m, (B, S_src, D), jnp.float32)
        # masks: 1 = attend, 0 = masked (torch masked_fill(mask == 0, -1e9))
        tgt_mask = jnp.broadcast_to(
            jnp.tril(jnp.ones((S_tgt, S_tgt), jnp.float32)), (B, S_tgt, S_tgt))
        src_mask = jnp.ones((B, S_tgt, S_src), jnp.float32)
        params = init_params(k_p, D, D_ff)

        out = jax.block_until_ready(
            decoder_layer(x, memory, src_mask, tgt_mask, params, H))
        ref = decoder_layer_ref(x, memory, src_mask, tgt_mask, params, H)
        # Kernel and reference share identical bf16/f32 math; tolerance only
        # absorbs Mosaic-vs-XLA reduction-order / exp differences.
        np.testing.assert_allclose(np.asarray(out), np.asarray(ref),
                                   rtol=2e-2, atol=2e-2)

    # lane-friendly toy shapes (D and d_ff multiples of 128)
    run_case(0, B=2, S_tgt=16, S_src=16, D=128, H=4, D_ff=256)
    # larger D / H sanity check (per review), asymmetric src length
    run_case(1, B=2, S_tgt=16, S_src=32, D=256, H=8, D_ff=512)

    print("KERNEL_OK")
</pallas_src>

<mosaic_0001>
module attributes {stable_mosaic.version = 11 : i64} {
  func.func @_decoder_layer_kernel(%arg0: i32, %arg1: memref<1x16x128xf32, #tpu.memory_space<vmem>>, %arg2: memref<1x16x128xf32, #tpu.memory_space<vmem>>, %arg3: memref<1x16x16xi8, #tpu.memory_space<vmem>>, %arg4: memref<1x16x16xi8, #tpu.memory_space<vmem>>, %arg5: memref<128x384xbf16, #tpu.memory_space<vmem>>, %arg6: memref<1x384xf32, #tpu.memory_space<vmem>>, %arg7: memref<128x128xbf16, #tpu.memory_space<vmem>>, %arg8: memref<1x128xf32, #tpu.memory_space<vmem>>, %arg9: memref<128x128xbf16, #tpu.memory_space<vmem>>, %arg10: memref<1x128xf32, #tpu.memory_space<vmem>>, %arg11: memref<128x256xbf16, #tpu.memory_space<vmem>>, %arg12: memref<1x256xf32, #tpu.memory_space<vmem>>, %arg13: memref<128x128xbf16, #tpu.memory_space<vmem>>, %arg14: memref<1x128xf32, #tpu.memory_space<vmem>>, %arg15: memref<128x256xbf16, #tpu.memory_space<vmem>>, %arg16: memref<1x256xf32, #tpu.memory_space<vmem>>, %arg17: memref<256x128xbf16, #tpu.memory_space<vmem>>, %arg18: memref<1x128xf32, #tpu.memory_space<vmem>>, %arg19: memref<1x128xf32, #tpu.memory_space<vmem>>, %arg20: memref<1x128xf32, #tpu.memory_space<vmem>>, %arg21: memref<1x128xf32, #tpu.memory_space<vmem>>, %arg22: memref<1x128xf32, #tpu.memory_space<vmem>>, %arg23: memref<1x128xf32, #tpu.memory_space<vmem>>, %arg24: memref<1x128xf32, #tpu.memory_space<vmem>>, %arg25: memref<1x16x128xf32, #tpu.memory_space<vmem>>) attributes {dimension_semantics = [#tpu.dimension_semantics<parallel>], iteration_bounds = array<i64: 2>, scalar_prefetch = 0 : i64, scratch_operands = 0 : i64, tpu.core_type = #tpu.core_type<tc>, window_params = [{transform_indices = @transform_0, window_bounds = array<i64: 1, 16, 128>}, {transform_indices = @transform_1, window_bounds = array<i64: 1, 16, 128>}, {transform_indices = @transform_2, window_bounds = array<i64: 1, 16, 16>}, {transform_indices = @transform_3, window_bounds = array<i64: 1, 16, 16>}, {pipeline_mode = #tpu.pipeline_mode<synchronous>, transform_indices = @transform_4, window_bounds = array<i64: 128, 384>}, {pipeline_mode = #tpu.pipeline_mode<synchronous>, transform_indices = @transform_5, window_bounds = array<i64: 1, 384>}, {pipeline_mode = #tpu.pipeline_mode<synchronous>, transform_indices = @transform_6, window_bounds = array<i64: 128, 128>}, {pipeline_mode = #tpu.pipeline_mode<synchronous>, transform_indices = @transform_7, window_bounds = array<i64: 1, 128>}, {pipeline_mode = #tpu.pipeline_mode<synchronous>, transform_indices = @transform_8, window_bounds = array<i64: 128, 128>}, {pipeline_mode = #tpu.pipeline_mode<synchronous>, transform_indices = @transform_9, window_bounds = array<i64: 1, 128>}, {pipeline_mode = #tpu.pipeline_mode<synchronous>, transform_indices = @transform_10, window_bounds = array<i64: 128, 256>}, {pipeline_mode = #tpu.pipeline_mode<synchronous>, transform_indices = @transform_11, window_bounds = array<i64: 1, 256>}, {pipeline_mode = #tpu.pipeline_mode<synchronous>, transform_indices = @transform_12, window_bounds = array<i64: 128, 128>}, {pipeline_mode = #tpu.pipeline_mode<synchronous>, transform_indices = @transform_13, window_bounds = array<i64: 1, 128>}, {pipeline_mode = #tpu.pipeline_mode<synchronous>, transform_indices = @transform_14, window_bounds = array<i64: 128, 256>}, {pipeline_mode = #tpu.pipeline_mode<synchronous>, transform_indices = @transform_15, window_bounds = array<i64: 1, 256>}, {pipeline_mode = #tpu.pipeline_mode<synchronous>, transform_indices = @transform_16, window_bounds = array<i64: 256, 128>}, {pipeline_mode = #tpu.pipeline_mode<synchronous>, transform_indices = @transform_17, window_bounds = array<i64: 1, 128>}, {pipeline_mode = #tpu.pipeline_mode<synchronous>, transform_indices = @transform_18, window_bounds = array<i64: 1, 128>}, {pipeline_mode = #tpu.pipeline_mode<synchronous>, transform_indices = @transform_19, window_bounds = array<i64: 1, 128>}, {pipeline_mode = #tpu.pipeline_mode<synchronous>, transform_indices = @transform_20, window_bounds = array<i64: 1, 128>}, {pipeline_mode = #tpu.pipeline_mode<synchronous>, transform_indices = @transform_21, window_bounds = array<i64: 1, 128>}, {pipeline_mode = #tpu.pipeline_mode<synchronous>, transform_indices = @transform_22, window_bounds = array<i64: 1, 128>}, {pipeline_mode = #tpu.pipeline_mode<synchronous>, transform_indices = @transform_23, window_bounds = array<i64: 1, 128>}, {transform_indices = @transform_24, window_bounds = array<i64: 1, 16, 128>}]} {
    %c0 = arith.constant 0 : index
    %c0_0 = arith.constant 0 : index
    %0 = vector.load %arg5[%c0, %c0_0] : memref<128x384xbf16, #tpu.memory_space<vmem>>, vector<128x384xbf16>
    %c0_1 = arith.constant 0 : index
    %c0_2 = arith.constant 0 : index
    %1 = vector.load %arg6[%c0_1, %c0_2] : memref<1x384xf32, #tpu.memory_space<vmem>>, vector<1x384xf32>
    %c0_3 = arith.constant 0 : index
    %c0_4 = arith.constant 0 : index
    %2 = vector.load %arg7[%c0_3, %c0_4] : memref<128x128xbf16, #tpu.memory_space<vmem>>, vector<128x128xbf16>
    %c0_5 = arith.constant 0 : index
    %c0_6 = arith.constant 0 : index
    %3 = vector.load %arg8[%c0_5, %c0_6] : memref<1x128xf32, #tpu.memory_space<vmem>>, vector<1x128xf32>
    %c0_7 = arith.constant 0 : index
    %c0_8 = arith.constant 0 : index
    %4 = vector.load %arg9[%c0_7, %c0_8] : memref<128x128xbf16, #tpu.memory_space<vmem>>, vector<128x128xbf16>
    %c0_9 = arith.constant 0 : index
    %c0_10 = arith.constant 0 : index
    %5 = vector.load %arg10[%c0_9, %c0_10] : memref<1x128xf32, #tpu.memory_space<vmem>>, vector<1x128xf32>
    %c0_11 = arith.constant 0 : index
    %c0_12 = arith.constant 0 : index
    %6 = vector.load %arg11[%c0_11, %c0_12] : memref<128x256xbf16, #tpu.memory_space<vmem>>, vector<128x256xbf16>
    %c0_13 = arith.constant 0 : index
    %c0_14 = arith.constant 0 : index
    %7 = vector.load %arg12[%c0_13, %c0_14] : memref<1x256xf32, #tpu.memory_space<vmem>>, vector<1x256xf32>
    %c0_15 = arith.constant 0 : index
    %c0_16 = arith.constant 0 : index
    %8 = vector.load %arg13[%c0_15, %c0_16] : memref<128x128xbf16, #tpu.memory_space<vmem>>, vector<128x128xbf16>
    %c0_17 = arith.constant 0 : index
    %c0_18 = arith.constant 0 : index
    %9 = vector.load %arg14[%c0_17, %c0_18] : memref<1x128xf32, #tpu.memory_space<vmem>>, vector<1x128xf32>
    %c0_19 = arith.constant 0 : index
    %c0_20 = arith.constant 0 : index
    %10 = vector.load %arg15[%c0_19, %c0_20] : memref<128x256xbf16, #tpu.memory_space<vmem>>, vector<128x256xbf16>
    %c0_21 = arith.constant 0 : index
    %c0_22 = arith.constant 0 : index
    %11 = vector.load %arg16[%c0_21, %c0_22] : memref<1x256xf32, #tpu.memory_space<vmem>>, vector<1x256xf32>
    %c0_23 = arith.constant 0 : index
    %c0_24 = arith.constant 0 : index
    %12 = vector.load %arg17[%c0_23, %c0_24] : memref<256x128xbf16, #tpu.memory_space<vmem>>, vector<256x128xbf16>
    %c0_25 = arith.constant 0 : index
    %c0_26 = arith.constant 0 : index
    %13 = vector.load %arg18[%c0_25, %c0_26] : memref<1x128xf32, #tpu.memory_space<vmem>>, vector<1x128xf32>
    %c0_27 = arith.constant 0 : index
    %c0_28 = arith.constant 0 : index
    %14 = vector.load %arg19[%c0_27, %c0_28] : memref<1x128xf32, #tpu.memory_space<vmem>>, vector<1x128xf32>
    %c0_29 = arith.constant 0 : index
    %c0_30 = arith.constant 0 : index
    %15 = vector.load %arg20[%c0_29, %c0_30] : memref<1x128xf32, #tpu.memory_space<vmem>>, vector<1x128xf32>
    %c0_31 = arith.constant 0 : index
    %c0_32 = arith.constant 0 : index
    %16 = vector.load %arg21[%c0_31, %c0_32] : memref<1x128xf32, #tpu.memory_space<vmem>>, vector<1x128xf32>
    %c0_33 = arith.constant 0 : index
    %c0_34 = arith.constant 0 : index
    %17 = vector.load %arg22[%c0_33, %c0_34] : memref<1x128xf32, #tpu.memory_space<vmem>>, vector<1x128xf32>
    %c0_35 = arith.constant 0 : index
    %c0_36 = arith.constant 0 : index
    %18 = vector.load %arg23[%c0_35, %c0_36] : memref<1x128xf32, #tpu.memory_space<vmem>>, vector<1x128xf32>
    %c0_37 = arith.constant 0 : index
    %c0_38 = arith.constant 0 : index
    %19 = vector.load %arg24[%c0_37, %c0_38] : memref<1x128xf32, #tpu.memory_space<vmem>>, vector<1x128xf32>
    %c0_39 = arith.constant 0 : index
    %c0_40 = arith.constant 0 : index
    %c0_41 = arith.constant 0 : index
    %20 = vector.load %arg1[%c0_39, %c0_40, %c0_41] : memref<1x16x128xf32, #tpu.memory_space<vmem>>, vector<1x16x128xf32>
    %21 = vector.shape_cast %20 : vector<1x16x128xf32> to vector<16x128xf32>
    %c0_42 = arith.constant 0 : index
    %c0_43 = arith.constant 0 : index
    %c0_44 = arith.constant 0 : index
    %22 = vector.load %arg2[%c0_42, %c0_43, %c0_44] : memref<1x16x128xf32, #tpu.memory_space<vmem>>, vector<1x16x128xf32>
    %23 = vector.shape_cast %22 : vector<1x16x128xf32> to vector<16x128xf32>
    %c0_45 = arith.constant 0 : index
    %c0_46 = arith.constant 0 : index
    %c0_47 = arith.constant 0 : index
    %24 = vector.load %arg3[%c0_45, %c0_46, %c0_47] : memref<1x16x16xi8, #tpu.memory_space<vmem>>, vector<1x16x16xi8>
    %25 = vector.shape_cast %24 : vector<1x16x16xi8> to vector<16x16xi8>
    %c0_48 = arith.constant 0 : index
    %c0_49 = arith.constant 0 : index
    %c0_50 = arith.constant 0 : index
    %26 = vector.load %arg4[%c0_48, %c0_49, %c0_50] : memref<1x16x16xi8, #tpu.memory_space<vmem>>, vector<1x16x16xi8>
    %27 = vector.shape_cast %26 : vector<1x16x16xi8> to vector<16x16xi8>
    %cst = arith.constant dense<0.000000e+00> : vector<16xf32>
    %28 = vector.multi_reduction <add>, %21, %cst [1] : vector<16x128xf32> to vector<16xf32>
    %29 = vector.shape_cast %28 : vector<16xf32> to vector<16x1xf32>
    %cst_51 = arith.constant 1.280000e+02 : f32
    %30 = vector.broadcast %cst_51 : f32 to vector<16x1xf32>
    %31 = arith.divf %29, %30 : vector<16x1xf32>
    %32 = vector.broadcast %31 : vector<16x1xf32> to vector<16x128xf32>
    %33 = arith.subf %21, %32 : vector<16x128xf32>
    %34 = arith.mulf %33, %33 : vector<16x128xf32>
    %cst_52 = arith.constant dense<0.000000e+00> : vector<16xf32>
    %35 = vector.multi_reduction <add>, %34, %cst_52 [1] : vector<16x128xf32> to vector<16xf32>
    %36 = vector.shape_cast %35 : vector<16xf32> to vector<16x1xf32>
    %cst_53 = arith.constant 1.270000e+02 : f32
    %37 = vector.broadcast %cst_53 : f32 to vector<16x1xf32>
    %38 = arith.divf %36, %37 : vector<16x1xf32>
    %39 = vector.broadcast %31 : vector<16x1xf32> to vector<16x128xf32>
    %40 = arith.subf %21, %39 : vector<16x128xf32>
    %41 = vector.broadcast %14 : vector<1x128xf32> to vector<16x128xf32>
    %42 = arith.mulf %41, %40 : vector<16x128xf32>
    %43 = math.sqrt %38 : vector<16x1xf32>
    %cst_54 = arith.constant 9.99999997E-7 : f32
    %44 = vector.broadcast %cst_54 : f32 to vector<16x1xf32>
    %45 = arith.addf %43, %44 : vector<16x1xf32>
    %46 = vector.broadcast %45 : vector<16x1xf32> to vector<16x128xf32>
    %47 = arith.divf %42, %46 : vector<16x128xf32>
    %48 = vector.broadcast %15 : vector<1x128xf32> to vector<16x128xf32>
    %49 = arith.addf %47, %48 : vector<16x128xf32>
    %50 = arith.truncf %49 : vector<16x128xf32> to vector<16x128xbf16>
    %cst_55 = arith.constant dense<0.000000e+00> : vector<16x384xf32>
    %51 = tpu.matmul %50, %0, %cst_55 {dimension_numbers = #tpu.dot_dimension_numbers<[1], [0], [0], [1], [0, 0, 1, 1], [], []>} : vector<16x128xbf16>, vector<128x384xbf16>, vector<16x384xf32> -> vector<16x384xf32>
    %52 = vector.broadcast %1 : vector<1x384xf32> to vector<16x384xf32>
    %53 = arith.addf %51, %52 : vector<16x384xf32>
    %54 = vector.extract_strided_slice %53 {offsets = [0, 0], sizes = [16, 128], strides = [1, 1]} : vector<16x384xf32> to vector<16x128xf32>
    %cst_56 = arith.constant 0.176776692 : f32
    %55 = vector.broadcast %cst_56 : f32 to vector<16x128xf32>
    %56 = arith.mulf %54, %55 : vector<16x128xf32>
    %57 = vector.extract_strided_slice %53 {offsets = [0, 128], sizes = [16, 128], strides = [1, 1]} : vector<16x384xf32> to vector<16x128xf32>
    %58 = vector.extract_strided_slice %53 {offsets = [0, 256], sizes = [16, 128], strides = [1, 1]} : vector<16x384xf32> to vector<16x128xf32>
    %c0_i8 = arith.constant 0 : i8
    %59 = vector.broadcast %c0_i8 : i8 to vector<16x16xi8>
    %60 = arith.cmpi ne, %27, %59 : vector<16x16xi8>
    %61 = arith.truncf %56 : vector<16x128xf32> to vector<16x128xbf16>
    %62 = arith.truncf %57 : vector<16x128xf32> to vector<16x128xbf16>
    %63 = arith.truncf %58 : vector<16x128xf32> to vector<16x128xbf16>
    %64 = vector.extract_strided_slice %61 {offsets = [0, 0], sizes = [16, 32], strides = [1, 1]} : vector<16x128xbf16> to vector<16x32xbf16>
    %65 = vector.extract_strided_slice %62 {offsets = [0, 0], sizes = [16, 32], strides = [1, 1]} : vector<16x128xbf16> to vector<16x32xbf16>
    "tpu.trace_start"() <{level = 10 : i32, message = "qd,kd->qk"}> : () -> ()
    %cst_57 = arith.constant dense<0.000000e+00> : vector<16x16xf32>
    %66 = tpu.matmul %64, %65, %cst_57 {dimension_numbers = #tpu.dot_dimension_numbers<[1], [1], [0], [0], [0, 0, 1, 0], [], []>} : vector<16x32xbf16>, vector<16x32xbf16>, vector<16x16xf32> -> vector<16x16xf32>
    %cst_58 = arith.constant -1.000000e+09 : f32
    "tpu.trace_stop"() : () -> ()
    %67 = vector.broadcast %cst_58 : f32 to vector<16x16xf32>
    %68 = arith.select %60, %66, %67 : vector<16x16xi1>, vector<16x16xf32>
    %cst_59 = arith.constant dense<0xFF800000> : vector<16xf32>
    %69 = vector.multi_reduction <maximumf>, %68, %cst_59 [1] : vector<16x16xf32> to vector<16xf32>
    %70 = vector.shape_cast %69 : vector<16xf32> to vector<16x1xf32>
    %71 = vector.broadcast %70 : vector<16x1xf32> to vector<16x16xf32>
    %72 = arith.subf %68, %71 : vector<16x16xf32>
    %73 = math.exp %72 : vector<16x16xf32>
    %cst_60 = arith.constant dense<0.000000e+00> : vector<16xf32>
    %74 = vector.multi_reduction <add>, %73, %cst_60 [1] : vector<16x16xf32> to vector<16xf32>
    %75 = vector.shape_cast %74 : vector<16xf32> to vector<16x1xf32>
    %76 = vector.broadcast %75 : vector<16x1xf32> to vector<16x16xf32>
    %77 = arith.divf %73, %76 : vector<16x16xf32>
    %78 = arith.truncf %77 : vector<16x16xf32> to vector<16x16xbf16>
    %79 = vector.extract_strided_slice %63 {offsets = [0, 0], sizes = [16, 32], strides = [1, 1]} : vector<16x128xbf16> to vector<16x32xbf16>
    %cst_61 = arith.constant dense<0.000000e+00> : vector<16x32xf32>
    %80 = tpu.matmul %78, %79, %cst_61 {dimension_numbers = #tpu.dot_dimension_numbers<[1], [0], [0], [1], [0, 0, 1, 1], [], []>} : vector<16x16xbf16>, vector<16x32xbf16>, vector<16x32xf32> -> vector<16x32xf32>
    %81 = vector.extract_strided_slice %61 {offsets = [0, 32], sizes = [16, 32], strides = [1, 1]} : vector<16x128xbf16> to vector<16x32xbf16>
    %82 = vector.extract_strided_slice %62 {offsets = [0, 32], sizes = [16, 32], strides = [1, 1]} : vector<16x128xbf16> to vector<16x32xbf16>
    "tpu.trace_start"() <{level = 10 : i32, message = "qd,kd->qk"}> : () -> ()
    %cst_62 = arith.constant dense<0.000000e+00> : vector<16x16xf32>
    %83 = tpu.matmul %81, %82, %cst_62 {dimension_numbers = #tpu.dot_dimension_numbers<[1], [1], [0], [0], [0, 0, 1, 0], [], []>} : vector<16x32xbf16>, vector<16x32xbf16>, vector<16x16xf32> -> vector<16x16xf32>
    %cst_63 = arith.constant -1.000000e+09 : f32
    "tpu.trace_stop"() : () -> ()
    %84 = vector.broadcast %cst_63 : f32 to vector<16x16xf32>
    %85 = arith.select %60, %83, %84 : vector<16x16xi1>, vector<16x16xf32>
    %cst_64 = arith.constant dense<0xFF800000> : vector<16xf32>
    %86 = vector.multi_reduction <maximumf>, %85, %cst_64 [1] : vector<16x16xf32> to vector<16xf32>
    %87 = vector.shape_cast %86 : vector<16xf32> to vector<16x1xf32>
    %88 = vector.broadcast %87 : vector<16x1xf32> to vector<16x16xf32>
    %89 = arith.subf %85, %88 : vector<16x16xf32>
    %90 = math.exp %89 : vector<16x16xf32>
    %cst_65 = arith.constant dense<0.000000e+00> : vector<16xf32>
    %91 = vector.multi_reduction <add>, %90, %cst_65 [1] : vector<16x16xf32> to vector<16xf32>
    %92 = vector.shape_cast %91 : vector<16xf32> to vector<16x1xf32>
    %93 = vector.broadcast %92 : vector<16x1xf32> to vector<16x16xf32>
    %94 = arith.divf %90, %93 : vector<16x16xf32>
    %95 = arith.truncf %94 : vector<16x16xf32> to vector<16x16xbf16>
    %96 = vector.extract_strided_slice %63 {offsets = [0, 32], sizes = [16, 32], strides = [1, 1]} : vector<16x128xbf16> to vector<16x32xbf16>
    %cst_66 = arith.constant dense<0.000000e+00> : vector<16x32xf32>
    %97 = tpu.matmul %95, %96, %cst_66 {dimension_numbers = #tpu.dot_dimension_numbers<[1], [0], [0], [1], [0, 0, 1, 1], [], []>} : vector<16x16xbf16>, vector<16x32xbf16>, vector<16x32xf32> -> vector<16x32xf32>
    %98 = vector.extract_strided_slice %61 {offsets = [0, 64], sizes = [16, 32], strides = [1, 1]} : vector<16x128xbf16> to vector<16x32xbf16>
    %99 = vector.extract_strided_slice %62 {offsets = [0, 64], sizes = [16, 32], strides = [1, 1]} : vector<16x128xbf16> to vector<16x32xbf16>
    "tpu.trace_start"() <{level = 10 : i32, message = "qd,kd->qk"}> : () -> ()
    %cst_67 = arith.constant dense<0.000000e+00> : vector<16x16xf32>
    %100 = tpu.matmul %98, %99, %cst_67 {dimension_numbers = #tpu.dot_dimension_numbers<[1], [1], [0], [0], [0, 0, 1, 0], [], []>} : vector<16x32xbf16>, vector<16x32xbf16>, vector<16x16xf32> -> vector<16x16xf32>
    %cst_68 = arith.constant -1.000000e+09 : f32
    "tpu.trace_stop"() : () -> ()
    %101 = vector.broadcast %cst_68 : f32 to vector<16x16xf32>
    %102 = arith.select %60, %100, %101 : vector<16x16xi1>, vector<16x16xf32>
    %cst_69 = arith.constant dense<0xFF800000> : vector<16xf32>
    %103 = vector.multi_reduction <maximumf>, %102, %cst_69 [1] : vector<16x16xf32> to vector<16xf32>
    %104 = vector.shape_cast %103 : vector<16xf32> to vector<16x1xf32>
    %105 = vector.broadcast %104 : vector<16x1xf32> to vector<16x16xf32>
    %106 = arith.subf %102, %105 : vector<16x16xf32>
    %107 = math.exp %106 : vector<16x16xf32>
    %cst_70 = arith.constant dense<0.000000e+00> : vector<16xf32>
    %108 = vector.multi_reduction <add>, %107, %cst_70 [1] : vector<16x16xf32> to vector<16xf32>
    %109 = vector.shape_cast %108 : vector<16xf32> to vector<16x1xf32>
    %110 = vector.broadcast %109 : vector<16x1xf32> to vector<16x16xf32>
    %111 = arith.divf %107, %110 : vector<16x16xf32>
    %112 = arith.truncf %111 : vector<16x16xf32> to vector<16x16xbf16>
    %113 = vector.extract_strided_slice %63 {offsets = [0, 64], sizes = [16, 32], strides = [1, 1]} : vector<16x128xbf16> to vector<16x32xbf16>
    %cst_71 = arith.constant dense<0.000000e+00> : vector<16x32xf32>
    %114 = tpu.matmul %112, %113, %cst_71 {dimension_numbers = #tpu.dot_dimension_numbers<[1], [0], [0], [1], [0, 0, 1, 1], [], []>} : vector<16x16xbf16>, vector<16x32xbf16>, vector<16x32xf32> -> vector<16x32xf32>
    %115 = vector.extract_strided_slice %61 {offsets = [0, 96], sizes = [16, 32], strides = [1, 1]} : vector<16x128xbf16> to vector<16x32xbf16>
    %116 = vector.extract_strided_slice %62 {offsets = [0, 96], sizes = [16, 32], strides = [1, 1]} : vector<16x128xbf16> to vector<16x32xbf16>
    "tpu.trace_start"() <{level = 10 : i32, message = "qd,kd->qk"}> : () -> ()
    %cst_72 = arith.constant dense<0.000000e+00> : vector<16x16xf32>
    %117 = tpu.matmul %115, %116, %cst_72 {dimension_numbers = #tpu.dot_dimension_numbers<[1], [1], [0], [0], [0, 0, 1, 0], [], []>} : vector<16x32xbf16>, vector<16x32xbf16>, vector<16x16xf32> -> vector<16x16xf32>
    %cst_73 = arith.constant -1.000000e+09 : f32
    "tpu.trace_stop"() : () -> ()
    %118 = vector.broadcast %cst_73 : f32 to vector<16x16xf32>
    %119 = arith.select %60, %117, %118 : vector<16x16xi1>, vector<16x16xf32>
    %cst_74 = arith.constant dense<0xFF800000> : vector<16xf32>
    %120 = vector.multi_reduction <maximumf>, %119, %cst_74 [1] : vector<16x16xf32> to vector<16xf32>
    %121 = vector.shape_cast %120 : vector<16xf32> to vector<16x1xf32>
    %122 = vector.broadcast %121 : vector<16x1xf32> to vector<16x16xf32>
    %123 = arith.subf %119, %122 : vector<16x16xf32>
    %124 = math.exp %123 : vector<16x16xf32>
    %cst_75 = arith.constant dense<0.000000e+00> : vector<16xf32>
    %125 = vector.multi_reduction <add>, %124, %cst_75 [1] : vector<16x16xf32> to vector<16xf32>
    %126 = vector.shape_cast %125 : vector<16xf32> to vector<16x1xf32>
    %127 = vector.broadcast %126 : vector<16x1xf32> to vector<16x16xf32>
    %128 = arith.divf %124, %127 : vector<16x16xf32>
    %129 = arith.truncf %128 : vector<16x16xf32> to vector<16x16xbf16>
    %130 = vector.extract_strided_slice %63 {offsets = [0, 96], sizes = [16, 32], strides = [1, 1]} : vector<16x128xbf16> to vector<16x32xbf16>
    %cst_76 = arith.constant dense<0.000000e+00> : vector<16x32xf32>
    %131 = tpu.matmul %129, %130, %cst_76 {dimension_numbers = #tpu.dot_dimension_numbers<[1], [0], [0], [1], [0, 0, 1, 1], [], []>} : vector<16x16xbf16>, vector<16x32xbf16>, vector<16x32xf32> -> vector<16x32xf32>
    %132 = tpu.concatenate %80, %97, %114, %131 in 1 : vector<16x32xf32>, vector<16x32xf32>, vector<16x32xf32>, vector<16x32xf32> -> vector<16x128xf32>
    %133 = arith.truncf %132 : vector<16x128xf32> to vector<16x128xbf16>
    %cst_77 = arith.constant dense<0.000000e+00> : vector<16x128xf32>
    %134 = tpu.matmul %133, %2, %cst_77 {dimension_numbers = #tpu.dot_dimension_numbers<[1], [0], [0], [1], [0, 0, 1, 1], [], []>} : vector<16x128xbf16>, vector<128x128xbf16>, vector<16x128xf32> -> vector<16x128xf32>
    %135 = vector.broadcast %3 : vector<1x128xf32> to vector<16x128xf32>
    %136 = arith.addf %134, %135 : vector<16x128xf32>
    %137 = arith.addf %21, %136 : vector<16x128xf32>
    %cst_78 = arith.constant dense<0.000000e+00> : vector<16xf32>
    %138 = vector.multi_reduction <add>, %137, %cst_78 [1] : vector<16x128xf32> to vector<16xf32>
    %139 = vector.shape_cast %138 : vector<16xf32> to vector<16x1xf32>
    %cst_79 = arith.constant 1.280000e+02 : f32
    %140 = vector.broadcast %cst_79 : f32 to vector<16x1xf32>
    %141 = arith.divf %139, %140 : vector<16x1xf32>
    %142 = vector.broadcast %141 : vector<16x1xf32> to vector<16x128xf32>
    %143 = arith.subf %137, %142 : vector<16x128xf32>
    %144 = arith.mulf %143, %143 : vector<16x128xf32>
    %cst_80 = arith.constant dense<0.000000e+00> : vector<16xf32>
    %145 = vector.multi_reduction <add>, %144, %cst_80 [1] : vector<16x128xf32> to vector<16xf32>
    %146 = vector.shape_cast %145 : vector<16xf32> to vector<16x1xf32>
    %cst_81 = arith.constant 1.270000e+02 : f32
    %147 = vector.broadcast %cst_81 : f32 to vector<16x1xf32>
    %148 = arith.divf %146, %147 : vector<16x1xf32>
    %149 = vector.broadcast %141 : vector<16x1xf32> to vector<16x128xf32>
    %150 = arith.subf %137, %149 : vector<16x128xf32>
    %151 = vector.broadcast %16 : vector<1x128xf32> to vector<16x128xf32>
    %152 = arith.mulf %151, %150 : vector<16x128xf32>
    %153 = math.sqrt %148 : vector<16x1xf32>
    %cst_82 = arith.constant 9.99999997E-7 : f32
    %154 = vector.broadcast %cst_82 : f32 to vector<16x1xf32>
    %155 = arith.addf %153, %154 : vector<16x1xf32>
    %156 = vector.broadcast %155 : vector<16x1xf32> to vector<16x128xf32>
    %157 = arith.divf %152, %156 : vector<16x128xf32>
    %158 = vector.broadcast %17 : vector<1x128xf32> to vector<16x128xf32>
    %159 = arith.addf %157, %158 : vector<16x128xf32>
    %160 = arith.truncf %159 : vector<16x128xf32> to vector<16x128xbf16>
    %cst_83 = arith.constant dense<0.000000e+00> : vector<16x128xf32>
    %161 = tpu.matmul %160, %4, %cst_83 {dimension_numbers = #tpu.dot_dimension_numbers<[1], [0], [0], [1], [0, 0, 1, 1], [], []>} : vector<16x128xbf16>, vector<128x128xbf16>, vector<16x128xf32> -> vector<16x128xf32>
    %162 = vector.broadcast %5 : vector<1x128xf32> to vector<16x128xf32>
    %163 = arith.addf %161, %162 : vector<16x128xf32>
    %cst_84 = arith.constant 0.176776692 : f32
    %164 = vector.broadcast %cst_84 : f32 to vector<16x128xf32>
    %165 = arith.mulf %163, %164 : vector<16x128xf32>
    %166 = arith.truncf %23 : vector<16x128xf32> to vector<16x128xbf16>
    %cst_85 = arith.constant dense<0.000000e+00> : vector<16x256xf32>
    %167 = tpu.matmul %166, %6, %cst_85 {dimension_numbers = #tpu.dot_dimension_numbers<[1], [0], [0], [1], [0, 0, 1, 1], [], []>} : vector<16x128xbf16>, vector<128x256xbf16>, vector<16x256xf32> -> vector<16x256xf32>
    %168 = vector.broadcast %7 : vector<1x256xf32> to vector<16x256xf32>
    %169 = arith.addf %167, %168 : vector<16x256xf32>
    %170 = vector.extract_strided_slice %169 {offsets = [0, 0], sizes = [16, 128], strides = [1, 1]} : vector<16x256xf32> to vector<16x128xf32>
    %171 = vector.extract_strided_slice %169 {offsets = [0, 128], sizes = [16, 128], strides = [1, 1]} : vector<16x256xf32> to vector<16x128xf32>
    %c0_i8_86 = arith.constant 0 : i8
    %172 = vector.broadcast %c0_i8_86 : i8 to vector<16x16xi8>
    %173 = arith.cmpi ne, %25, %172 : vector<16x16xi8>
    %174 = arith.truncf %165 : vector<16x128xf32> to vector<16x128xbf16>
    %175 = arith.truncf %170 : vector<16x128xf32> to vector<16x128xbf16>
    %176 = arith.truncf %171 : vector<16x128xf32> to vector<16x128xbf16>
    %177 = vector.extract_strided_slice %174 {offsets = [0, 0], sizes = [16, 32], strides = [1, 1]} : vector<16x128xbf16> to vector<16x32xbf16>
    %178 = vector.extract_strided_slice %175 {offsets = [0, 0], sizes = [16, 32], strides = [1, 1]} : vector<16x128xbf16> to vector<16x32xbf16>
    "tpu.trace_start"() <{level = 10 : i32, message = "qd,kd->qk"}> : () -> ()
    %cst_87 = arith.constant dense<0.000000e+00> : vector<16x16xf32>
    %179 = tpu.matmul %177, %178, %cst_87 {dimension_numbers = #tpu.dot_dimension_numbers<[1], [1], [0], [0], [0, 0, 1, 0], [], []>} : vector<16x32xbf16>, vector<16x32xbf16>, vector<16x16xf32> -> vector<16x16xf32>
    %cst_88 = arith.constant -1.000000e+09 : f32
    "tpu.trace_stop"() : () -> ()
    %180 = vector.broadcast %cst_88 : f32 to vector<16x16xf32>
    %181 = arith.select %173, %179, %180 : vector<16x16xi1>, vector<16x16xf32>
    %cst_89 = arith.constant dense<0xFF800000> : vector<16xf32>
    %182 = vector.multi_reduction <maximumf>, %181, %cst_89 [1] : vector<16x16xf32> to vector<16xf32>
    %183 = vector.shape_cast %182 : vector<16xf32> to vector<16x1xf32>
    %184 = vector.broadcast %183 : vector<16x1xf32> to vector<16x16xf32>
    %185 = arith.subf %181, %184 : vector<16x16xf32>
    %186 = math.exp %185 : vector<16x16xf32>
    %cst_90 = arith.constant dense<0.000000e+00> : vector<16xf32>
    %187 = vector.multi_reduction <add>, %186, %cst_90 [1] : vector<16x16xf32> to vector<16xf32>
    %188 = vector.shape_cast %187 : vector<16xf32> to vector<16x1xf32>
    %189 = vector.broadcast %188 : vector<16x1xf32> to vector<16x16xf32>
    %190 = arith.divf %186, %189 : vector<16x16xf32>
    %191 = arith.truncf %190 : vector<16x16xf32> to vector<16x16xbf16>
    %192 = vector.extract_strided_slice %176 {offsets = [0, 0], sizes = [16, 32], strides = [1, 1]} : vector<16x128xbf16> to vector<16x32xbf16>
    %cst_91 = arith.constant dense<0.000000e+00> : vector<16x32xf32>
    %193 = tpu.matmul %191, %192, %cst_91 {dimension_numbers = #tpu.dot_dimension_numbers<[1], [0], [0], [1], [0, 0, 1, 1], [], []>} : vector<16x16xbf16>, vector<16x32xbf16>, vector<16x32xf32> -> vector<16x32xf32>
    %194 = vector.extract_strided_slice %174 {offsets = [0, 32], sizes = [16, 32], strides = [1, 1]} : vector<16x128xbf16> to vector<16x32xbf16>
    %195 = vector.extract_strided_slice %175 {offsets = [0, 32], sizes = [16, 32], strides = [1, 1]} : vector<16x128xbf16> to vector<16x32xbf16>
    "tpu.trace_start"() <{level = 10 : i32, message = "qd,kd->qk"}> : () -> ()
    %cst_92 = arith.constant dense<0.000000e+00> : vector<16x16xf32>
    %196 = tpu.matmul %194, %195, %cst_92 {dimension_numbers = #tpu.dot_dimension_numbers<[1], [1], [0], [0], [0, 0, 1, 0], [], []>} : vector<16x32xbf16>, vector<16x32xbf16>, vector<16x16xf32> -> vector<16x16xf32>
    %cst_93 = arith.constant -1.000000e+09 : f32
    "tpu.trace_stop"() : () -> ()
    %197 = vector.broadcast %cst_93 : f32 to vector<16x16xf32>
    %198 = arith.select %173, %196, %197 : vector<16x16xi1>, vector<16x16xf32>
    %cst_94 = arith.constant dense<0xFF800000> : vector<16xf32>
    %199 = vector.multi_reduction <maximumf>, %198, %cst_94 [1] : vector<16x16xf32> to vector<16xf32>
    %200 = vector.shape_cast %199 : vector<16xf32> to vector<16x1xf32>
    %201 = vector.broadcast %200 : vector<16x1xf32> to vector<16x16xf32>
    %202 = arith.subf %198, %201 : vector<16x16xf32>
    %203 = math.exp %202 : vector<16x16xf32>
    %cst_95 = arith.constant dense<0.000000e+00> : vector<16xf32>
    %204 = vector.multi_reduction <add>, %203, %cst_95 [1] : vector<16x16xf32> to vector<16xf32>
    %205 = vector.shape_cast %204 : vector<16xf32> to vector<16x1xf32>
    %206 = vector.broadcast %205 : vector<16x1xf32> to vector<16x16xf32>
    %207 = arith.divf %203, %206 : vector<16x16xf32>
    %208 = arith.truncf %207 : vector<16x16xf32> to vector<16x16xbf16>
    %209 = vector.extract_strided_slice %176 {offsets = [0, 32], sizes = [16, 32], strides = [1, 1]} : vector<16x128xbf16> to vector<16x32xbf16>
    %cst_96 = arith.constant dense<0.000000e+00> : vector<16x32xf32>
    %210 = tpu.matmul %208, %209, %cst_96 {dimension_numbers = #tpu.dot_dimension_numbers<[1], [0], [0], [1], [0, 0, 1, 1], [], []>} : vector<16x16xbf16>, vector<16x32xbf16>, vector<16x32xf32> -> vector<16x32xf32>
    %211 = vector.extract_strided_slice %174 {offsets = [0, 64], sizes = [16, 32], strides = [1, 1]} : vector<16x128xbf16> to vector<16x32xbf16>
    %212 = vector.extract_strided_slice %175 {offsets = [0, 64], sizes = [16, 32], strides = [1, 1]} : vector<16x128xbf16> to vector<16x32xbf16>
    "tpu.trace_start"() <{level = 10 : i32, message = "qd,kd->qk"}> : () -> ()
    %cst_97 = arith.constant dense<0.000000e+00> : vector<16x16xf32>
    %213 = tpu.matmul %211, %212, %cst_97 {dimension_numbers = #tpu.dot_dimension_numbers<[1], [1], [0], [0], [0, 0, 1, 0], [], []>} : vector<16x32xbf16>, vector<16x32xbf16>, vector<16x16xf32> -> vector<16x16xf32>
    %cst_98 = arith.constant -1.000000e+09 : f32
    "tpu.trace_stop"() : () -> ()
    %214 = vector.broadcast %cst_98 : f32 to vector<16x16xf32>
    %215 = arith.select %173, %213, %214 : vector<16x16xi1>, vector<16x16xf32>
    %cst_99 = arith.constant dense<0xFF800000> : vector<16xf32>
    %216 = vector.multi_reduction <maximumf>, %215, %cst_99 [1] : vector<16x16xf32> to vector<16xf32>
    %217 = vector.shape_cast %216 : vector<16xf32> to vector<16x1xf32>
    %218 = vector.broadcast %217 : vector<16x1xf32> to vector<16x16xf32>
    %219 = arith.subf %215, %218 : vector<16x16xf32>
    %220 = math.exp %219 : vector<16x16xf32>
    %cst_100 = arith.constant dense<0.000000e+00> : vector<16xf32>
    %221 = vector.multi_reduction <add>, %220, %cst_100 [1] : vector<16x16xf32> to vector<16xf32>
    %222 = vector.shape_cast %221 : vector<16xf32> to vector<16x1xf32>
    %223 = vector.broadcast %222 : vector<16x1xf32> to vector<16x16xf32>
    %224 = arith.divf %220, %223 : vector<16x16xf32>
    %225 = arith.truncf %224 : vector<16x16xf32> to vector<16x16xbf16>
    %226 = vector.extract_strided_slice %176 {offsets = [0, 64], sizes = [16, 32], strides = [1, 1]} : vector<16x128xbf16> to vector<16x32xbf16>
    %cst_101 = arith.constant dense<0.000000e+00> : vector<16x32xf32>
    %227 = tpu.matmul %225, %226, %cst_101 {dimension_numbers = #tpu.dot_dimension_numbers<[1], [0], [0], [1], [0, 0, 1, 1], [], []>} : vector<16x16xbf16>, vector<16x32xbf16>, vector<16x32xf32> -> vector<16x32xf32>
    %228 = vector.extract_strided_slice %174 {offsets = [0, 96], sizes = [16, 32], strides = [1, 1]} : vector<16x128xbf16> to vector<16x32xbf16>
    %229 = vector.extract_strided_slice %175 {offsets = [0, 96], sizes = [16, 32], strides = [1, 1]} : vector<16x128xbf16> to vector<16x32xbf16>
    "tpu.trace_start"() <{level = 10 : i32, message = "qd,kd->qk"}> : () -> ()
    %cst_102 = arith.constant dense<0.000000e+00> : vector<16x16xf32>
    %230 = tpu.matmul %228, %229, %cst_102 {dimension_numbers = #tpu.dot_dimension_numbers<[1], [1], [0], [0], [0, 0, 1, 0], [], []>} : vector<16x32xbf16>, vector<16x32xbf16>, vector<16x16xf32> -> vector<16x16xf32>
    %cst_103 = arith.constant -1.000000e+09 : f32
    "tpu.trace_stop"() : () -> ()
    %231 = vector.broadcast %cst_103 : f32 to vector<16x16xf32>
    %232 = arith.select %173, %230, %231 : vector<16x16xi1>, vector<16x16xf32>
    %cst_104 = arith.constant dense<0xFF800000> : vector<16xf32>
    %233 = vector.multi_reduction <maximumf>, %232, %cst_104 [1] : vector<16x16xf32> to vector<16xf32>
    %234 = vector.shape_cast %233 : vector<16xf32> to vector<16x1xf32>
    %235 = vector.broadcast %234 : vector<16x1xf32> to vector<16x16xf32>
    %236 = arith.subf %232, %235 : vector<16x16xf32>
    %237 = math.exp %236 : vector<16x16xf32>
    %cst_105 = arith.constant dense<0.000000e+00> : vector<16xf32>
    %238 = vector.multi_reduction <add>, %237, %cst_105 [1] : vector<16x16xf32> to vector<16xf32>
    %239 = vector.shape_cast %238 : vector<16xf32> to vector<16x1xf32>
    %240 = vector.broadcast %239 : vector<16x1xf32> to vector<16x16xf32>
    %241 = arith.divf %237, %240 : vector<16x16xf32>
    %242 = arith.truncf %241 : vector<16x16xf32> to vector<16x16xbf16>
    %243 = vector.extract_strided_slice %176 {offsets = [0, 96], sizes = [16, 32], strides = [1, 1]} : vector<16x128xbf16> to vector<16x32xbf16>
    %cst_106 = arith.constant dense<0.000000e+00> : vector<16x32xf32>
    %244 = tpu.matmul %242, %243, %cst_106 {dimension_numbers = #tpu.dot_dimension_numbers<[1], [0], [0], [1], [0, 0, 1, 1], [], []>} : vector<16x16xbf16>, vector<16x32xbf16>, vector<16x32xf32> -> vector<16x32xf32>
    %245 = tpu.concatenate %193, %210, %227, %244 in 1 : vector<16x32xf32>, vector<16x32xf32>, vector<16x32xf32>, vector<16x32xf32> -> vector<16x128xf32>
    %246 = arith.truncf %245 : vector<16x128xf32> to vector<16x128xbf16>
    %cst_107 = arith.constant dense<0.000000e+00> : vector<16x128xf32>
    %247 = tpu.matmul %246, %8, %cst_107 {dimension_numbers = #tpu.dot_dimension_numbers<[1], [0], [0], [1], [0, 0, 1, 1], [], []>} : vector<16x128xbf16>, vector<128x128xbf16>, vector<16x128xf32> -> vector<16x128xf32>
    %248 = vector.broadcast %9 : vector<1x128xf32> to vector<16x128xf32>
    %249 = arith.addf %247, %248 : vector<16x128xf32>
    %250 = arith.addf %137, %249 : vector<16x128xf32>
    %cst_108 = arith.constant dense<0.000000e+00> : vector<16xf32>
    %251 = vector.multi_reduction <add>, %250, %cst_108 [1] : vector<16x128xf32> to vector<16xf32>
    %252 = vector.shape_cast %251 : vector<16xf32> to vector<16x1xf32>
    %cst_109 = arith.constant 1.280000e+02 : f32
    %253 = vector.broadcast %cst_109 : f32 to vector<16x1xf32>
    %254 = arith.divf %252, %253 : vector<16x1xf32>
    %255 = vector.broadcast %254 : vector<16x1xf32> to vector<16x128xf32>
    %256 = arith.subf %250, %255 : vector<16x128xf32>
    %257 = arith.mulf %256, %256 : vector<16x128xf32>
    %cst_110 = arith.constant dense<0.000000e+00> : vector<16xf32>
    %258 = vector.multi_reduction <add>, %257, %cst_110 [1] : vector<16x128xf32> to vector<16xf32>
    %259 = vector.shape_cast %258 : vector<16xf32> to vector<16x1xf32>
    %cst_111 = arith.constant 1.270000e+02 : f32
    %260 = vector.broadcast %cst_111 : f32 to vector<16x1xf32>
    %261 = arith.divf %259, %260 : vector<16x1xf32>
    %262 = vector.broadcast %254 : vector<16x1xf32> to vector<16x128xf32>
    %263 = arith.subf %250, %262 : vector<16x128xf32>
    %264 = vector.broadcast %18 : vector<1x128xf32> to vector<16x128xf32>
    %265 = arith.mulf %264, %263 : vector<16x128xf32>
    %266 = math.sqrt %261 : vector<16x1xf32>
    %cst_112 = arith.constant 9.99999997E-7 : f32
    %267 = vector.broadcast %cst_112 : f32 to vector<16x1xf32>
    %268 = arith.addf %266, %267 : vector<16x1xf32>
    %269 = vector.broadcast %268 : vector<16x1xf32> to vector<16x128xf32>
    %270 = arith.divf %265, %269 : vector<16x128xf32>
    %271 = vector.broadcast %19 : vector<1x128xf32> to vector<16x128xf32>
    %272 = arith.addf %270, %271 : vector<16x128xf32>
    %273 = arith.truncf %272 : vector<16x128xf32> to vector<16x128xbf16>
    %cst_113 = arith.constant dense<0.000000e+00> : vector<16x256xf32>
    %274 = tpu.matmul %273, %10, %cst_113 {dimension_numbers = #tpu.dot_dimension_numbers<[1], [0], [0], [1], [0, 0, 1, 1], [], []>} : vector<16x128xbf16>, vector<128x256xbf16>, vector<16x256xf32> -> vector<16x256xf32>
    %275 = vector.broadcast %11 : vector<1x256xf32> to vector<16x256xf32>
    %276 = arith.addf %274, %275 : vector<16x256xf32>
    %cst_114 = arith.constant 0.000000e+00 : f32
    %277 = vector.broadcast %cst_114 : f32 to vector<16x256xf32>
    %278 = arith.maximumf %276, %277 : vector<16x256xf32>
    %279 = arith.truncf %278 : vector<16x256xf32> to vector<16x256xbf16>
    %cst_115 = arith.constant dense<0.000000e+00> : vector<16x128xf32>
    %280 = tpu.matmul %279, %12, %cst_115 {dimension_numbers = #tpu.dot_dimension_numbers<[1], [0], [0], [1], [0, 0, 1, 1], [], []>} : vector<16x256xbf16>, vector<256x128xbf16>, vector<16x128xf32> -> vector<16x128xf32>
    %281 = vector.broadcast %13 : vector<1x128xf32> to vector<16x128xf32>
    %282 = arith.addf %280, %281 : vector<16x128xf32>
    %283 = arith.addf %250, %282 : vector<16x128xf32>
    %c0_116 = arith.constant 0 : index
    %c0_117 = arith.constant 0 : index
    %c0_118 = arith.constant 0 : index
    %284 = vector.load %arg25[%c0_116, %c0_117, %c0_118] : memref<1x16x128xf32, #tpu.memory_space<vmem>>, vector<1x16x128xf32>
    %285 = vector.shape_cast %284 : vector<1x16x128xf32> to vector<16x128xf32>
    %286 = vector.shape_cast %283 : vector<16x128xf32> to vector<1x16x128xf32>
    tpu.vector_store %arg25[%c0_116, %c0_117, %c0_118], %286 {strides = array<i32>} : memref<1x16x128xf32, #tpu.memory_space<vmem>>, vector<1x16x128xf32>,
    return
  }
  func.func @transform_0(%arg0: i32) -> (i32, i32, i32) {
    %c0_i32 = arith.constant 0 : i32
    %c0_i32_0 = arith.constant 0 : i32
    %c0_i32_1 = arith.constant 0 : i32
    return %arg0, %c0_i32, %c0_i32_0 : i32, i32, i32
  }
  func.func @transform_1(%arg0: i32) -> (i32, i32, i32) {
    %c0_i32 = arith.constant 0 : i32
    %c0_i32_0 = arith.constant 0 : i32
    %c0_i32_1 = arith.constant 0 : i32
    return %arg0, %c0_i32, %c0_i32_0 : i32, i32, i32
  }
  func.func @transform_2(%arg0: i32) -> (i32, i32, i32) {
    %c0_i32 = arith.constant 0 : i32
    %c0_i32_0 = arith.constant 0 : i32
    %c0_i32_1 = arith.constant 0 : i32
    return %arg0, %c0_i32, %c0_i32_0 : i32, i32, i32
  }
  func.func @transform_3(%arg0: i32) -> (i32, i32, i32) {
    %c0_i32 = arith.constant 0 : i32
    %c0_i32_0 = arith.constant 0 : i32
    %c0_i32_1 = arith.constant 0 : i32
    return %arg0, %c0_i32, %c0_i32_0 : i32, i32, i32
  }
  func.func @transform_4(%arg0: i32) -> (i32, i32) {
    %c0_i32 = arith.constant 0 : i32
    %c0_i32_0 = arith.constant 0 : i32
    %c0_i32_1 = arith.constant 0 : i32
    return %c0_i32, %c0_i32_0 : i32, i32
  }
  func.func @transform_5(%arg0: i32) -> (i32, i32) {
    %c0_i32 = arith.constant 0 : i32
    %c0_i32_0 = arith.constant 0 : i32
    %c0_i32_1 = arith.constant 0 : i32
    return %c0_i32, %c0_i32_0 : i32, i32
  }
  func.func @transform_6(%arg0: i32) -> (i32, i32) {
    %c0_i32 = arith.constant 0 : i32
    %c0_i32_0 = arith.constant 0 : i32
    %c0_i32_1 = arith.constant 0 : i32
    return %c0_i32, %c0_i32_0 : i32, i32
  }
  func.func @transform_7(%arg0: i32) -> (i32, i32) {
    %c0_i32 = arith.constant 0 : i32
    %c0_i32_0 = arith.constant 0 : i32
    %c0_i32_1 = arith.constant 0 : i32
    return %c0_i32, %c0_i32_0 : i32, i32
  }
  func.func @transform_8(%arg0: i32) -> (i32, i32) {
    %c0_i32 = arith.constant 0 : i32
    %c0_i32_0 = arith.constant 0 : i32
    %c0_i32_1 = arith.constant 0 : i32
    return %c0_i32, %c0_i32_0 : i32, i32
  }
  func.func @transform_9(%arg0: i32) -> (i32, i32) {
    %c0_i32 = arith.constant 0 : i32
    %c0_i32_0 = arith.constant 0 : i32
    %c0_i32_1 = arith.constant 0 : i32
    return %c0_i32, %c0_i32_0 : i32, i32
  }
  func.func @transform_10(%arg0: i32) -> (i32, i32) {
    %c0_i32 = arith.constant 0 : i32
    %c0_i32_0 = arith.constant 0 : i32
    %c0_i32_1 = arith.constant 0 : i32
    return %c0_i32, %c0_i32_0 : i32, i32
  }
  func.func @transform_11(%arg0: i32) -> (i32, i32) {
    %c0_i32 = arith.constant 0 : i32
    %c0_i32_0 = arith.constant 0 : i32
    %c0_i32_1 = arith.constant 0 : i32
    return %c0_i32, %c0_i32_0 : i32, i32
  }
  func.func @transform_12(%arg0: i32) -> (i32, i32) {
    %c0_i32 = arith.constant 0 : i32
    %c0_i32_0 = arith.constant 0 : i32
    %c0_i32_1 = arith.constant 0 : i32
    return %c0_i32, %c0_i32_0 : i32, i32
  }
  func.func @transform_13(%arg0: i32) -> (i32, i32) {
    %c0_i32 = arith.constant 0 : i32
    %c0_i32_0 = arith.constant 0 : i32
    %c0_i32_1 = arith.constant 0 : i32
    return %c0_i32, %c0_i32_0 : i32, i32
  }
  func.func @transform_14(%arg0: i32) -> (i32, i32) {
    %c0_i32 = arith.constant 0 : i32
    %c0_i32_0 = arith.constant 0 : i32
    %c0_i32_1 = arith.constant 0 : i32
    return %c0_i32, %c0_i32_0 : i32, i32
  }
  func.func @transform_15(%arg0: i32) -> (i32, i32) {
    %c0_i32 = arith.constant 0 : i32
    %c0_i32_0 = arith.constant 0 : i32
    %c0_i32_1 = arith.constant 0 : i32
    return %c0_i32, %c0_i32_0 : i32, i32
  }
  func.func @transform_16(%arg0: i32) -> (i32, i32) {
    %c0_i32 = arith.constant 0 : i32
    %c0_i32_0 = arith.constant 0 : i32
    %c0_i32_1 = arith.constant 0 : i32
    return %c0_i32, %c0_i32_0 : i32, i32
  }
  func.func @transform_17(%arg0: i32) -> (i32, i32) {
    %c0_i32 = arith.constant 0 : i32
    %c0_i32_0 = arith.constant 0 : i32
    %c0_i32_1 = arith.constant 0 : i32
    return %c0_i32, %c0_i32_0 : i32, i32
  }
  func.func @transform_18(%arg0: i32) -> (i32, i32) {
    %c0_i32 = arith.constant 0 : i32
    %c0_i32_0 = arith.constant 0 : i32
    %c0_i32_1 = arith.constant 0 : i32
    return %c0_i32, %c0_i32_0 : i32, i32
  }
  func.func @transform_19(%arg0: i32) -> (i32, i32) {
    %c0_i32 = arith.constant 0 : i32
    %c0_i32_0 = arith.constant 0 : i32
    %c0_i32_1 = arith.constant 0 : i32
    return %c0_i32, %c0_i32_0 : i32, i32
  }
  func.func @transform_20(%arg0: i32) -> (i32, i32) {
    %c0_i32 = arith.constant 0 : i32
    %c0_i32_0 = arith.constant 0 : i32
    %c0_i32_1 = arith.constant 0 : i32
    return %c0_i32, %c0_i32_0 : i32, i32
  }
  func.func @transform_21(%arg0: i32) -> (i32, i32) {
    %c0_i32 = arith.constant 0 : i32
    %c0_i32_0 = arith.constant 0 : i32
    %c0_i32_1 = arith.constant 0 : i32
    return %c0_i32, %c0_i32_0 : i32, i32
  }
  func.func @transform_22(%arg0: i32) -> (i32, i32) {
    %c0_i32 = arith.constant 0 : i32
    %c0_i32_0 = arith.constant 0 : i32
    %c0_i32_1 = arith.constant 0 : i32
    return %c0_i32, %c0_i32_0 : i32, i32
  }
  func.func @transform_23(%arg0: i32) -> (i32, i32) {
    %c0_i32 = arith.constant 0 : i32
    %c0_i32_0 = arith.constant 0 : i32
    %c0_i32_1 = arith.constant 0 : i32
    return %c0_i32, %c0_i32_0 : i32, i32
  }
  func.func @transform_24(%arg0: i32) -> (i32, i32, i32) {
    %c0_i32 = arith.constant 0 : i32
    %c0_i32_0 = arith.constant 0 : i32
    %c0_i32_1 = arith.constant 0 : i32
    return %arg0, %c0_i32, %c0_i32_0 : i32, i32, i32
  }
}

</mosaic_0001>

<llo_original>
// kernel: tpu_custom_call.1
$region0: #{tpu_custom_call.1}
  #allocation0 [shape = 'u32[]', space=smem, size = 0x4, offset = 0x4, fixed_abs, tag = 'smem constant byte address 0x4 - core index']
  #allocation1 [shape = 'u32[144,128]{1,0:T(1,128)}', space=vmem, size = 0x12000, scoped, tag = 'internal scratch']
  %s0 = inlined_call_operand.hbm [shape: f32[2,16,128], index: 0, kind: input, shape index: {}]
  %s1 = inlined_call_operand.hbm [shape: f32[2,16,128], index: 1, kind: input, shape index: {}]
  %s2 = inlined_call_operand.hbm [shape: s8[2,16,16], index: 2, kind: input, shape index: {}]
  %s3 = inlined_call_operand.vmem [shape: s8[2,16,16], index: 3, kind: input, shape index: {}]
  %s4 = inlined_call_operand.hbm [shape: bf16[128,384], index: 4, kind: input, shape index: {}]
  %s5 = inlined_call_operand.vmem [shape: f32[1,384], index: 5, kind: input, shape index: {}]
  %s6 = inlined_call_operand.hbm [shape: bf16[128,128], index: 6, kind: input, shape index: {}]
  %s7 = inlined_call_operand.vmem [shape: f32[1,128], index: 7, kind: input, shape index: {}]
  %s8 = inlined_call_operand.hbm [shape: bf16[128,128], index: 8, kind: input, shape index: {}]
  %s9 = inlined_call_operand.vmem [shape: f32[1,128], index: 9, kind: input, shape index: {}]
  %s10 = inlined_call_operand.hbm [shape: bf16[128,256], index: 10, kind: input, shape index: {}]
  %s11 = inlined_call_operand.vmem [shape: f32[1,256], index: 11, kind: input, shape index: {}]
  %s12 = inlined_call_operand.hbm [shape: bf16[128,128], index: 12, kind: input, shape index: {}]
  %s13 = inlined_call_operand.vmem [shape: f32[1,128], index: 13, kind: input, shape index: {}]
  %s14 = inlined_call_operand.hbm [shape: bf16[128,256], index: 14, kind: input, shape index: {}]
  %s15 = inlined_call_operand.vmem [shape: f32[1,256], index: 15, kind: input, shape index: {}]
  %s16 = inlined_call_operand.hbm [shape: bf16[256,128], index: 16, kind: input, shape index: {}]
  %s17 = inlined_call_operand.vmem [shape: f32[1,128], index: 17, kind: input, shape index: {}]
  %s18 = inlined_call_operand.vmem [shape: f32[1,128], index: 18, kind: input, shape index: {}]
  %s19 = inlined_call_operand.vmem [shape: f32[1,128], index: 19, kind: input, shape index: {}]
  %s20 = inlined_call_operand.vmem [shape: f32[1,128], index: 20, kind: input, shape index: {}]
  %s21 = inlined_call_operand.vmem [shape: f32[1,128], index: 21, kind: input, shape index: {}]
  %s22 = inlined_call_operand.vmem [shape: f32[1,128], index: 22, kind: input, shape index: {}]
  %s23 = inlined_call_operand.vmem [shape: f32[1,128], index: 23, kind: input, shape index: {}]
  %s24 = inlined_call_operand.hbm [shape: f32[2,16,128], index: 24, kind: output, shape index: {}]
  %s25 = sld [smem:[#allocation0]]
  $region169: #{tpu_custom_call.1} parent=0
    _
  %s27 = ssub.s32 1, %s25
  %s28 = scalar_select 0, %s27, %s25
  $region1: #{tpu_custom_call.1} parent=0
    #allocation2 [shape = 'u8[16384]{0}', space=vmem, size = 0x4000, scoped, tag = 'input window, operand 0']
    #allocation3 [shape = 's32[2]{0}', space=sflag, size = 0x8, scoped, tag = 'scoped memory for tpu_custom_call.1']
    #allocation4 [shape = 's32[2]{0}', space=sflag, size = 0x8, scoped, tag = 'scoped memory for tpu_custom_call.1']
    #allocation5 [shape = 'u8[16384]{0}', space=vmem, size = 0x4000, scoped, tag = 'input window, operand 1']
    #allocation6 [shape = 's32[2]{0}', space=sflag, size = 0x8, scoped, tag = 'scoped memory for tpu_custom_call.1']
    #allocation7 [shape = 'u8[4096]{0}', space=vmem, size = 0x1000, scoped, tag = 'input window, operand 2']
    #allocation8 [shape = 'u8[98304]{0}', space=vmem, size = 0x18000, scoped, tag = 'input window, operand 4, single buffered']
    #allocation9 [shape = 's32[1]{0}', space=sflag, size = 0x4, scoped, tag = 'scoped memory for tpu_custom_call.1']
    #allocation10 [shape = 'u8[32768]{0}', space=vmem, size = 0x8000, scoped, tag = 'input window, operand 6, single buffered']
    #allocation11 [shape = 'u8[32768]{0}', space=vmem, size = 0x8000, scoped, tag = 'input window, operand 8, single buffered']
    #allocation12 [shape = 's32[1]{0}', space=sflag, size = 0x4, scoped, tag = 'scoped memory for tpu_custom_call.1']
    #allocation13 [shape = 'u8[65536]{0}', space=vmem, size = 0x10000, scoped, tag = 'input window, operand 10, single buffered']
    #allocation14 [shape = 'u8[32768]{0}', space=vmem, size = 0x8000, scoped, tag = 'input window, operand 12, single buffered']
    #allocation15 [shape = 's32[1]{0}', space=sflag, size = 0x4, scoped, tag = 'scoped memory for tpu_custom_call.1']
    #allocation16 [shape = 'u8[65536]{0}', space=vmem, size = 0x10000, scoped, tag = 'input window, operand 14, single buffered']
    #allocation17 [shape = 'u8[65536]{0}', space=vmem, size = 0x10000, scoped, tag = 'input window, operand 16, single buffered']
    #allocation18 [shape = 's32[1]{0}', space=sflag, size = 0x4, scoped, tag = 'scoped memory for tpu_custom_call.1']
    #allocation19 [shape = 'u8[16384]{0}', space=vmem, size = 0x4000, scoped, tag = 'output window, operand 0']
    %29 = vsyncpa [#allocation3], 0
    %s30 = scalar_lea.sflag [#allocation3], 1
    %31 = vsyncpa %s30, 0
    %32 = vsyncpa [#allocation6], 0
    %s33 = scalar_lea.sflag [#allocation6], 1
    %34 = vsyncpa %s33, 0
    %35 = vsyncpa [#allocation9], 0
    %36 = vsyncpa [#allocation12], 0
    %37 = vsyncpa [#allocation15], 0
    %38 = vsyncpa [#allocation18], 0
    %39 = vsyncpa [#allocation4], 0
    %s40 = scalar_lea.sflag [#allocation4], 1
    %41 = vsyncpa %s40, 0
    loop: start=0, step=1, limit=4
    $region2: #{tpu_custom_call.1} parent=1 // loop_pre_header
      _
    $region3: #{tpu_custom_call.1} parent=1 // loop_header
      %s43 = sphi 0, %s47
      %p44 = scmp.ge.s32.totalorder %s43, 4
      %s53 = sphi 0, %s55
      %s56 = sphi 0, %s53
      %s57 = sphi 0, %s56
      %s73 = sphi 0, %s57
      %s79 = sphi 0, %s81
      %s82 = sphi 0, %s79
      %s83 = sphi 0, %s82
      %s99 = sphi 0, %s83
      %s105 = sphi 0, %s107
      %s108 = sphi 0, %s105
      %s109 = sphi 0, %s108
      %s125 = sphi 0, %s109
      %s131 = sphi 0, %s133
      %s134 = sphi 0, %s131
      %s135 = sphi 0, %s134
      %s151 = sphi 0, %s135
      %s155 = sphi 0, %s155
      %s157 = sphi 0, %s155
      %s158 = sphi 0, %s157
      %s172 = sphi 0, %s158
      %s176 = sphi 0, %s176
      %s178 = sphi 0, %s176
      %s179 = sphi 0, %s178
      %s193 = sphi 0, %s179
      %s197 = sphi 0, %s197
      %s199 = sphi 0, %s197
      %s200 = sphi 0, %s199
      %s214 = sphi 0, %s200
      %s218 = sphi 0, %s218
      %s220 = sphi 0, %s218
      %s221 = sphi 0, %s220
      %s235 = sphi 0, %s221
      %s239 = sphi 0, %s239
      %s241 = sphi 0, %s239
      %s242 = sphi 0, %s241
      %s256 = sphi 0, %s242
      %s260 = sphi 0, %s260
      %s262 = sphi 0, %s260
      %s263 = sphi 0, %s262
      %s277 = sphi 0, %s263
      %s281 = sphi 0, %s281
      %s283 = sphi 0, %s281
      %s284 = sphi 0, %s283
      %s298 = sphi 0, %s284
      %s302 = sphi 0, %s302
      %s304 = sphi 0, %s302
      %s305 = sphi 0, %s304
      %s319 = sphi 0, %s305
      %s323 = sphi 0, %s323
      %s325 = sphi 0, %s323
      %s326 = sphi 0, %s325
      %s340 = sphi 0, %s326
      %s344 = sphi 0, %s344
      %s346 = sphi 0, %s344
      %s347 = sphi 0, %s346
      %s361 = sphi 0, %s347
      %s365 = sphi 0, %s365
      %s367 = sphi 0, %s365
      %s368 = sphi 0, %s367
      %s382 = sphi 0, %s368
      %s386 = sphi 0, %s386
      %s388 = sphi 0, %s386
      %s389 = sphi 0, %s388
      %s403 = sphi 0, %s389
      %s407 = sphi 0, %s407
      %s409 = sphi 0, %s407
      %s410 = sphi 0, %s409
      %s424 = sphi 0, %s410
      %s428 = sphi 0, %s428
      %s430 = sphi 0, %s428
      %s431 = sphi 0, %s430
      %s445 = sphi 0, %s431
      %s449 = sphi 0, %s449
      %s451 = sphi 0, %s449
      %s452 = sphi 0, %s451
      %s466 = sphi 0, %s452
      %s470 = sphi 0, %s470
      %s472 = sphi 0, %s470
      %s473 = sphi 0, %s472
      %s487 = sphi 0, %s473
      %s491 = sphi 0, %s491
      %s493 = sphi 0, %s491
      %s494 = sphi 0, %s493
      %s508 = sphi 0, %s494
      %s512 = sphi 0, %s512
      %s514 = sphi 0, %s512
      %s515 = sphi 0, %s514
      %s529 = sphi 0, %s515
      %s533 = sphi 0, %s533
      %s535 = sphi 0, %s533
      %s536 = sphi 0, %s535
      %s550 = sphi 0, %s536
      %s554 = sphi 0, %s554
      %s556 = sphi 0, %s554
      %s557 = sphi 0, %s556
      %s571 = sphi 0, %s557
      %s577 = sphi 0, %s579
      %s580 = sphi 0, %s577
      %s581 = sphi 0, %s580
      %s597 = sphi 0, %s581
    $region4: #{tpu_custom_call.1} parent=1 // loop_header_branch
      %46 = sbr.rel (%p44) target = $region8
    $region5: #{tpu_custom_call.1} parent=1 // loop_body
      %s48 = ssub.s32 %s43, 1
      %s49 = ssub.s32 %s43, 2
      %s50 = sadd.s32 %s43, 1
      %s51 = ssub.s32 %s43, %s50
      %p52 = scmp.eq.s32.totalorder %s51, 0
      %s54 = sadd.s32 %s53, 1
      %s55 = scalar_select %p52, %s53, %s54
      %p58 = pneg %p52
      %p59 = scmp.eq.s32.totalorder %s43, 1
      %p60 = por %p58, %p59
      %p61 = scmp.ne.s32.totalorder %s53, %s56
      %p62 = scmp.eq.s32.totalorder %s43, 0
      %p63 = por %p61, %p62
      %p64 = scmp.ne.s32.totalorder %s53, %s56
      %p65 = scmp.eq.s32.totalorder %s48, 1
      %p66 = por %p64, %p65
      %p67 = scmp.ne.s32.totalorder %s56, %s57
      %p68 = scmp.eq.s32.totalorder %s48, 0
      %p69 = por %p67, %p68
      %p70 = scmp.ne.s32.totalorder %s56, %s57
      %p71 = scmp.eq.s32.totalorder %s49, 1
      %p72 = por %p70, %p71
      %p74 = scmp.ne.s32.totalorder %s57, %s73
      %p75 = scmp.eq.s32.totalorder %s49, 0
      %p76 = por %p74, %p75
      %s77 = ssub.s32 %s43, %s50
      %p78 = scmp.eq.s32.totalorder %s77, 0
      %s80 = sadd.s32 %s79, 1
      %s81 = scalar_select %p78, %s79, %s80
      %p84 = pneg %p78
      %p85 = scmp.eq.s32.totalorder %s43, 1
      %p86 = por %p84, %p85
      %p87 = scmp.ne.s32.totalorder %s79, %s82
      %p88 = scmp.eq.s32.totalorder %s43, 0
      %p89 = por %p87, %p88
      %p90 = scmp.ne.s32.totalorder %s79, %s82
      %p91 = scmp.eq.s32.totalorder %s48, 1
      %p92 = por %p90, %p91
      %p93 = scmp.ne.s32.totalorder %s82, %s83
      %p94 = scmp.eq.s32.totalorder %s48, 0
      %p95 = por %p93, %p94
      %p96 = scmp.ne.s32.totalorder %s82, %s83
      %p97 = scmp.eq.s32.totalorder %s49, 1
      %p98 = por %p96, %p97
      %p100 = scmp.ne.s32.totalorder %s83, %s99
      %p101 = scmp.eq.s32.totalorder %s49, 0
      %p102 = por %p100, %p101
      %s103 = ssub.s32 %s43, %s50
      %p104 = scmp.eq.s32.totalorder %s103, 0
      %s106 = sadd.s32 %s105, 1
      %s107 = scalar_select %p104, %s105, %s106
      %p110 = pneg %p104
      %p111 = scmp.eq.s32.totalorder %s43, 1
      %p112 = por %p110, %p111
      %p113 = scmp.ne.s32.totalorder %s105, %s108
      %p114 = scmp.eq.s32.totalorder %s43, 0
      %p115 = por %p113, %p114
      %p116 = scmp.ne.s32.totalorder %s105, %s108
      %p117 = scmp.eq.s32.totalorder %s48, 1
      %p118 = por %p116, %p117
      %p119 = scmp.ne.s32.totalorder %s108, %s109
      %p120 = scmp.eq.s32.totalorder %s48, 0
      %p121 = por %p119, %p120
      %p122 = scmp.ne.s32.totalorder %s108, %s109
      %p123 = scmp.eq.s32.totalorder %s49, 1
      %p124 = por %p122, %p123
      %p126 = scmp.ne.s32.totalorder %s109, %s125
      %p127 = scmp.eq.s32.totalorder %s49, 0
      %p128 = por %p126, %p127
      %s129 = ssub.s32 %s43, %s50
      %p130 = scmp.eq.s32.totalorder %s129, 0
      %s132 = sadd.s32 %s131, 1
      %s133 = scalar_select %p130, %s131, %s132
      %p136 = pneg %p130
      %p137 = scmp.eq.s32.totalorder %s43, 1
      %p138 = por %p136, %p137
      %p139 = scmp.ne.s32.totalorder %s131, %s134
      %p140 = scmp.eq.s32.totalorder %s43, 0
      %p141 = por %p139, %p140
      %p142 = scmp.ne.s32.totalorder %s131, %s134
      %p143 = scmp.eq.s32.totalorder %s48, 1
      %p144 = por %p142, %p143
      %p145 = scmp.ne.s32.totalorder %s134, %s135
      %p146 = scmp.eq.s32.totalorder %s48, 0
      %p147 = por %p145, %p146
      %p148 = scmp.ne.s32.totalorder %s134, %s135
      %p149 = scmp.eq.s32.totalorder %s49, 1
      %p150 = por %p148, %p149
      %p152 = scmp.ne.s32.totalorder %s135, %s151
      %p153 = scmp.eq.s32.totalorder %s49, 0
      %p154 = por %p152, %p153
      %s156 = sadd.s32 %s155, 1
      %p159 = scmp.eq.s32.totalorder %s43, 1
      %p160 = scmp.ne.s32.totalorder %s155, %s157
      %p161 = scmp.eq.s32.totalorder %s43, 0
      %p162 = por %p160, %p161
      %p163 = scmp.ne.s32.totalorder %s155, %s157
      %p164 = scmp.eq.s32.totalorder %s48, 1
      %p165 = por %p163, %p164
      %p166 = scmp.ne.s32.totalorder %s157, %s158
      %p167 = scmp.eq.s32.totalorder %s48, 0
      %p168 = por %p166, %p167
      %p169 = scmp.ne.s32.totalorder %s157, %s158
      %p170 = scmp.eq.s32.totalorder %s49, 1
      %p171 = por %p169, %p170
      %p173 = scmp.ne.s32.totalorder %s158, %s172
      %p174 = scmp.eq.s32.totalorder %s49, 0
      %p175 = por %p173, %p174
      %s177 = sadd.s32 %s176, 1
      %p180 = scmp.eq.s32.totalorder %s43, 1
      %p181 = scmp.ne.s32.totalorder %s176, %s178
      %p182 = scmp.eq.s32.totalorder %s43, 0
      %p183 = por %p181, %p182
      %p184 = scmp.ne.s32.totalorder %s176, %s178
      %p185 = scmp.eq.s32.totalorder %s48, 1
      %p186 = por %p184, %p185
      %p187 = scmp.ne.s32.totalorder %s178, %s179
      %p188 = scmp.eq.s32.totalorder %s48, 0
      %p189 = por %p187, %p188
      %p190 = scmp.ne.s32.totalorder %s178, %s179
      %p191 = scmp.eq.s32.totalorder %s49, 1
      %p192 = por %p190, %p191
      %p194 = scmp.ne.s32.totalorder %s179, %s193
      %p195 = scmp.eq.s32.totalorder %s49, 0
      %p196 = por %p194, %p195
      %s198 = sadd.s32 %s197, 1
      %p201 = scmp.eq.s32.totalorder %s43, 1
      %p202 = scmp.ne.s32.totalorder %s197, %s199
      %p203 = scmp.eq.s32.totalorder %s43, 0
      %p204 = por %p202, %p203
      %p205 = scmp.ne.s32.totalorder %s197, %s199
      %p206 = scmp.eq.s32.totalorder %s48, 1
      %p207 = por %p205, %p206
      %p208 = scmp.ne.s32.totalorder %s199, %s200
      %p209 = scmp.eq.s32.totalorder %s48, 0
      %p210 = por %p208, %p209
      %p211 = scmp.ne.s32.totalorder %s199, %s200
      %p212 = scmp.eq.s32.totalorder %s49, 1
      %p213 = por %p211, %p212
      %p215 = scmp.ne.s32.totalorder %s200, %s214
      %p216 = scmp.eq.s32.totalorder %s49, 0
      %p217 = por %p215, %p216
      %s219 = sadd.s32 %s218, 1
      %p222 = scmp.eq.s32.totalorder %s43, 1
      %p223 = scmp.ne.s32.totalorder %s218, %s220
      %p224 = scmp.eq.s32.totalorder %s43, 0
      %p225 = por %p223, %p224
      %p226 = scmp.ne.s32.totalorder %s218, %s220
      %p227 = scmp.eq.s32.totalorder %s48, 1
      %p228 = por %p226, %p227
      %p229 = scmp.ne.s32.totalorder %s220, %s221
      %p230 = scmp.eq.s32.totalorder %s48, 0
      %p231 = por %p229, %p230
      %p232 = scmp.ne.s32.totalorder %s220, %s221
      %p233 = scmp.eq.s32.totalorder %s49, 1
      %p234 = por %p232, %p233
      %p236 = scmp.ne.s32.totalorder %s221, %s235
      %p237 = scmp.eq.s32.totalorder %s49, 0
      %p238 = por %p236, %p237
      %s240 = sadd.s32 %s239, 1
      %p243 = scmp.eq.s32.totalorder %s43, 1
      %p244 = scmp.ne.s32.totalorder %s239, %s241
      %p245 = scmp.eq.s32.totalorder %s43, 0
      %p246 = por %p244, %p245
      %p247 = scmp.ne.s32.totalorder %s239, %s241
      %p248 = scmp.eq.s32.totalorder %s48, 1
      %p249 = por %p247, %p248
      %p250 = scmp.ne.s32.totalorder %s241, %s242
      %p251 = scmp.eq.s32.totalorder %s48, 0
      %p252 = por %p250, %p251
      %p253 = scmp.ne.s32.totalorder %s241, %s242
      %p254 = scmp.eq.s32.totalorder %s49, 1
      %p255 = por %p253, %p254
      %p257 = scmp.ne.s32.totalorder %s242, %s256
      %p258 = scmp.eq.s32.totalorder %s49, 0
      %p259 = por %p257, %p258
      %s261 = sadd.s32 %s260, 1
      %p264 = scmp.eq.s32.totalorder %s43, 1
      %p265 = scmp.ne.s32.totalorder %s260, %s262
      %p266 = scmp.eq.s32.totalorder %s43, 0
      %p267 = por %p265, %p266
      %p268 = scmp.ne.s32.totalorder %s260, %s262
      %p269 = scmp.eq.s32.totalorder %s48, 1
      %p270 = por %p268, %p269
      %p271 = scmp.ne.s32.totalorder %s262, %s263
      %p272 = scmp.eq.s32.totalorder %s48, 0
      %p273 = por %p271, %p272
      %p274 = scmp.ne.s32.totalorder %s262, %s263
      %p275 = scmp.eq.s32.totalorder %s49, 1
      %p276 = por %p274, %p275
      %p278 = scmp.ne.s32.totalorder %s263, %s277
      %p279 = scmp.eq.s32.totalorder %s49, 0
      %p280 = por %p278, %p279
      %s282 = sadd.s32 %s281, 1
      %p285 = scmp.eq.s32.totalorder %s43, 1
      %p286 = scmp.ne.s32.totalorder %s281, %s283
      %p287 = scmp.eq.s32.totalorder %s43, 0
      %p288 = por %p286, %p287
      %p289 = scmp.ne.s32.totalorder %s281, %s283
      %p290 = scmp.eq.s32.totalorder %s48, 1
      %p291 = por %p289, %p290
      %p292 = scmp.ne.s32.totalorder %s283, %s284
      %p293 = scmp.eq.s32.totalorder %s48, 0
      %p294 = por %p292, %p293
      %p295 = scmp.ne.s32.totalorder %s283, %s284
      %p296 = scmp.eq.s32.totalorder %s49, 1
      %p297 = por %p295, %p296
      %p299 = scmp.ne.s32.totalorder %s284, %s298
      %p300 = scmp.eq.s32.totalorder %s49, 0
      %p301 = por %p299, %p300
      %s303 = sadd.s32 %s302, 1
      %p306 = scmp.eq.s32.totalorder %s43, 1
      %p307 = scmp.ne.s32.totalorder %s302, %s304
      %p308 = scmp.eq.s32.totalorder %s43, 0
      %p309 = por %p307, %p308
      %p310 = scmp.ne.s32.totalorder %s302, %s304
      %p311 = scmp.eq.s32.totalorder %s48, 1
      %p312 = por %p310, %p311
      %p313 = scmp.ne.s32.totalorder %s304, %s305
      %p314 = scmp.eq.s32.totalorder %s48, 0
      %p315 = por %p313, %p314
      %p316 = scmp.ne.s32.totalorder %s304, %s305
      %p317 = scmp.eq.s32.totalorder %s49, 1
      %p318 = por %p316, %p317
      %p320 = scmp.ne.s32.totalorder %s305, %s319
      %p321 = scmp.eq.s32.totalorder %s49, 0
      %p322 = por %p320, %p321
      %s324 = sadd.s32 %s323, 1
      %p327 = scmp.eq.s32.totalorder %s43, 1
      %p328 = scmp.ne.s32.totalorder %s323, %s325
      %p329 = scmp.eq.s32.totalorder %s43, 0
      %p330 = por %p328, %p329
      %p331 = scmp.ne.s32.totalorder %s323, %s325
      %p332 = scmp.eq.s32.totalorder %s48, 1
      %p333 = por %p331, %p332
      %p334 = scmp.ne.s32.totalorder %s325, %s326
      %p335 = scmp.eq.s32.totalorder %s48, 0
      %p336 = por %p334, %p335
      %p337 = scmp.ne.s32.totalorder %s325, %s326
      %p338 = scmp.eq.s32.totalorder %s49, 1
      %p339 = por %p337, %p338
      %p341 = scmp.ne.s32.totalorder %s326, %s340
      %p342 = scmp.eq.s32.totalorder %s49, 0
      %p343 = por %p341, %p342
      %s345 = sadd.s32 %s344, 1
      %p348 = scmp.eq.s32.totalorder %s43, 1
      %p349 = scmp.ne.s32.totalorder %s344, %s346
      %p350 = scmp.eq.s32.totalorder %s43, 0
      %p351 = por %p349, %p350
      %p352 = scmp.ne.s32.totalorder %s344, %s346
      %p353 = scmp.eq.s32.totalorder %s48, 1
      %p354 = por %p352, %p353
      %p355 = scmp.ne.s32.totalorder %s346, %s347
      %p356 = scmp.eq.s32.totalorder %s48, 0
      %p357 = por %p355, %p356
      %p358 = scmp.ne.s32.totalorder %s346, %s347
      %p359 = scmp.eq.s32.totalorder %s49, 1
      %p360 = por %p358, %p359
      %p362 = scmp.ne.s32.totalorder %s347, %s361
      %p363 = scmp.eq.s32.totalorder %s49, 0
      %p364 = por %p362, %p363
      %s366 = sadd.s32 %s365, 1
      %p369 = scmp.eq.s32.totalorder %s43, 1
      %p370 = scmp.ne.s32.totalorder %s365, %s367
      %p371 = scmp.eq.s32.totalorder %s43, 0
      %p372 = por %p370, %p371
      %p373 = scmp.ne.s32.totalorder %s365, %s367
      %p374 = scmp.eq.s32.totalorder %s48, 1
      %p375 = por %p373, %p374
      %p376 = scmp.ne.s32.totalorder %s367, %s368
      %p377 = scmp.eq.s32.totalorder %s48, 0
      %p378 = por %p376, %p377
      %p379 = scmp.ne.s32.totalorder %s367, %s368
      %p380 = scmp.eq.s32.totalorder %s49, 1
      %p381 = por %p379, %p380
      %p383 = scmp.ne.s32.totalorder %s368, %s382
      %p384 = scmp.eq.s32.totalorder %s49, 0
      %p385 = por %p383, %p384
      %s387 = sadd.s32 %s386, 1
      %p390 = scmp.eq.s32.totalorder %s43, 1
      %p391 = scmp.ne.s32.totalorder %s386, %s388
      %p392 = scmp.eq.s32.totalorder %s43, 0
      %p393 = por %p391, %p392
      %p394 = scmp.ne.s32.totalorder %s386, %s388
      %p395 = scmp.eq.s32.totalorder %s48, 1
      %p396 = por %p394, %p395
      %p397 = scmp.ne.s32.totalorder %s388, %s389
      %p398 = scmp.eq.s32.totalorder %s48, 0
      %p399 = por %p397, %p398
      %p400 = scmp.ne.s32.totalorder %s388, %s389
      %p401 = scmp.eq.s32.totalorder %s49, 1
      %p402 = por %p400, %p401
      %p404 = scmp.ne.s32.totalorder %s389, %s403
      %p405 = scmp.eq.s32.totalorder %s49, 0
      %p406 = por %p404, %p405
      %s408 = sadd.s32 %s407, 1
      %p411 = scmp.eq.s32.totalorder %s43, 1
      %p412 = scmp.ne.s32.totalorder %s407, %s409
      %p413 = scmp.eq.s32.totalorder %s43, 0
      %p414 = por %p412, %p413
      %p415 = scmp.ne.s32.totalorder %s407, %s409
      %p416 = scmp.eq.s32.totalorder %s48, 1
      %p417 = por %p415, %p416
      %p418 = scmp.ne.s32.totalorder %s409, %s410
      %p419 = scmp.eq.s32.totalorder %s48, 0
      %p420 = por %p418, %p419
      %p421 = scmp.ne.s32.totalorder %s409, %s410
      %p422 = scmp.eq.s32.totalorder %s49, 1
      %p423 = por %p421, %p422
      %p425 = scmp.ne.s32.totalorder %s410, %s424
      %p426 = scmp.eq.s32.totalorder %s49, 0
      %p427 = por %p425, %p426
      %s429 = sadd.s32 %s428, 1
      %p432 = scmp.eq.s32.totalorder %s43, 1
      %p433 = scmp.ne.s32.totalorder %s428, %s430
      %p434 = scmp.eq.s32.totalorder %s43, 0
      %p435 = por %p433, %p434
      %p436 = scmp.ne.s32.totalorder %s428, %s430
      %p437 = scmp.eq.s32.totalorder %s48, 1
      %p438 = por %p436, %p437
      %p439 = scmp.ne.s32.totalorder %s430, %s431
      %p440 = scmp.eq.s32.totalorder %s48, 0
      %p441 = por %p439, %p440
      %p442 = scmp.ne.s32.totalorder %s430, %s431
      %p443 = scmp.eq.s32.totalorder %s49, 1
      %p444 = por %p442, %p443
      %p446 = scmp.ne.s32.totalorder %s431, %s445
      %p447 = scmp.eq.s32.totalorder %s49, 0
      %p448 = por %p446, %p447
      %s450 = sadd.s32 %s449, 1
      %p453 = scmp.eq.s32.totalorder %s43, 1
      %p454 = scmp.ne.s32.totalorder %s449, %s451
      %p455 = scmp.eq.s32.totalorder %s43, 0
      %p456 = por %p454, %p455
      %p457 = scmp.ne.s32.totalorder %s449, %s451
      %p458 = scmp.eq.s32.totalorder %s48, 1
      %p459 = por %p457, %p458
      %p460 = scmp.ne.s32.totalorder %s451, %s452
      %p461 = scmp.eq.s32.totalorder %s48, 0
      %p462 = por %p460, %p461
      %p463 = scmp.ne.s32.totalorder %s451, %s452
      %p464 = scmp.eq.s32.totalorder %s49, 1
      %p465 = por %p463, %p464
      %p467 = scmp.ne.s32.totalorder %s452, %s466
      %p468 = scmp.eq.s32.totalorder %s49, 0
      %p469 = por %p467, %p468
      %s471 = sadd.s32 %s470, 1
      %p474 = scmp.eq.s32.totalorder %s43, 1
      %p475 = scmp.ne.s32.totalorder %s470, %s472
      %p476 = scmp.eq.s32.totalorder %s43, 0
      %p477 = por %p475, %p476
      %p478 = scmp.ne.s32.totalorder %s470, %s472
      %p479 = scmp.eq.s32.totalorder %s48, 1
      %p480 = por %p478, %p479
      %p481 = scmp.ne.s32.totalorder %s472, %s473
      %p482 = scmp.eq.s32.totalorder %s48, 0
      %p483 = por %p481, %p482
      %p484 = scmp.ne.s32.totalorder %s472, %s473
      %p485 = scmp.eq.s32.totalorder %s49, 1
      %p486 = por %p484, %p485
      %p488 = scmp.ne.s32.totalorder %s473, %s487
      %p489 = scmp.eq.s32.totalorder %s49, 0
      %p490 = por %p488, %p489
      %s492 = sadd.s32 %s491, 1
      %p495 = scmp.eq.s32.totalorder %s43, 1
      %p496 = scmp.ne.s32.totalorder %s491, %s493
      %p497 = scmp.eq.s32.totalorder %s43, 0
      %p498 = por %p496, %p497
      %p499 = scmp.ne.s32.totalorder %s491, %s493
      %p500 = scmp.eq.s32.totalorder %s48, 1
      %p501 = por %p499, %p500
      %p502 = scmp.ne.s32.totalorder %s493, %s494
      %p503 = scmp.eq.s32.totalorder %s48, 0
      %p504 = por %p502, %p503
      %p505 = scmp.ne.s32.totalorder %s493, %s494
      %p506 = scmp.eq.s32.totalorder %s49, 1
      %p507 = por %p505, %p506
      %p509 = scmp.ne.s32.totalorder %s494, %s508
      %p510 = scmp.eq.s32.totalorder %s49, 0
      %p511 = por %p509, %p510
      %s513 = sadd.s32 %s512, 1
      %p516 = scmp.eq.s32.totalorder %s43, 1
      %p517 = scmp.ne.s32.totalorder %s512, %s514
      %p518 = scmp.eq.s32.totalorder %s43, 0
      %p519 = por %p517, %p518
      %p520 = scmp.ne.s32.totalorder %s512, %s514
      %p521 = scmp.eq.s32.totalorder %s48, 1
      %p522 = por %p520, %p521
      %p523 = scmp.ne.s32.totalorder %s514, %s515
      %p524 = scmp.eq.s32.totalorder %s48, 0
      %p525 = por %p523, %p524
      %p526 = scmp.ne.s32.totalorder %s514, %s515
      %p527 = scmp.eq.s32.totalorder %s49, 1
      %p528 = por %p526, %p527
      %p530 = scmp.ne.s32.totalorder %s515, %s529
      %p531 = scmp.eq.s32.totalorder %s49, 0
      %p532 = por %p530, %p531
      %s534 = sadd.s32 %s533, 1
      %p537 = scmp.eq.s32.totalorder %s43, 1
      %p538 = scmp.ne.s32.totalorder %s533, %s535
      %p539 = scmp.eq.s32.totalorder %s43, 0
      %p540 = por %p538, %p539
      %p541 = scmp.ne.s32.totalorder %s533, %s535
      %p542 = scmp.eq.s32.totalorder %s48, 1
      %p543 = por %p541, %p542
      %p544 = scmp.ne.s32.totalorder %s535, %s536
      %p545 = scmp.eq.s32.totalorder %s48, 0
      %p546 = por %p544, %p545
      %p547 = scmp.ne.s32.totalorder %s535, %s536
      %p548 = scmp.eq.s32.totalorder %s49, 1
      %p549 = por %p547, %p548
      %p551 = scmp.ne.s32.totalorder %s536, %s550
      %p552 = scmp.eq.s32.totalorder %s49, 0
      %p553 = por %p551, %p552
      %s555 = sadd.s32 %s554, 1
      %p558 = scmp.eq.s32.totalorder %s43, 1
      %p559 = scmp.ne.s32.totalorder %s554, %s556
      %p560 = scmp.eq.s32.totalorder %s43, 0
      %p561 = por %p559, %p560
      %p562 = scmp.ne.s32.totalorder %s554, %s556
      %p563 = scmp.eq.s32.totalorder %s48, 1
      %p564 = por %p562, %p563
      %p565 = scmp.ne.s32.totalorder %s556, %s557
      %p566 = scmp.eq.s32.totalorder %s48, 0
      %p567 = por %p565, %p566
      %p568 = scmp.ne.s32.totalorder %s556, %s557
      %p569 = scmp.eq.s32.totalorder %s49, 1
      %p570 = por %p568, %p569
      %p572 = scmp.ne.s32.totalorder %s557, %s571
      %p573 = scmp.eq.s32.totalorder %s49, 0
      %p574 = por %p572, %p573
      %s575 = ssub.s32 %s43, %s50
      %p576 = scmp.eq.s32.totalorder %s575, 0
      %s578 = sadd.s32 %s577, 1
      %s579 = scalar_select %p576, %s577, %s578
      %p582 = pneg %p576
      %p583 = scmp.eq.s32.totalorder %s43, 1
      %p584 = por %p582, %p583
      %p585 = scmp.ne.s32.totalorder %s577, %s580
      %p586 = scmp.eq.s32.totalorder %s43, 0
      %p587 = por %p585, %p586
      %p588 = scmp.ne.s32.totalorder %s577, %s580
      %p589 = scmp.eq.s32.totalorder %s48, 1
      %p590 = por %p588, %p589
      %p591 = scmp.ne.s32.totalorder %s580, %s581
      %p592 = scmp.eq.s32.totalorder %s48, 0
      %p593 = por %p591, %p592
      %p594 = scmp.ne.s32.totalorder %s580, %s581
      %p595 = scmp.eq.s32.totalorder %s49, 1
      %p596 = por %p594, %p595
      %p598 = scmp.ne.s32.totalorder %s581, %s597
      %p599 = scmp.eq.s32.totalorder %s49, 0
      %p600 = por %p598, %p599
      %p601 = scmp.le.s32.totalorder 1, %s43
      %p602 = scmp.lt.s32.totalorder %s43, 3
      %p603 = pnand %p601, %p602
      %p604 = pneg %p603
      // Predicated region
      $region9: #{tpu_custom_call.1} parent=5 // pred_check
        _
      $region10: #{tpu_custom_call.1} parent=5 // pred_check_branch
        %606 = sbr.rel (%p603) target = $region12
      $region11: #{tpu_custom_call.1} parent=5 // pred_region
        %s607 = ssub.s32 %s43, 1
        // Predicated region
        $region13: #{tpu_custom_call.1} parent=11 // pred_check
          %p608 = pneg %p168
        $region14: #{tpu_custom_call.1} parent=11 // pred_check_branch
          %610 = sbr.rel (%p608) target = $region16
        $region15: #{tpu_custom_call.1} parent=11 // pred_region
          %s612 = ssub.s32 3072, 3072
          %613 = vsyncadd [#allocation9], %s612
          %s614 = sshll.u32 [#allocation8], 4
          %s615 = int_to_ptr.vmem [resolvable:$true] %s614
          %620 = dma.hbm_to_vmem [thread:$0]  %s4, 3072, %s615, [#allocation9], 192, 192, 12
        $region16: #{tpu_custom_call.1} parent=11 // pred_fallthru
          _
        // Predicated region
        $region17: #{tpu_custom_call.1} parent=11 // pred_check
          %p621 = pneg %p189
        $region18: #{tpu_custom_call.1} parent=11 // pred_check_branch
          %623 = sbr.rel (%p621) target = $region20
        $region19: #{tpu_custom_call.1} parent=11 // pred_region
          _
        $region20: #{tpu_custom_call.1} parent=11 // pred_fallthru
          _
        // Predicated region
        $region21: #{tpu_custom_call.1} parent=11 // pred_check
          %p624 = pneg %p210
        $region22: #{tpu_custom_call.1} parent=11 // pred_check_branch
          %626 = sbr.rel (%p624) target = $region24
        $region23: #{tpu_custom_call.1} parent=11 // pred_region
          %s628 = ssub.s32 1024, 1024
          %629 = vsyncadd [#allocation9], %s628
          %s630 = sshll.u32 [#allocation10], 4
          %s631 = int_to_ptr.vmem [resolvable:$true] %s630
          %636 = dma.hbm_to_vmem [thread:$0]  %s6, 1024, %s631, [#allocation9], 64, 64, 4
        $region24: #{tpu_custom_call.1} parent=11 // pred_fallthru
          _
        // Predicated region
        $region25: #{tpu_custom_call.1} parent=11 // pred_check
          %p637 = pneg %p231
        $region26: #{tpu_custom_call.1} parent=11 // pred_check_branch
          %639 = sbr.rel (%p637) target = $region28
        $region27: #{tpu_custom_call.1} parent=11 // pred_region
          _
        $region28: #{tpu_custom_call.1} parent=11 // pred_fallthru
          _
        // Predicated region
        $region29: #{tpu_custom_call.1} parent=11 // pred_check
          %p640 = pneg %p252
        $region30: #{tpu_custom_call.1} parent=11 // pred_check_branch
          %642 = sbr.rel (%p640) target = $region32
        $region31: #{tpu_custom_call.1} parent=11 // pred_region
          %s644 = ssub.s32 1024, 1024
          %645 = vsyncadd [#allocation12], %s644
          %s646 = sshll.u32 [#allocation11], 4
          %s647 = int_to_ptr.vmem [resolvable:$true] %s646
          %652 = dma.hbm_to_vmem [thread:$0]  %s8, 1024, %s647, [#allocation12], 64, 64, 4
        $region32: #{tpu_custom_call.1} parent=11 // pred_fallthru
          _
        // Predicated region
        $region33: #{tpu_custom_call.1} parent=11 // pred_check
          %p653 = pneg %p273
        $region34: #{tpu_custom_call.1} parent=11 // pred_check_branch
          %655 = sbr.rel (%p653) target = $region36
        $region35: #{tpu_custom_call.1} parent=11 // pred_region
          _
        $region36: #{tpu_custom_call.1} parent=11 // pred_fallthru
          _
        // Predicated region
        $region37: #{tpu_custom_call.1} parent=11 // pred_check
          %p656 = pneg %p294
        $region38: #{tpu_custom_call.1} parent=11 // pred_check_branch
          %658 = sbr.rel (%p656) target = $region40
        $region39: #{tpu_custom_call.1} parent=11 // pred_region
          %s660 = ssub.s32 2048, 2048
          %661 = vsyncadd [#allocation12], %s660
          %s662 = sshll.u32 [#allocation13], 4
          %s663 = int_to_ptr.vmem [resolvable:$true] %s662
          %668 = dma.hbm_to_vmem [thread:$0]  %s10, 2048, %s663, [#allocation12], 128, 128, 8
        $region40: #{tpu_custom_call.1} parent=11 // pred_fallthru
          _
        // Predicated region
        $region41: #{tpu_custom_call.1} parent=11 // pred_check
          %p669 = pneg %p315
        $region42: #{tpu_custom_call.1} parent=11 // pred_check_branch
          %671 = sbr.rel (%p669) target = $region44
        $region43: #{tpu_custom_call.1} parent=11 // pred_region
          _
        $region44: #{tpu_custom_call.1} parent=11 // pred_fallthru
          _
        // Predicated region
        $region45: #{tpu_custom_call.1} parent=11 // pred_check
          %p672 = pneg %p336
        $region46: #{tpu_custom_call.1} parent=11 // pred_check_branch
          %674 = sbr.rel (%p672) target = $region48
        $region47: #{tpu_custom_call.1} parent=11 // pred_region
          %s676 = ssub.s32 1024, 1024
          %677 = vsyncadd [#allocation15], %s676
          %s678 = sshll.u32 [#allocation14], 4
          %s679 = int_to_ptr.vmem [resolvable:$true] %s678
          %684 = dma.hbm_to_vmem [thread:$0]  %s12, 1024, %s679, [#allocation15], 64, 64, 4
        $region48: #{tpu_custom_call.1} parent=11 // pred_fallthru
          _
        // Predicated region
        $region49: #{tpu_custom_call.1} parent=11 // pred_check
          %p685 = pneg %p357
        $region50: #{tpu_custom_call.1} parent=11 // pred_check_branch
          %687 = sbr.rel (%p685) target = $region52
        $region51: #{tpu_custom_call.1} parent=11 // pred_region
          _
        $region52: #{tpu_custom_call.1} parent=11 // pred_fallthru
          _
        // Predicated region
        $region53: #{tpu_custom_call.1} parent=11 // pred_check
          %p688 = pneg %p378
        $region54: #{tpu_custom_call.1} parent=11 // pred_check_branch
          %690 = sbr.rel (%p688) target = $region56
        $region55: #{tpu_custom_call.1} parent=11 // pred_region
          %s692 = ssub.s32 2048, 2048
          %693 = vsyncadd [#allocation15], %s692
          %s694 = sshll.u32 [#allocation16], 4
          %s695 = int_to_ptr.vmem [resolvable:$true] %s694
          %700 = dma.hbm_to_vmem [thread:$0]  %s14, 2048, %s695, [#allocation15], 128, 128, 8
        $region56: #{tpu_custom_call.1} parent=11 // pred_fallthru
          _
        // Predicated region
        $region57: #{tpu_custom_call.1} parent=11 // pred_check
          %p701 = pneg %p399
        $region58: #{tpu_custom_call.1} parent=11 // pred_check_branch
          %703 = sbr.rel (%p701) target = $region60
        $region59: #{tpu_custom_call.1} parent=11 // pred_region
          _
        $region60: #{tpu_custom_call.1} parent=11 // pred_fallthru
          _
        // Predicated region
        $region61: #{tpu_custom_call.1} parent=11 // pred_check
          %p704 = pneg %p420
        $region62: #{tpu_custom_call.1} parent=11 // pred_check_branch
          %706 = sbr.rel (%p704) target = $region64
        $region63: #{tpu_custom_call.1} parent=11 // pred_region
          %s708 = ssub.s32 2048, 2048
          %709 = vsyncadd [#allocation18], %s708
          %s710 = sshll.u32 [#allocation17], 4
          %s711 = int_to_ptr.vmem [resolvable:$true] %s710
          %716 = dma.hbm_to_vmem [thread:$0]  %s16, 2048, %s711, [#allocation18], 64, 64, 4
        $region64: #{tpu_custom_call.1} parent=11 // pred_fallthru
          _
        // Predicated region
        $region65: #{tpu_custom_call.1} parent=11 // pred_check
          %p717 = pneg %p441
        $region66: #{tpu_custom_call.1} parent=11 // pred_check_branch
          %719 = sbr.rel (%p717) target = $region68
        $region67: #{tpu_custom_call.1} parent=11 // pred_region
          _
        $region68: #{tpu_custom_call.1} parent=11 // pred_fallthru
          _
        // Predicated region
        $region69: #{tpu_custom_call.1} parent=11 // pred_check
          %p720 = pneg %p462
        $region70: #{tpu_custom_call.1} parent=11 // pred_check_branch
          %722 = sbr.rel (%p720) target = $region72
        $region71: #{tpu_custom_call.1} parent=11 // pred_region
          _
        $region72: #{tpu_custom_call.1} parent=11 // pred_fallthru
          _
        // Predicated region
        $region73: #{tpu_custom_call.1} parent=11 // pred_check
          %p723 = pneg %p483
        $region74: #{tpu_custom_call.1} parent=11 // pred_check_branch
          %725 = sbr.rel (%p723) target = $region76
        $region75: #{tpu_custom_call.1} parent=11 // pred_region
          _
        $region76: #{tpu_custom_call.1} parent=11 // pred_fallthru
          _
        // Predicated region
        $region77: #{tpu_custom_call.1} parent=11 // pred_check
          %p726 = pneg %p504
        $region78: #{tpu_custom_call.1} parent=11 // pred_check_branch
          %728 = sbr.rel (%p726) target = $region80
        $region79: #{tpu_custom_call.1} parent=11 // pred_region
          _
        $region80: #{tpu_custom_call.1} parent=11 // pred_fallthru
          _
        // Predicated region
        $region81: #{tpu_custom_call.1} parent=11 // pred_check
          %p729 = pneg %p525
        $region82: #{tpu_custom_call.1} parent=11 // pred_check_branch
          %731 = sbr.rel (%p729) target = $region84
        $region83: #{tpu_custom_call.1} parent=11 // pred_region
          _
        $region84: #{tpu_custom_call.1} parent=11 // pred_fallthru
          _
        // Predicated region
        $region85: #{tpu_custom_call.1} parent=11 // pred_check
          %p732 = pneg %p546
        $region86: #{tpu_custom_call.1} parent=11 // pred_check_branch
          %734 = sbr.rel (%p732) target = $region88
        $region87: #{tpu_custom_call.1} parent=11 // pred_region
          _
        $region88: #{tpu_custom_call.1} parent=11 // pred_fallthru
          _
        // Predicated region
        $region89: #{tpu_custom_call.1} parent=11 // pred_check
          %p735 = pneg %p567
        $region90: #{tpu_custom_call.1} parent=11 // pred_check_branch
          %737 = sbr.rel (%p735) target = $region92
        $region91: #{tpu_custom_call.1} parent=11 // pred_region
          _
        $region92: #{tpu_custom_call.1} parent=11 // pred_fallthru
          _
      $region12: #{tpu_custom_call.1} parent=5 // pred_fallthru
        _
      %p738 = scmp.lt.s32.totalorder %s43, 2
      // Predicated region
      $region93: #{tpu_custom_call.1} parent=5 // pred_check
        %p739 = pneg %p738
      $region94: #{tpu_custom_call.1} parent=5 // pred_check_branch
        %741 = sbr.rel (%p739) target = $region96
      $region95: #{tpu_custom_call.1} parent=5 // pred_region
        // Predicated region
        $region97: #{tpu_custom_call.1} parent=95 // pred_check
          %p742 = pneg %p63
        $region98: #{tpu_custom_call.1} parent=95 // pred_check_branch
          %744 = sbr.rel (%p742) target = $region100
        $region99: #{tpu_custom_call.1} parent=95 // pred_region
          %s745 = sand.u32 %s53, 1
          %s746 = scalar_lea.sflag [#allocation3], %s745
          %s747 = sand.u32 %s53, 1
          %s748 = smul.addr %s747, 16
          %s749 = scalar_lea.vmem [#allocation2], %s748
          %s751 = ssub.s32 256, 256
          %752 = vsyncadd %s746, %s751
          %s753 = smul.addr %s43, 2
          %s754 = smul.addr %s753, 128
          %s755 = scalar_lea.hbm %s0, %s754
          %s756 = sshll.u32 %s749, 4
          %s757 = int_to_ptr.vmem [resolvable:$true] %s756
          %762 = dma.hbm_to_vmem [thread:$0]  %s755, 256, %s757, %s746, 128, 128, 8
        $region100: #{tpu_custom_call.1} parent=95 // pred_fallthru
          _
        // Predicated region
        $region101: #{tpu_custom_call.1} parent=95 // pred_check
          %p763 = pneg %p89
        $region102: #{tpu_custom_call.1} parent=95 // pred_check_branch
          %765 = sbr.rel (%p763) target = $region104
        $region103: #{tpu_custom_call.1} parent=95 // pred_region
          %s766 = sand.u32 %s43, 1
          %s767 = scalar_lea.sflag [#allocation6], %s766
          %s768 = sand.u32 %s79, 1
          %s769 = smul.addr %s768, 16
          %s770 = scalar_lea.vmem [#allocation5], %s769
          %s772 = ssub.s32 256, 256
          %773 = vsyncadd %s767, %s772
          %s774 = smul.addr %s43, 2
          %s775 = smul.addr %s774, 128
          %s776 = scalar_lea.hbm %s1, %s775
          %s777 = sshll.u32 %s770, 4
          %s778 = int_to_ptr.vmem [resolvable:$true] %s777
          %783 = dma.hbm_to_vmem [thread:$0]  %s776, 256, %s778, %s767, 128, 128, 8
        $region104: #{tpu_custom_call.1} parent=95 // pred_fallthru
          _
        // Predicated region
        $region105: #{tpu_custom_call.1} parent=95 // pred_check
          %p784 = pneg %p115
        $region106: #{tpu_custom_call.1} parent=95 // pred_check_branch
          %786 = sbr.rel (%p784) target = $region108
        $region107: #{tpu_custom_call.1} parent=95 // pred_region
          %s787 = sand.u32 %s43, 1
          %s788 = scalar_lea.sflag [#allocation6], %s787
          %s789 = sand.u32 %s105, 1
          %s790 = smul.addr %s789, 4
          %s791 = scalar_lea.vmem [#allocation7], %s790
          %s793 = ssub.s32 64, 64
          %794 = vsyncadd %s788, %s793
          %s795 = smul.addr %s43, 2
          %s796 = smul.addr %s795, 32
          %s797 = scalar_lea.hbm %s2, %s796
          %s798 = sshll.u32 %s791, 4
          %s799 = int_to_ptr.vmem [resolvable:$true] %s798
          %804 = dma.hbm_to_vmem [thread:$0]  %s797, 64, %s799, %s788, 32, 32, 2
        $region108: #{tpu_custom_call.1} parent=95 // pred_fallthru
          _
        // Predicated region
        $region109: #{tpu_custom_call.1} parent=95 // pred_check
          %p805 = pneg %p141
        $region110: #{tpu_custom_call.1} parent=95 // pred_check_branch
          %807 = sbr.rel (%p805) target = $region112
        $region111: #{tpu_custom_call.1} parent=95 // pred_region
          %p808 = scmp.lt.s32.totalorder %s43, 1
          %s809 = scalar_select %p808, %s43, 1
          %s810 = smul.addr %s809, 2
          %s811 = smul.addr %s810, 2
          %s812 = scalar_lea.vmem %s3, %s811
        $region112: #{tpu_custom_call.1} parent=95 // pred_fallthru
          _
      $region96: #{tpu_custom_call.1} parent=5 // pred_fallthru
        _
      %p813 = scmp.le.s32.totalorder 1, %s43
      %p814 = scmp.lt.s32.totalorder %s43, 3
      %p815 = pnand %p813, %p814
      %p816 = pneg %p815
      // Predicated region
      $region113: #{tpu_custom_call.1} parent=5 // pred_check
        _
      $region114: #{tpu_custom_call.1} parent=5 // pred_check_branch
        %818 = sbr.rel (%p815) target = $region116
      $region115: #{tpu_custom_call.1} parent=5 // pred_region
        %s819 = ssub.s32 %s43, 1
        %s820 = sand.u32 %s56, 1
        %s821 = scalar_lea.sflag [#allocation3], %s820
        %s822 = sand.u32 %s56, 1
        %s823 = smul.addr %s822, 16
        %s824 = scalar_lea.vmem [#allocation2], %s823
        // Predicated region
        $region117: #{tpu_custom_call.1} parent=115 // pred_check
          %p825 = pneg %p69
        $region118: #{tpu_custom_call.1} parent=115 // pred_check_branch
          %827 = sbr.rel (%p825) target = $region120
        $region119: #{tpu_custom_call.1} parent=115 // pred_region
          %828 = dma.done %s821, 256
        $region120: #{tpu_custom_call.1} parent=115 // pred_fallthru
          _
        %s829 = sand.u32 %s48, 1
        %s830 = scalar_lea.sflag [#allocation6], %s829
        %s831 = sand.u32 %s82, 1
        %s832 = smul.addr %s831, 16
        %s833 = scalar_lea.vmem [#allocation5], %s832
        // Predicated region
        $region121: #{tpu_custom_call.1} parent=115 // pred_check
          %p834 = pneg %p95
        $region122: #{tpu_custom_call.1} parent=115 // pred_check_branch
          %836 = sbr.rel (%p834) target = $region124
        $region123: #{tpu_custom_call.1} parent=115 // pred_region
          %837 = dma.done %s830, 256
        $region124: #{tpu_custom_call.1} parent=115 // pred_fallthru
          _
        %s838 = sand.u32 %s48, 1
        %s839 = scalar_lea.sflag [#allocation6], %s838
        %s840 = sand.u32 %s108, 1
        %s841 = smul.addr %s840, 4
        %s842 = scalar_lea.vmem [#allocation7], %s841
        // Predicated region
        $region125: #{tpu_custom_call.1} parent=115 // pred_check
          %p843 = pneg %p121
        $region126: #{tpu_custom_call.1} parent=115 // pred_check_branch
          %845 = sbr.rel (%p843) target = $region128
        $region127: #{tpu_custom_call.1} parent=115 // pred_region
          %846 = dma.done %s839, 64
        $region128: #{tpu_custom_call.1} parent=115 // pred_fallthru
          _
        // Predicated region
        $region129: #{tpu_custom_call.1} parent=115 // pred_check
          %p847 = pneg %p168
        $region130: #{tpu_custom_call.1} parent=115 // pred_check_branch
          %849 = sbr.rel (%p847) target = $region132
        $region131: #{tpu_custom_call.1} parent=115 // pred_region
          %850 = dma.done [#allocation9], 3072
        $region132: #{tpu_custom_call.1} parent=115 // pred_fallthru
          _
        // Predicated region
        $region133: #{tpu_custom_call.1} parent=115 // pred_check
          %p851 = pneg %p210
        $region134: #{tpu_custom_call.1} parent=115 // pred_check_branch
          %853 = sbr.rel (%p851) target = $region136
        $region135: #{tpu_custom_call.1} parent=115 // pred_region
          %854 = dma.done [#allocation9], 1024
        $region136: #{tpu_custom_call.1} parent=115 // pred_fallthru
          _
        // Predicated region
        $region137: #{tpu_custom_call.1} parent=115 // pred_check
          %p855 = pneg %p252
        $region138: #{tpu_custom_call.1} parent=115 // pred_check_branch
          %857 = sbr.rel (%p855) target = $region140
        $region139: #{tpu_custom_call.1} parent=115 // pred_region
          %858 = dma.done [#allocation12], 1024
        $region140: #{tpu_custom_call.1} parent=115 // pred_fallthru
          _
        // Predicated region
        $region141: #{tpu_custom_call.1} parent=115 // pred_check
          %p859 = pneg %p294
        $region142: #{tpu_custom_call.1} parent=115 // pred_check_branch
          %861 = sbr.rel (%p859) target = $region144
        $region143: #{tpu_custom_call.1} parent=115 // pred_region
          %862 = dma.done [#allocation12], 2048
        $region144: #{tpu_custom_call.1} parent=115 // pred_fallthru
          _
        // Predicated region
        $region145: #{tpu_custom_call.1} parent=115 // pred_check
          %p863 = pneg %p336
        $region146: #{tpu_custom_call.1} parent=115 // pred_check_branch
          %865 = sbr.rel (%p863) target = $region148
        $region147: #{tpu_custom_call.1} parent=115 // pred_region
          %866 = dma.done [#allocation15], 1024
        $region148: #{tpu_custom_call.1} parent=115 // pred_fallthru
          _
        // Predicated region
        $region149: #{tpu_custom_call.1} parent=115 // pred_check
          %p867 = pneg %p378
        $region150: #{tpu_custom_call.1} parent=115 // pred_check_branch
          %869 = sbr.rel (%p867) target = $region152
        $region151: #{tpu_custom_call.1} parent=115 // pred_region
          %870 = dma.done [#allocation15], 2048
        $region152: #{tpu_custom_call.1} parent=115 // pred_fallthru
          _
        // Predicated region
        $region153: #{tpu_custom_call.1} parent=115 // pred_check
          %p871 = pneg %p420
        $region154: #{tpu_custom_call.1} parent=115 // pred_check_branch
          %873 = sbr.rel (%p871) target = $region156
        $region155: #{tpu_custom_call.1} parent=115 // pred_region
          %874 = dma.done [#allocation18], 2048
        $region156: #{tpu_custom_call.1} parent=115 // pred_fallthru
          _
        %s875 = sand.u32 %s56, 1
        %s876 = scalar_lea.sflag [#allocation3], %s875
        %s877 = sand.u32 %s56, 1
        %s878 = smul.addr %s877, 16
        %s879 = scalar_lea.vmem [#allocation2], %s878
        %p880 = pneg %p69
        %p881 = pneg %p66
        %s882 = sand.u32 %s48, 1
        %s883 = scalar_lea.sflag [#allocation6], %s882
        %s884 = sand.u32 %s82, 1
        %s885 = smul.addr %s884, 16
        %s886 = scalar_lea.vmem [#allocation5], %s885
        %p887 = pneg %p95
        %p888 = pneg %p92
        %s889 = sand.u32 %s48, 1
        %s890 = scalar_lea.sflag [#allocation6], %s889
        %s891 = sand.u32 %s108, 1
        %s892 = smul.addr %s891, 4
        %s893 = scalar_lea.vmem [#allocation7], %s892
        %p894 = pneg %p121
        %p895 = pneg %p118
        %p896 = scmp.lt.s32.totalorder %s48, 1
        %s897 = scalar_select %p896, %s48, 1
        %s898 = smul.addr %s897, 2
        %s899 = smul.addr %s898, 2
        %s900 = scalar_lea.vmem %s3, %s899
        %p901 = pneg %p147
        %p902 = pneg %p144
        %p903 = pneg %p168
        %p904 = pneg %p165
        %p905 = pneg %p189
        %p906 = pneg %p186
        %p907 = pneg %p210
        %p908 = pneg %p207
        %p909 = pneg %p231
        %p910 = pneg %p228
        %p911 = pneg %p252
        %p912 = pneg %p249
        %p913 = pneg %p273
        %p914 = pneg %p270
        %p915 = pneg %p294
        %p916 = pneg %p291
        %p917 = pneg %p315
        %p918 = pneg %p312
        %p919 = pneg %p336
        %p920 = pneg %p333
        %p921 = pneg %p357
        %p922 = pneg %p354
        %p923 = pneg %p378
        %p924 = pneg %p375
        %p925 = pneg %p399
        %p926 = pneg %p396
        %p927 = pneg %p420
        %p928 = pneg %p417
        %p929 = pneg %p441
        %p930 = pneg %p438
        %p931 = pneg %p462
        %p932 = pneg %p459
        %p933 = pneg %p483
        %p934 = pneg %p480
        %p935 = pneg %p504
        %p936 = pneg %p501
        %p937 = pneg %p525
        %p938 = pneg %p522
        %p939 = pneg %p546
        %p940 = pneg %p543
        %p941 = pneg %p567
        %p942 = pneg %p564
        %p943 = pneg %p593
        %p944 = pneg %p590
        %s945 = sand.u32 %s580, 1
        %s946 = scalar_lea.sflag [#allocation4], %s945
        %s947 = sand.u32 %s580, 1
        %s948 = smul.addr %s947, 16
        %s949 = scalar_lea.vmem [#allocation19], %s948
        %p950 = scmp.lt.s32.totalorder %s48, 1
        %s951 = scalar_select %p950, %s48, 1
        %s952 = smul.addr %s951, 2
        %s953 = smul.addr %s952, 2
        %s954 = scalar_lea.vmem %s3, %s953
        %v958 = vld [vmem:[#allocation8] sm:$0xff]
        %v959 = vld [vmem:[#allocation8 + $0x8] sm:$0xf]
        %v960 = vld [vmem:[#allocation8 + $0xc] sm:$0xff]
        %v961 = vld [vmem:[#allocation8 + $0x14] sm:$0xf]
        %v962 = vld [vmem:[#allocation8 + $0x18] sm:$0xff]
        %v963 = vld [vmem:[#allocation8 + $0x20] sm:$0xf]
        %v964 = vld [vmem:[#allocation8 + $0x24] sm:$0xff]
        %v965 = vld [vmem:[#allocation8 + $0x2c] sm:$0xf]
        %v966 = vld [vmem:[#allocation8 + $0x30] sm:$0xff]
        %v967 = vld [vmem:[#allocation8 + $0x38] sm:$0xf]
        %v968 = vld [vmem:[#allocation8 + $0x3c] sm:$0xff]
        %v969 = vld [vmem:[#allocation8 + $0x44] sm:$0xf]
        %v970 = vld [vmem:[#allocation8 + $0x48] sm:$0xff]
        %v971 = vld [vmem:[#allocation8 + $0x50] sm:$0xf]
        %v972 = vld [vmem:[#allocation8 + $0x54] sm:$0xff]
        %v973 = vld [vmem:[#allocation8 + $0x5c] sm:$0xf]
        %v974 = vld [vmem:[#allocation8 + $0x60] sm:$0xff]
        %v975 = vld [vmem:[#allocation8 + $0x68] sm:$0xf]
        %v976 = vld [vmem:[#allocation8 + $0x6c] sm:$0xff]
        %v977 = vld [vmem:[#allocation8 + $0x74] sm:$0xf]
        %v978 = vld [vmem:[#allocation8 + $0x78] sm:$0xff]
        %v979 = vld [vmem:[#allocation8 + $0x80] sm:$0xf]
        %v980 = vld [vmem:[#allocation8 + $0x84] sm:$0xff]
        %v981 = vld [vmem:[#allocation8 + $0x8c] sm:$0xf]
        %v982 = vld [vmem:[#allocation8 + $0x90] sm:$0xff]
        %v983 = vld [vmem:[#allocation8 + $0x98] sm:$0xf]
        %v984 = vld [vmem:[#allocation8 + $0x9c] sm:$0xff]
        %v985 = vld [vmem:[#allocation8 + $0xa4] sm:$0xf]
        %v986 = vld [vmem:[#allocation8 + $0xa8] sm:$0xff]
        %v987 = vld [vmem:[#allocation8 + $0xb0] sm:$0xf]
        %v988 = vld [vmem:[#allocation8 + $0xb4] sm:$0xff]
        %v989 = vld [vmem:[#allocation8 + $0xbc] sm:$0xf]
        %v990 = vld [vmem:[%s5] sm:$0x7]
        %v991 = vld [vmem:[#allocation10] sm:$0xf]
        %v992 = vld [vmem:[#allocation10 + $0x4] sm:$0xf]
        %v993 = vld [vmem:[#allocation10 + $0x8] sm:$0xf]
        %v994 = vld [vmem:[#allocation10 + $0xc] sm:$0xf]
        %v995 = vld [vmem:[#allocation10 + $0x10] sm:$0xf]
        %v996 = vld [vmem:[#allocation10 + $0x14] sm:$0xf]
        %v997 = vld [vmem:[#allocation10 + $0x18] sm:$0xf]
        %v998 = vld [vmem:[#allocation10 + $0x1c] sm:$0xf]
        %v999 = vld [vmem:[#allocation10 + $0x20] sm:$0xf]
        %v1000 = vld [vmem:[#allocation10 + $0x24] sm:$0xf]
        %v1001 = vld [vmem:[#allocation10 + $0x28] sm:$0xf]
        %v1002 = vld [vmem:[#allocation10 + $0x2c] sm:$0xf]
        %v1003 = vld [vmem:[#allocation10 + $0x30] sm:$0xf]
        %v1004 = vld [vmem:[#allocation10 + $0x34] sm:$0xf]
        %v1005 = vld [vmem:[#allocation10 + $0x38] sm:$0xf]
        %v1006 = vld [vmem:[#allocation10 + $0x3c] sm:$0xf]
        %v1007 = vld [vmem:[%s7] sm:$0x1]
        %v1008 = vld [vmem:[#allocation11] sm:$0xf]
        %v1009 = vld [vmem:[#allocation11 + $0x4] sm:$0xf]
        %v1010 = vld [vmem:[#allocation11 + $0x8] sm:$0xf]
        %v1011 = vld [vmem:[#allocation11 + $0xc] sm:$0xf]
        %v1012 = vld [vmem:[#allocation11 + $0x10] sm:$0xf]
        %v1013 = vld [vmem:[#allocation11 + $0x14] sm:$0xf]
        %v1014 = vld [vmem:[#allocation11 + $0x18] sm:$0xf]
        %v1015 = vld [vmem:[#allocation11 + $0x1c] sm:$0xf]
        %v1016 = vld [vmem:[#allocation11 + $0x20] sm:$0xf]
        %v1017 = vld [vmem:[#allocation11 + $0x24] sm:$0xf]
        %v1018 = vld [vmem:[#allocation11 + $0x28] sm:$0xf]
        %v1019 = vld [vmem:[#allocation11 + $0x2c] sm:$0xf]
        %v1020 = vld [vmem:[#allocation11 + $0x30] sm:$0xf]
        %v1021 = vld [vmem:[#allocation11 + $0x34] sm:$0xf]
        %v1022 = vld [vmem:[#allocation11 + $0x38] sm:$0xf]
        %v1023 = vld [vmem:[#allocation11 + $0x3c] sm:$0xf]
        %v1024 = vld [vmem:[%s9] sm:$0x1]
        %v1025 = vld [vmem:[#allocation13] sm:$0xff]
        %v1026 = vld [vmem:[#allocation13 + $0x8] sm:$0xff]
        %v1027 = vld [vmem:[#allocation13 + $0x10] sm:$0xff]
        %v1028 = vld [vmem:[#allocation13 + $0x18] sm:$0xff]
        %v1029 = vld [vmem:[#allocation13 + $0x20] sm:$0xff]
        %v1030 = vld [vmem:[#allocation13 + $0x28] sm:$0xff]
        %v1031 = vld [vmem:[#allocation13 + $0x30] sm:$0xff]
        %v1032 = vld [vmem:[#allocation13 + $0x38] sm:$0xff]
        %v1033 = vld [vmem:[#allocation13 + $0x40] sm:$0xff]
        %v1034 = vld [vmem:[#allocation13 + $0x48] sm:$0xff]
        %v1035 = vld [vmem:[#allocation13 + $0x50] sm:$0xff]
        %v1036 = vld [vmem:[#allocation13 + $0x58] sm:$0xff]
        %v1037 = vld [vmem:[#allocation13 + $0x60] sm:$0xff]
        %v1038 = vld [vmem:[#allocation13 + $0x68] sm:$0xff]
        %v1039 = vld [vmem:[#allocation13 + $0x70] sm:$0xff]
        %v1040 = vld [vmem:[#allocation13 + $0x78] sm:$0xff]
        %v1041 = vld [vmem:[%s11] sm:$0x3]
        %v1042 = vld [vmem:[#allocation14] sm:$0xf]
        %v1043 = vld [vmem:[#allocation14 + $0x4] sm:$0xf]
        %v1044 = vld [vmem:[#allocation14 + $0x8] sm:$0xf]
        %v1045 = vld [vmem:[#allocation14 + $0xc] sm:$0xf]
        %v1046 = vld [vmem:[#allocation14 + $0x10] sm:$0xf]
        %v1047 = vld [vmem:[#allocation14 + $0x14] sm:$0xf]
        %v1048 = vld [vmem:[#allocation14 + $0x18] sm:$0xf]
        %v1049 = vld [vmem:[#allocation14 + $0x1c] sm:$0xf]
        %v1050 = vld [vmem:[#allocation14 + $0x20] sm:$0xf]
        %v1051 = vld [vmem:[#allocation14 + $0x24] sm:$0xf]
        %v1052 = vld [vmem:[#allocation14 + $0x28] sm:$0xf]
        %v1053 = vld [vmem:[#allocation14 + $0x2c] sm:$0xf]
        %v1054 = vld [vmem:[#allocation14 + $0x30] sm:$0xf]
        %v1055 = vld [vmem:[#allocation14 + $0x34] sm:$0xf]
        %v1056 = vld [vmem:[#allocation14 + $0x38] sm:$0xf]
        %v1057 = vld [vmem:[#allocation14 + $0x3c] sm:$0xf]
        %v1058 = vld [vmem:[%s13] sm:$0x1]
        %v1059 = vld [vmem:[#allocation16] sm:$0xff]
        %v1060 = vld [vmem:[#allocation16 + $0x8] sm:$0xff]
        %v1061 = vld [vmem:[#allocation16 + $0x10] sm:$0xff]
        %v1062 = vld [vmem:[#allocation16 + $0x18] sm:$0xff]
        %v1063 = vld [vmem:[#allocation16 + $0x20] sm:$0xff]
        %v1064 = vld [vmem:[#allocation16 + $0x28] sm:$0xff]
        %v1065 = vld [vmem:[#allocation16 + $0x30] sm:$0xff]
        %v1066 = vld [vmem:[#allocation16 + $0x38] sm:$0xff]
        %v1067 = vld [vmem:[#allocation16 + $0x40] sm:$0xff]
        %v1068 = vld [vmem:[#allocation16 + $0x48] sm:$0xff]
        %v1069 = vld [vmem:[#allocation16 + $0x50] sm:$0xff]
        %v1070 = vld [vmem:[#allocation16 + $0x58] sm:$0xff]
        %v1071 = vld [vmem:[#allocation16 + $0x60] sm:$0xff]
        %v1072 = vld [vmem:[#allocation16 + $0x68] sm:$0xff]
        %v1073 = vld [vmem:[#allocation16 + $0x70] sm:$0xff]
        %v1074 = vld [vmem:[#allocation16 + $0x78] sm:$0xff]
        %v1075 = vld [vmem:[%s15] sm:$0x3]
        %v1076 = vld [vmem:[#allocation17] sm:$0xf]
        %v1077 = vld [vmem:[#allocation17 + $0x4] sm:$0xf]
        %v1078 = vld [vmem:[#allocation17 + $0x8] sm:$0xf]
        %v1079 = vld [vmem:[#allocation17 + $0xc] sm:$0xf]
        %v1080 = vld [vmem:[#allocation17 + $0x10] sm:$0xf]
        %v1081 = vld [vmem:[#allocation17 + $0x14] sm:$0xf]
        %v1082 = vld [vmem:[#allocation17 + $0x18] sm:$0xf]
        %v1083 = vld [vmem:[#allocation17 + $0x1c] sm:$0xf]
        %v1084 = vld [vmem:[#allocation17 + $0x20] sm:$0xf]
        %v1085 = vld [vmem:[#allocation17 + $0x24] sm:$0xf]
        %v1086 = vld [vmem:[#allocation17 + $0x28] sm:$0xf]
        %v1087 = vld [vmem:[#allocation17 + $0x2c] sm:$0xf]
        %v1088 = vld [vmem:[#allocation17 + $0x30] sm:$0xf]
        %v1089 = vld [vmem:[#allocation17 + $0x34] sm:$0xf]
        %v1090 = vld [vmem:[#allocation17 + $0x38] sm:$0xf]
        %v1091 = vld [vmem:[#allocation17 + $0x3c] sm:$0xf]
        %v1092 = vld [vmem:[#allocation17 + $0x40] sm:$0xf]
        %v1093 = vld [vmem:[#allocation17 + $0x44] sm:$0xf]
        %v1094 = vld [vmem:[#allocation17 + $0x48] sm:$0xf]
        %v1095 = vld [vmem:[#allocation17 + $0x4c] sm:$0xf]
        %v1096 = vld [vmem:[#allocation17 + $0x50] sm:$0xf]
        %v1097 = vld [vmem:[#allocation17 + $0x54] sm:$0xf]
        %v1098 = vld [vmem:[#allocation17 + $0x58] sm:$0xf]
        %v1099 = vld [vmem:[#allocation17 + $0x5c] sm:$0xf]
        %v1100 = vld [vmem:[#allocation17 + $0x60] sm:$0xf]
        %v1101 = vld [vmem:[#allocation17 + $0x64] sm:$0xf]
        %v1102 = vld [vmem:[#allocation17 + $0x68] sm:$0xf]
        %v1103 = vld [vmem:[#allocation17 + $0x6c] sm:$0xf]
        %v1104 = vld [vmem:[#allocation17 + $0x70] sm:$0xf]
        %v1105 = vld [vmem:[#allocation17 + $0x74] sm:$0xf]
        %v1106 = vld [vmem:[#allocation17 + $0x78] sm:$0xf]
        %v1107 = vld [vmem:[#allocation17 + $0x7c] sm:$0xf]
        %v1108 = vld [vmem:[%s17] sm:$0x1]
        %v1109 = vld [vmem:[%s18] sm:$0x1]
        %v1110 = vld [vmem:[%s19] sm:$0x1]
        %v1111 = vld [vmem:[%s20] sm:$0x1]
        %v1112 = vld [vmem:[%s21] sm:$0x1]
        %v1113 = vld [vmem:[%s22] sm:$0x1]
        %v1114 = vld [vmem:[%s23] sm:$0x1]
        %v1115 = vld [vmem:[%s824] sm:$0xff]
        %v1116 = vld [vmem:[%s824 + $0x8] sm:$0xff]
        %v1117 = vld [vmem:[%s833] sm:$0xff]
        %v1118 = vld [vmem:[%s833 + $0x8] sm:$0xff]
        %v1119 = vld [vmem:[%s842] sm:$0x3]
        %v1120 = vld [vmem:[%s842 + $0x2] sm:$0x3]
        %v1121 = vld [vmem:[%s954] sm:$0x3]
        %v1122 = vld [vmem:[%s954 + $0x2] sm:$0x3]
        %1123 = vadd.xlane.f32.xlu0 %v1115
        %v1124 = vpop.xlane.xlu0 %1123
        %1125 = vadd.xlane.f32.xlu0 %v1116
        %v1126 = vpop.xlane.xlu0 %1125
        %v1127 = vrcp.pop 128.0
        %v1128 = vmul.f32 %v1124, %v1127
        %v1129 = vmul.f32 %v1126, %v1127
        %v1130 = vsub.f32 %v1115, %v1128
        %v1131 = vsub.f32 %v1116, %v1129
        %v1132 = vmul.f32 %v1130, %v1130
        %v1133 = vmul.f32 %v1131, %v1131
        %1134 = vadd.xlane.f32.xlu0 %v1132
        %v1135 = vpop.xlane.xlu0 %1134
        %1136 = vadd.xlane.f32.xlu0 %v1133
        %v1137 = vpop.xlane.xlu0 %1136
        %v1138 = vrcp.pop 127.0
        %v1139 = vmul.f32 %v1135, %v1138
        %v1140 = vmul.f32 %v1137, %v1138
        %v1142 = vlaneseq
        %v1143 = vshrl.u32 %v1142, 7
        %v1144 = vsub.s32 0, %v1143
        %v1145 = vrot.slane %v1109, %v1144
        %v1147 = vmul.f32 %v1145, %v1130
        %v1148 = vmul.f32 %v1145, %v1131
        %v1149 = vrsqrt.pop %v1139
        %v1150 = vmul.f32 %v1139, %v1149
        %vm1151 = vcmp.eq.f32.partialorder %v1139, inf
        %v1152 = vsel %vm1151, %v1139, %v1150
        %vm1153 = vcmp.eq.f32.partialorder %v1139, 0.0
        %v1154 = vand.u32 %v1139, 2147483648
        %v1155 = vsel %vm1153, %v1154, %v1152
        %v1156 = vrsqrt.pop %v1140
        %v1157 = vmul.f32 %v1140, %v1156
        %vm1158 = vcmp.eq.f32.partialorder %v1140, inf
        %v1159 = vsel %vm1158, %v1140, %v1157
        %vm1160 = vcmp.eq.f32.partialorder %v1140, 0.0
        %v1161 = vand.u32 %v1140, 2147483648
        %v1162 = vsel %vm1160, %v1161, %v1159
        %v1163 = vadd.f32 %v1155, 1e-06
        %v1164 = vadd.f32 %v1162, 1e-06
        %v1165 = vrcp.pop %v1163
        %v1166 = vmul.f32 %v1147, %v1165
        %v1167 = vrcp.pop %v1164
        %v1168 = vmul.f32 %v1148, %v1167
        %v1170 = vlaneseq
        %v1171 = vshrl.u32 %v1170, 7
        %v1172 = vsub.s32 0, %v1171
        %v1173 = vrot.slane %v1110, %v1172
        %v1175 = vadd.f32 %v1166, %v1173
        %v1176 = vadd.f32 %v1168, %v1173
        %v1177 = vpack.c.bf16 %v1176, %v1175
        %v1179 = vlaneseq
        %v1180 = vshrl.u32 %v1179, 7
        %v1181 = vsub.s32 0, %v1180
        %v1182 = vrot.slane %v990, %v1181
        %v1183 = vlaneseq
        %v1184 = vshrl.u32 %v1183, 7
        %v1185 = vsub.s32 1, %v1184
        %v1186 = vrot.slane %v990, %v1185
        %v1187 = vlaneseq
        %v1188 = vshrl.u32 %v1187, 7
        %v1189 = vsub.s32 2, %v1188
        %v1190 = vrot.slane %v990, %v1189
        %v1226 = vunpack.c.l.b16 %v958
        %v1227 = vunpack.c.h.b16 %v958
        %v1228 = vunpack.c.l.b16 %v959
        %v1229 = vunpack.c.l.b16 %v960
        %v1230 = vunpack.c.h.b16 %v960
        %v1231 = vunpack.c.l.b16 %v961
        %v1232 = vunpack.c.l.b16 %v962
        %v1233 = vunpack.c.h.b16 %v962
        %v1234 = vunpack.c.l.b16 %v963
        %v1235 = vunpack.c.l.b16 %v964
        %v1236 = vunpack.c.h.b16 %v964
        %v1237 = vunpack.c.l.b16 %v965
        %v1238 = vunpack.c.l.b16 %v966
        %v1239 = vunpack.c.h.b16 %v966
        %v1240 = vunpack.c.l.b16 %v967
        %v1241 = vunpack.c.l.b16 %v968
        %v1242 = vunpack.c.h.b16 %v968
        %v1243 = vunpack.c.l.b16 %v969
        %v1244 = vunpack.c.l.b16 %v970
        %v1245 = vunpack.c.h.b16 %v970
        %v1246 = vunpack.c.l.b16 %v971
        %v1247 = vunpack.c.l.b16 %v972
        %v1248 = vunpack.c.h.b16 %v972
        %v1249 = vunpack.c.l.b16 %v973
        %v1250 = vunpack.c.l.b16 %v974
        %v1251 = vunpack.c.h.b16 %v974
        %v1252 = vunpack.c.l.b16 %v975
        %v1253 = vunpack.c.l.b16 %v976
        %v1254 = vunpack.c.h.b16 %v976
        %v1255 = vunpack.c.l.b16 %v977
        %v1256 = vunpack.c.l.b16 %v978
        %v1257 = vunpack.c.h.b16 %v978
        %v1258 = vunpack.c.l.b16 %v979
        %v1259 = vunpack.c.l.b16 %v980
        %v1260 = vunpack.c.h.b16 %v980
        %v1261 = vunpack.c.l.b16 %v981
        %v1262 = vunpack.c.l.b16 %v982
        %v1263 = vunpack.c.h.b16 %v982
        %v1264 = vunpack.c.l.b16 %v983
        %v1265 = vunpack.c.l.b16 %v984
        %v1266 = vunpack.c.h.b16 %v984
        %v1267 = vunpack.c.l.b16 %v985
        %v1268 = vunpack.c.l.b16 %v986
        %v1269 = vunpack.c.h.b16 %v986
        %v1270 = vunpack.c.l.b16 %v987
        %v1271 = vunpack.c.l.b16 %v988
        %v1272 = vunpack.c.h.b16 %v988
        %v1273 = vunpack.c.l.b16 %v989
        %v1274 = vpack.c.b16 %v1229, %v1226
        %v1275 = vpack.c.b16 %v1230, %v1227
        %v1276 = vpack.c.b16 %v1231, %v1228
        %v1277 = vpack.c.b16 %v1235, %v1232
        %v1278 = vpack.c.b16 %v1236, %v1233
        %v1279 = vpack.c.b16 %v1237, %v1234
        %v1280 = vpack.c.b16 %v1241, %v1238
        %v1281 = vpack.c.b16 %v1242, %v1239
        %v1282 = vpack.c.b16 %v1243, %v1240
        %v1283 = vpack.c.b16 %v1247, %v1244
        %v1284 = vpack.c.b16 %v1248, %v1245
        %v1285 = vpack.c.b16 %v1249, %v1246
        %v1286 = vpack.c.b16 %v1253, %v1250
        %v1287 = vpack.c.b16 %v1254, %v1251
        %v1288 = vpack.c.b16 %v1255, %v1252
        %v1289 = vpack.c.b16 %v1259, %v1256
        %v1290 = vpack.c.b16 %v1260, %v1257
        %v1291 = vpack.c.b16 %v1261, %v1258
        %v1292 = vpack.c.b16 %v1265, %v1262
        %v1293 = vpack.c.b16 %v1266, %v1263
        %v1294 = vpack.c.b16 %v1267, %v1264
        %v1295 = vpack.c.b16 %v1271, %v1268
        %v1296 = vpack.c.b16 %v1272, %v1269
        %v1297 = vpack.c.b16 %v1273, %v1270
        %1322 = vmatprep.subr.bf16.mxu0 %v1275
        %1323 = vmatpush1.bf16.msra.mxu0 %v1274
        %1324 = vmatprep.subr.bf16.mxu0 %v1278
        %1325 = vmatpush1.bf16.msra.mxu0 %v1277
        %1326 = vmatprep.subr.bf16.mxu0 %v1281
        %1327 = vmatpush1.bf16.msra.mxu0 %v1280
        %1328 = vmatprep.subr.bf16.mxu0 %v1284
        %1329 = vmatpush1.bf16.msra.mxu0 %v1283
        %1330 = vmatprep.subr.bf16.mxu0 %v1287
        %1331 = vmatpush1.bf16.msra.mxu0 %v1286
        %1332 = vmatprep.subr.bf16.mxu0 %v1290
        %1333 = vmatpush1.bf16.msra.mxu0 %v1289
        %1334 = vmatprep.subr.bf16.mxu0 %v1293
        %1335 = vmatpush1.bf16.msra.mxu0 %v1292
        %1336 = vmatprep.subr.bf16.mxu0 %v1296
        %1337 = vmatpush1.bf16.msra.mxu0 %v1295
        %1338 = vmatprep.subr.bf16.mxu0 0
        %1339 = vmatpush1.bf16.msra.mxu0 0
        %1340 = vmatprep.subr.bf16.mxu0 0
        %1341 = vmatpush1.bf16.msra.mxu0 0
        %1342 = vmatprep.subr.bf16.mxu0 0
        %1343 = vmatpush1.bf16.msra.mxu0 0
        %1344 = vmatprep.subr.bf16.mxu0 0
        %1345 = vmatpush1.bf16.msra.mxu0 0
        %1346 = vmatprep.subr.bf16.mxu0 0
        %1347 = vmatpush1.bf16.msra.mxu0 0
        %1348 = vmatprep.subr.bf16.mxu0 0
        %1349 = vmatpush1.bf16.msra.mxu0 0
        %1350 = vmatprep.subr.bf16.mxu0 0
        %1351 = vmatpush1.bf16.msra.mxu0 0
        %1352 = vmatprep.subr.bf16.mxu0 0
        %1353 = vmatpush1.bf16.msra.mxu0 0
        %1354 = vmatprep.mubr.bf16.mxu0 0
        %1355 = vmatmul.mubr.bf16.gmra.mrb[0].mxu0 %v1177
        %v1356 = vpop.f32.mrb[0].mxu0
        %v1357 = vadd.f32 %v1182, %v1356
        %v1358 = vpop.f32.mrb[0].mxu0
        %v1359 = vadd.f32 %v1186, %v1358
        %v1360 = vpop.f32.mrb[0].mxu0
        %v1361 = vadd.f32 %v1182, %v1360
        %v1362 = vpop.f32.mrb[0].mxu0
        %v1363 = vadd.f32 %v1186, %v1362
        %1364 = vdwg.mxu0
        %1365 = vmatprep.subr.bf16.mxu0 0
        %1366 = vmatpush1.bf16.msra.mxu0 %v1276
        %1367 = vmatprep.subr.bf16.mxu0 0
        %1368 = vmatpush1.bf16.msra.mxu0 %v1279
        %1369 = vmatprep.subr.bf16.mxu0 0
        %1370 = vmatpush1.bf16.msra.mxu0 %v1282
        %1371 = vmatprep.subr.bf16.mxu0 0
        %1372 = vmatpush1.bf16.msra.mxu0 %v1285
        %1373 = vmatprep.subr.bf16.mxu0 0
        %1374 = vmatpush1.bf16.msra.mxu0 %v1288
        %1375 = vmatprep.subr.bf16.mxu0 0
        %1376 = vmatpush1.bf16.msra.mxu0 %v1291
        %1377 = vmatprep.subr.bf16.mxu0 0
        %1378 = vmatpush1.bf16.msra.mxu0 %v1294
        %1379 = vmatprep.subr.bf16.mxu0 0
        %1380 = vmatpush1.bf16.msra.mxu0 %v1297
        %1381 = vmatprep.subr.bf16.mxu0 0
        %1382 = vmatpush1.bf16.msra.mxu0 0
        %1383 = vmatprep.subr.bf16.mxu0 0
        %1384 = vmatpush1.bf16.msra.mxu0 0
        %1385 = vmatprep.subr.bf16.mxu0 0
        %1386 = vmatpush1.bf16.msra.mxu0 0
        %1387 = vmatprep.subr.bf16.mxu0 0
        %1388 = vmatpush1.bf16.msra.mxu0 0
        %1389 = vmatprep.subr.bf16.mxu0 0
        %1390 = vmatpush1.bf16.msra.mxu0 0
        %1391 = vmatprep.subr.bf16.mxu0 0
        %1392 = vmatpush1.bf16.msra.mxu0 0
        %1393 = vmatprep.subr.bf16.mxu0 0
        %1394 = vmatpush1.bf16.msra.mxu0 0
        %1395 = vmatprep.subr.bf16.mxu0 0
        %1396 = vmatpush1.bf16.msra.mxu0 0
        %1397 = vmatprep.mubr.bf16.mxu0 0
        %1398 = vmatmul.mubr.bf16.gmra.mrb[0].mxu0 %v1177
        %v1399 = vpop.f32.mrb[0].mxu0
        %v1400 = vadd.f32 %v1190, %v1399
        %v1401 = vpop.f32.mrb[0].mxu0
        %v1402 = vpop.f32.mrb[0].mxu0
        %v1403 = vadd.f32 %v1190, %v1402
        %v1404 = vpop.f32.mrb[0].mxu0
        %1405 = vdwg.mxu0
        %v1406 = vmul.f32 %v1357, 0.17677669
        %v1407 = vmul.f32 %v1361, 0.17677669
        %vm1408 = vnez %v1121
        %vm1409 = vnez %v1122
        %v1410 = vpack.c.bf16 %v1407, %v1406
        %v1411 = vpack.c.bf16 %v1363, %v1359
        %v1412 = vpack.c.bf16 %v1403, %v1400
        %vm1413 = vcmask 261120
        %v1415 = vsel %vm1413, %v1410, 0
        %v1418 = vsel %vm1413, %v1411, 0
        %1420 = vmatprep.subr.bf16.mxu0 0
        %1421 = vmatpush1.bf16.xpose.msra.mxu0 %v1418
        %1422 = vmatprep.subr.bf16.mxu0 0
        %1423 = vmatpush1.bf16.xpose.msra.mxu0 0
        %1424 = vmatprep.subr.bf16.mxu0 0
        %1425 = vmatpush1.bf16.xpose.msra.mxu0 0
        %1426 = vmatprep.subr.bf16.mxu0 0
        %1427 = vmatpush1.bf16.xpose.msra.mxu0 0
        %1428 = vmatprep.subr.bf16.mxu0 0
        %1429 = vmatpush1.bf16.xpose.msra.mxu0 0
        %1430 = vmatprep.subr.bf16.mxu0 0
        %1431 = vmatpush1.bf16.xpose.msra.mxu0 0
        %1432 = vmatprep.subr.bf16.mxu0 0
        %1433 = vmatpush1.bf16.xpose.msra.mxu0 0
        %1434 = vmatprep.subr.bf16.mxu0 0
        %1435 = vmatpush1.bf16.xpose.msra.mxu0 0
        %1436 = vmatprep.subr.bf16.mxu0 0
        %1437 = vmatpush1.bf16.xpose.msra.mxu0 0
        %1438 = vmatprep.subr.bf16.mxu0 0
        %1439 = vmatpush1.bf16.xpose.msra.mxu0 0
        %1440 = vmatprep.subr.bf16.mxu0 0
        %1441 = vmatpush1.bf16.xpose.msra.mxu0 0
        %1442 = vmatprep.subr.bf16.mxu0 0
        %1443 = vmatpush1.bf16.xpose.msra.mxu0 0
        %1444 = vmatprep.subr.bf16.mxu0 0
        %1445 = vmatpush1.bf16.xpose.msra.mxu0 0
        %1446 = vmatprep.subr.bf16.mxu0 0
        %1447 = vmatpush1.bf16.xpose.msra.mxu0 0
        %1448 = vmatprep.subr.bf16.mxu0 0
        %1449 = vmatpush1.bf16.xpose.msra.mxu0 0
        %1450 = vmatprep.subr.bf16.mxu0 0
        %1451 = vmatpush1.bf16.xpose.msra.mxu0 0
        %1452 = vmatprep.mubr.bf16.mxu0 0
        %1453 = vmatmul.mubr.bf16.gmra.mrb[0].mxu0 %v1415
        %v1454 = vpop.f32.mrb[0].mxu0
        %v1455 = vadd.f32 0.0, %v1454
        %v1456 = vpop.f32.mrb[0].mxu0
        %v1457 = vpop.f32.mrb[0].mxu0
        %v1458 = vadd.f32 0.0, %v1457
        %v1459 = vpop.f32.mrb[0].mxu0
        %1460 = vdwg.mxu0
        %v1461 = vsel %vm1408, 16843009, 0
        %v1462 = vsel %vm1409, 16843009, 0
        %v1463 = vunpack.c.0.s8 %v1461
        %v1464 = vunpack.c.0.s8 %v1462
        %vm1465 = vcmp.ne.s32.totalorder %v1463, 0
        %vm1466 = vcmp.ne.s32.totalorder %v1464, 0
        %v1467 = vsel %vm1465, %v1455, -1e+09
        %v1468 = vsel %vm1466, %v1458, -1e+09
        %vm1469 = vcmask 130048
        %v1470 = vsel %vm1469, %v1467, -inf
        %1471 = vmax.xlane.f32.xlu0 %v1470
        %v1472 = vpop.xlane.xlu0 %1471
        %v1473 = vsel %vm1469, %v1468, -inf
        %1474 = vmax.xlane.f32.xlu0 %v1473
        %v1475 = vpop.xlane.xlu0 %1474
        %v1476 = vsub.f32 %v1467, %v1472
        %v1477 = vsub.f32 %v1468, %v1475
        %v1478 = vmul.f32 %v1476, 1.442695
        %v1479 = vpow.pop %v1478
        %v1480 = vmul.f32 %v1477, 1.442695
        %v1481 = vpow.pop %v1480
        %v1482 = vsel %vm1469, %v1479, 0.0
        %1483 = vadd.xlane.f32.xlu0 %v1482
        %v1484 = vpop.xlane.xlu0 %1483
        %v1485 = vsel %vm1469, %v1481, 0.0
        %1486 = vadd.xlane.f32.xlu0 %v1485
        %v1487 = vpop.xlane.xlu0 %1486
        %v1488 = vrcp.pop %v1484
        %v1489 = vmul.f32 %v1479, %v1488
        %v1490 = vrcp.pop %v1487
        %v1491 = vmul.f32 %v1481, %v1490
        %v1492 = vpack.c.bf16 %v1491, %v1489
        %v1494 = vsel %vm1469, %v1492, 0
        %1496 = vmatprep.subr.bf16.mxu0 0
        %1497 = vmatpush1.bf16.msra.mxu0 %v1412
        %1498 = vmatprep.subr.bf16.mxu0 0
        %1499 = vmatpush1.bf16.msra.mxu0 0
        %1500 = vmatprep.subr.bf16.mxu0 0
        %1501 = vmatpush1.bf16.msra.mxu0 0
        %1502 = vmatprep.subr.bf16.mxu0 0
        %1503 = vmatpush1.bf16.msra.mxu0 0
        %1504 = vmatprep.subr.bf16.mxu0 0
        %1505 = vmatpush1.bf16.msra.mxu0 0
        %1506 = vmatprep.subr.bf16.mxu0 0
        %1507 = vmatpush1.bf16.msra.mxu0 0
        %1508 = vmatprep.subr.bf16.mxu0 0
        %1509 = vmatpush1.bf16.msra.mxu0 0
        %1510 = vmatprep.subr.bf16.mxu0 0
        %1511 = vmatpush1.bf16.msra.mxu0 0
        %1512 = vmatprep.subr.bf16.mxu0 0
        %1513 = vmatpush1.bf16.msra.mxu0 0
        %1514 = vmatprep.subr.bf16.mxu0 0
        %1515 = vmatpush1.bf16.msra.mxu0 0
        %1516 = vmatprep.subr.bf16.mxu0 0
        %1517 = vmatpush1.bf16.msra.mxu0 0
        %1518 = vmatprep.subr.bf16.mxu0 0
        %1519 = vmatpush1.bf16.msra.mxu0 0
        %1520 = vmatprep.subr.bf16.mxu0 0
        %1521 = vmatpush1.bf16.msra.mxu0 0
        %1522 = vmatprep.subr.bf16.mxu0 0
        %1523 = vmatpush1.bf16.msra.mxu0 0
        %1524 = vmatprep.subr.bf16.mxu0 0
        %1525 = vmatpush1.bf16.msra.mxu0 0
        %1526 = vmatprep.subr.bf16.mxu0 0
        %1527 = vmatpush1.bf16.msra.mxu0 0
        %1528 = vmatprep.mubr.bf16.mxu0 0
        %1529 = vmatmul.mubr.bf16.gmra.mrb[0].mxu0 %v1494
        %v1530 = vpop.f32.mrb[0].mxu0
        %v1531 = vadd.f32 0.0, %v1530
        %v1532 = vpop.f32.mrb[0].mxu0
        %v1533 = vpop.f32.mrb[0].mxu0
        %v1534 = vadd.f32 0.0, %v1533
        %v1535 = vpop.f32.mrb[0].mxu0
        %1536 = vdwg.mxu0
        %1538 = vrot.lane.b32.xlu0 %v1410, 96
        %v1539 = vpop.permute.xlu0 %1538
        %1541 = vrot.lane.b32.xlu0 %v1411, 96
        %v1542 = vpop.permute.xlu0 %1541
        %v1544 = vsel %vm1413, %v1539, 0
        %v1547 = vsel %vm1413, %v1542, 0
        %1549 = vmatprep.subr.bf16.mxu0 0
        %1550 = vmatpush1.bf16.xpose.msra.mxu0 %v1547
        %1551 = vmatprep.subr.bf16.mxu0 0
        %1552 = vmatpush1.bf16.xpose.msra.mxu0 0
        %1553 = vmatprep.subr.bf16.mxu0 0
        %1554 = vmatpush1.bf16.xpose.msra.mxu0 0
        %1555 = vmatprep.subr.bf16.mxu0 0
        %1556 = vmatpush1.bf16.xpose.msra.mxu0 0
        %1557 = vmatprep.subr.bf16.mxu0 0
        %1558 = vmatpush1.bf16.xpose.msra.mxu0 0
        %1559 = vmatprep.subr.bf16.mxu0 0
        %1560 = vmatpush1.bf16.xpose.msra.mxu0 0
        %1561 = vmatprep.subr.bf16.mxu0 0
        %1562 = vmatpush1.bf16.xpose.msra.mxu0 0
        %1563 = vmatprep.subr.bf16.mxu0 0
        %1564 = vmatpush1.bf16.xpose.msra.mxu0 0
        %1565 = vmatprep.subr.bf16.mxu0 0
        %1566 = vmatpush1.bf16.xpose.msra.mxu0 0
        %1567 = vmatprep.subr.bf16.mxu0 0
        %1568 = vmatpush1.bf16.xpose.msra.mxu0 0
        %1569 = vmatprep.subr.bf16.mxu0 0
        %1570 = vmatpush1.bf16.xpose.msra.mxu0 0
        %1571 = vmatprep.subr.bf16.mxu0 0
        %1572 = vmatpush1.bf16.xpose.msra.mxu0 0
        %1573 = vmatprep.subr.bf16.mxu0 0
        %1574 = vmatpush1.bf16.xpose.msra.mxu0 0
        %1575 = vmatprep.subr.bf16.mxu0 0
        %1576 = vmatpush1.bf16.xpose.msra.mxu0 0
        %1577 = vmatprep.subr.bf16.mxu0 0
        %1578 = vmatpush1.bf16.xpose.msra.mxu0 0
        %1579 = vmatprep.subr.bf16.mxu0 0
        %1580 = vmatpush1.bf16.xpose.msra.mxu0 0
        %1581 = vmatprep.mubr.bf16.mxu0 0
        %1582 = vmatmul.mubr.bf16.gmra.mrb[0].mxu0 %v1544
        %v1583 = vpop.f32.mrb[0].mxu0
        %v1584 = vadd.f32 0.0, %v1583
        %v1585 = vpop.f32.mrb[0].mxu0
        %v1586 = vpop.f32.mrb[0].mxu0
        %v1587 = vadd.f32 0.0, %v1586
        %v1588 = vpop.f32.mrb[0].mxu0
        %1589 = vdwg.mxu0
        %v1590 = vsel %vm1465, %v1584, -1e+09
        %v1591 = vsel %vm1466, %v1587, -1e+09
        %v1592 = vsel %vm1469, %v1590, -inf
        %1593 = vmax.xlane.f32.xlu0 %v1592
        %v1594 = vpop.xlane.xlu0 %1593
        %v1595 = vsel %vm1469, %v1591, -inf
        %1596 = vmax.xlane.f32.xlu0 %v1595
        %v1597 = vpop.xlane.xlu0 %1596
        %v1598 = vsub.f32 %v1590, %v1594
        %v1599 = vsub.f32 %v1591, %v1597
        %v1600 = vmul.f32 %v1598, 1.442695
        %v1601 = vpow.pop %v1600
        %v1602 = vmul.f32 %v1599, 1.442695
        %v1603 = vpow.pop %v1602
        %v1604 = vsel %vm1469, %v1601, 0.0
        %1605 = vadd.xlane.f32.xlu0 %v1604
        %v1606 = vpop.xlane.xlu0 %1605
        %v1607 = vsel %vm1469, %v1603, 0.0
        %1608 = vadd.xlane.f32.xlu0 %v1607
        %v1609 = vpop.xlane.xlu0 %1608
        %v1610 = vrcp.pop %v1606
        %v1611 = vmul.f32 %v1601, %v1610
        %v1612 = vrcp.pop %v1609
        %v1613 = vmul.f32 %v1603, %v1612
        %v1614 = vpack.c.bf16 %v1613, %v1611
        %1616 = vrot.lane.b32.xlu0 %v1412, 96
        %v1617 = vpop.permute.xlu0 %1616
        %v1620 = vsel %vm1469, %v1614, 0
        %1622 = vmatprep.subr.bf16.mxu0 0
        %1623 = vmatpush1.bf16.msra.mxu0 %v1617
        %1624 = vmatprep.subr.bf16.mxu0 0
        %1625 = vmatpush1.bf16.msra.mxu0 0
        %1626 = vmatprep.subr.bf16.mxu0 0
        %1627 = vmatpush1.bf16.msra.mxu0 0
        %1628 = vmatprep.subr.bf16.mxu0 0
        %1629 = vmatpush1.bf16.msra.mxu0 0
        %1630 = vmatprep.subr.bf16.mxu0 0
        %1631 = vmatpush1.bf16.msra.mxu0 0
        %1632 = vmatprep.subr.bf16.mxu0 0
        %1633 = vmatpush1.bf16.msra.mxu0 0
        %1634 = vmatprep.subr.bf16.mxu0 0
        %1635 = vmatpush1.bf16.msra.mxu0 0
        %1636 = vmatprep.subr.bf16.mxu0 0
        %1637 = vmatpush1.bf16.msra.mxu0 0
        %1638 = vmatprep.subr.bf16.mxu0 0
        %1639 = vmatpush1.bf16.msra.mxu0 0
        %1640 = vmatprep.subr.bf16.mxu0 0
        %1641 = vmatpush1.bf16.msra.mxu0 0
        %1642 = vmatprep.subr.bf16.mxu0 0
        %1643 = vmatpush1.bf16.msra.mxu0 0
        %1644 = vmatprep.subr.bf16.mxu0 0
        %1645 = vmatpush1.bf16.msra.mxu0 0
        %1646 = vmatprep.subr.bf16.mxu0 0
        %1647 = vmatpush1.bf16.msra.mxu0 0
        %1648 = vmatprep.subr.bf16.mxu0 0
        %1649 = vmatpush1.bf16.msra.mxu0 0
        %1650 = vmatprep.subr.bf16.mxu0 0
        %1651 = vmatpush1.bf16.msra.mxu0 0
        %1652 = vmatprep.subr.bf16.mxu0 0
        %1653 = vmatpush1.bf16.msra.mxu0 0
        %1654 = vmatprep.mubr.bf16.mxu0 0
        %1655 = vmatmul.mubr.bf16.gmra.mrb[0].mxu0 %v1620
        %v1656 = vpop.f32.mrb[0].mxu0
        %v1657 = vadd.f32 0.0, %v1656
        %v1658 = vpop.f32.mrb[0].mxu0
        %v1659 = vpop.f32.mrb[0].mxu0
        %v1660 = vadd.f32 0.0, %v1659
        %v1661 = vpop.f32.mrb[0].mxu0
        %1662 = vdwg.mxu0
        %1663 = vrot.lane.b32.xlu0 %v1410, 64
        %v1664 = vpop.permute.xlu0 %1663
        %1665 = vrot.lane.b32.xlu0 %v1411, 64
        %v1666 = vpop.permute.xlu0 %1665
        %v1668 = vsel %vm1413, %v1664, 0
        %v1671 = vsel %vm1413, %v1666, 0
        %1673 = vmatprep.subr.bf16.mxu0 0
        %1674 = vmatpush1.bf16.xpose.msra.mxu0 %v1671
        %1675 = vmatprep.subr.bf16.mxu0 0
        %1676 = vmatpush1.bf16.xpose.msra.mxu0 0
        %1677 = vmatprep.subr.bf16.mxu0 0
        %1678 = vmatpush1.bf16.xpose.msra.mxu0 0
        %1679 = vmatprep.subr.bf16.mxu0 0
        %1680 = vmatpush1.bf16.xpose.msra.mxu0 0
        %1681 = vmatprep.subr.bf16.mxu0 0
        %1682 = vmatpush1.bf16.xpose.msra.mxu0 0
        %1683 = vmatprep.subr.bf16.mxu0 0
        %1684 = vmatpush1.bf16.xpose.msra.mxu0 0
        %1685 = vmatprep.subr.bf16.mxu0 0
        %1686 = vmatpush1.bf16.xpose.msra.mxu0 0
        %1687 = vmatprep.subr.bf16.mxu0 0
        %1688 = vmatpush1.bf16.xpose.msra.mxu0 0
        %1689 = vmatprep.subr.bf16.mxu0 0
        %1690 = vmatpush1.bf16.xpose.msra.mxu0 0
        %1691 = vmatprep.subr.bf16.mxu0 0
        %1692 = vmatpush1.bf16.xpose.msra.mxu0 0
        %1693 = vmatprep.subr.bf16.mxu0 0
        %1694 = vmatpush1.bf16.xpose.msra.mxu0 0
        %1695 = vmatprep.subr.bf16.mxu0 0
        %1696 = vmatpush1.bf16.xpose.msra.mxu0 0
        %1697 = vmatprep.subr.bf16.mxu0 0
        %1698 = vmatpush1.bf16.xpose.msra.mxu0 0
        %1699 = vmatprep.subr.bf16.mxu0 0
        %1700 = vmatpush1.bf16.xpose.msra.mxu0 0
        %1701 = vmatprep.subr.bf16.mxu0 0
        %1702 = vmatpush1.bf16.xpose.msra.mxu0 0
        %1703 = vmatprep.subr.bf16.mxu0 0
        %1704 = vmatpush1.bf16.xpose.msra.mxu0 0
        %1705 = vmatprep.mubr.bf16.mxu0 0
        %1706 = vmatmul.mubr.bf16.gmra.mrb[0].mxu0 %v1668
        %v1707 = vpop.f32.mrb[0].mxu0
        %v1708 = vadd.f32 0.0, %v1707
        %v1709 = vpop.f32.mrb[0].mxu0
        %v1710 = vpop.f32.mrb[0].mxu0
        %v1711 = vadd.f32 0.0, %v1710
        %v1712 = vpop.f32.mrb[0].mxu0
        %1713 = vdwg.mxu0
        %v1714 = vsel %vm1465, %v1708, -1e+09
        %v1715 = vsel %vm1466, %v1711, -1e+09
        %v1716 = vsel %vm1469, %v1714, -inf
        %1717 = vmax.xlane.f32.xlu0 %v1716
        %v1718 = vpop.xlane.xlu0 %1717
        %v1719 = vsel %vm1469, %v1715, -inf
        %1720 = vmax.xlane.f32.xlu0 %v1719
        %v1721 = vpop.xlane.xlu0 %1720
        %v1722 = vsub.f32 %v1714, %v1718
        %v1723 = vsub.f32 %v1715, %v1721
        %v1724 = vmul.f32 %v1722, 1.442695
        %v1725 = vpow.pop %v1724
        %v1726 = vmul.f32 %v1723, 1.442695
        %v1727 = vpow.pop %v1726
        %v1728 = vsel %vm1469, %v1725, 0.0
        %1729 = vadd.xlane.f32.xlu0 %v1728
        %v1730 = vpop.xlane.xlu0 %1729
        %v1731 = vsel %vm1469, %v1727, 0.0
        %1732 = vadd.xlane.f32.xlu0 %v1731
        %v1733 = vpop.xlane.xlu0 %1732
        %v1734 = vrcp.pop %v1730
        %v1735 = vmul.f32 %v1725, %v1734
        %v1736 = vrcp.pop %v1733
        %v1737 = vmul.f32 %v1727, %v1736
        %v1738 = vpack.c.bf16 %v1737, %v1735
        %1739 = vrot.lane.b32.xlu0 %v1412, 64
        %v1740 = vpop.permute.xlu0 %1739
        %v1743 = vsel %vm1469, %v1738, 0
        %1745 = vmatprep.subr.bf16.mxu0 0
        %1746 = vmatpush1.bf16.msra.mxu0 %v1740
        %1747 = vmatprep.subr.bf16.mxu0 0
        %1748 = vmatpush1.bf16.msra.mxu0 0
        %1749 = vmatprep.subr.bf16.mxu0 0
        %1750 = vmatpush1.bf16.msra.mxu0 0
        %1751 = vmatprep.subr.bf16.mxu0 0
        %1752 = vmatpush1.bf16.msra.mxu0 0
        %1753 = vmatprep.subr.bf16.mxu0 0
        %1754 = vmatpush1.bf16.msra.mxu0 0
        %1755 = vmatprep.subr.bf16.mxu0 0
        %1756 = vmatpush1.bf16.msra.mxu0 0
        %1757 = vmatprep.subr.bf16.mxu0 0
        %1758 = vmatpush1.bf16.msra.mxu0 0
        %1759 = vmatprep.subr.bf16.mxu0 0
        %1760 = vmatpush1.bf16.msra.mxu0 0
        %1761 = vmatprep.subr.bf16.mxu0 0
        %1762 = vmatpush1.bf16.msra.mxu0 0
        %1763 = vmatprep.subr.bf16.mxu0 0
        %1764 = vmatpush1.bf16.msra.mxu0 0
        %1765 = vmatprep.subr.bf16.mxu0 0
        %1766 = vmatpush1.bf16.msra.mxu0 0
        %1767 = vmatprep.subr.bf16.mxu0 0
        %1768 = vmatpush1.bf16.msra.mxu0 0
        %1769 = vmatprep.subr.bf16.mxu0 0
        %1770 = vmatpush1.bf16.msra.mxu0 0
        %1771 = vmatprep.subr.bf16.mxu0 0
        %1772 = vmatpush1.bf16.msra.mxu0 0
        %1773 = vmatprep.subr.bf16.mxu0 0
        %1774 = vmatpush1.bf16.msra.mxu0 0
        %1775 = vmatprep.subr.bf16.mxu0 0
        %1776 = vmatpush1.bf16.msra.mxu0 0
        %1777 = vmatprep.mubr.bf16.mxu0 0
        %1778 = vmatmul.mubr.bf16.gmra.mrb[0].mxu0 %v1743
        %v1779 = vpop.f32.mrb[0].mxu0
        %v1780 = vadd.f32 0.0, %v1779
        %v1781 = vpop.f32.mrb[0].mxu0
        %v1782 = vpop.f32.mrb[0].mxu0
        %v1783 = vadd.f32 0.0, %v1782
        %v1784 = vpop.f32.mrb[0].mxu0
        %1785 = vdwg.mxu0
        %1786 = vrot.lane.b32.xlu0 %v1410, 32
        %v1787 = vpop.permute.xlu0 %1786
        %1788 = vrot.lane.b32.xlu0 %v1411, 32
        %v1789 = vpop.permute.xlu0 %1788
        %v1791 = vsel %vm1413, %v1787, 0
        %v1794 = vsel %vm1413, %v1789, 0
        %1796 = vmatprep.subr.bf16.mxu0 0
        %1797 = vmatpush1.bf16.xpose.msra.mxu0 %v1794
        %1798 = vmatprep.subr.bf16.mxu0 0
        %1799 = vmatpush1.bf16.xpose.msra.mxu0 0
        %1800 = vmatprep.subr.bf16.mxu0 0
        %1801 = vmatpush1.bf16.xpose.msra.mxu0 0
        %1802 = vmatprep.subr.bf16.mxu0 0
        %1803 = vmatpush1.bf16.xpose.msra.mxu0 0
        %1804 = vmatprep.subr.bf16.mxu0 0
        %1805 = vmatpush1.bf16.xpose.msra.mxu0 0
        %1806 = vmatprep.subr.bf16.mxu0 0
        %1807 = vmatpush1.bf16.xpose.msra.mxu0 0
        %1808 = vmatprep.subr.bf16.mxu0 0
        %1809 = vmatpush1.bf16.xpose.msra.mxu0 0
        %1810 = vmatprep.subr.bf16.mxu0 0
        %1811 = vmatpush1.bf16.xpose.msra.mxu0 0
        %1812 = vmatprep.subr.bf16.mxu0 0
        %1813 = vmatpush1.bf16.xpose.msra.mxu0 0
        %1814 = vmatprep.subr.bf16.mxu0 0
        %1815 = vmatpush1.bf16.xpose.msra.mxu0 0
        %1816 = vmatprep.subr.bf16.mxu0 0
        %1817 = vmatpush1.bf16.xpose.msra.mxu0 0
        %1818 = vmatprep.subr.bf16.mxu0 0
        %1819 = vmatpush1.bf16.xpose.msra.mxu0 0
        %1820 = vmatprep.subr.bf16.mxu0 0
        %1821 = vmatpush1.bf16.xpose.msra.mxu0 0
        %1822 = vmatprep.subr.bf16.mxu0 0
        %1823 = vmatpush1.bf16.xpose.msra.mxu0 0
        %1824 = vmatprep.subr.bf16.mxu0 0
        %1825 = vmatpush1.bf16.xpose.msra.mxu0 0
        %1826 = vmatprep.subr.bf16.mxu0 0
        %1827 = vmatpush1.bf16.xpose.msra.mxu0 0
        %1828 = vmatprep.mubr.bf16.mxu0 0
        %1829 = vmatmul.mubr.bf16.gmra.mrb[0].mxu0 %v1791
        %v1830 = vpop.f32.mrb[0].mxu0
        %v1831 = vadd.f32 0.0, %v1830
        %v1832 = vpop.f32.mrb[0].mxu0
        %v1833 = vpop.f32.mrb[0].mxu0
        %v1834 = vadd.f32 0.0, %v1833
        %v1835 = vpop.f32.mrb[0].mxu0
        %1836 = vdwg.mxu0
        %v1837 = vsel %vm1465, %v1831, -1e+09
        %v1838 = vsel %vm1466, %v1834, -1e+09
        %v1839 = vsel %vm1469, %v1837, -inf
        %1840 = vmax.xlane.f32.xlu0 %v1839
        %v1841 = vpop.xlane.xlu0 %1840
        %v1842 = vsel %vm1469, %v1838, -inf
        %1843 = vmax.xlane.f32.xlu0 %v1842
        %v1844 = vpop.xlane.xlu0 %1843
        %v1845 = vsub.f32 %v1837, %v1841
        %v1846 = vsub.f32 %v1838, %v1844
        %v1847 = vmul.f32 %v1845, 1.442695
        %v1848 = vpow.pop %v1847
        %v1849 = vmul.f32 %v1846, 1.442695
        %v1850 = vpow.pop %v1849
        %v1851 = vsel %vm1469, %v1848, 0.0
        %1852 = vadd.xlane.f32.xlu0 %v1851
        %v1853 = vpop.xlane.xlu0 %1852
        %v1854 = vsel %vm1469, %v1850, 0.0
        %1855 = vadd.xlane.f32.xlu0 %v1854
        %v1856 = vpop.xlane.xlu0 %1855
        %v1857 = vrcp.pop %v1853
        %v1858 = vmul.f32 %v1848, %v1857
        %v1859 = vrcp.pop %v1856
        %v1860 = vmul.f32 %v1850, %v1859
        %v1861 = vpack.c.bf16 %v1860, %v1858
        %1862 = vrot.lane.b32.xlu0 %v1412, 32
        %v1863 = vpop.permute.xlu0 %1862
        %v1866 = vsel %vm1469, %v1861, 0
        %1868 = vmatprep.subr.bf16.mxu0 0
        %1869 = vmatpush1.bf16.msra.mxu0 %v1863
        %1870 = vmatprep.subr.bf16.mxu0 0
        %1871 = vmatpush1.bf16.msra.mxu0 0
        %1872 = vmatprep.subr.bf16.mxu0 0
        %1873 = vmatpush1.bf16.msra.mxu0 0
        %1874 = vmatprep.subr.bf16.mxu0 0
        %1875 = vmatpush1.bf16.msra.mxu0 0
        %1876 = vmatprep.subr.bf16.mxu0 0
        %1877 = vmatpush1.bf16.msra.mxu0 0
        %1878 = vmatprep.subr.bf16.mxu0 0
        %1879 = vmatpush1.bf16.msra.mxu0 0
        %1880 = vmatprep.subr.bf16.mxu0 0
        %1881 = vmatpush1.bf16.msra.mxu0 0
        %1882 = vmatprep.subr.bf16.mxu0 0
        %1883 = vmatpush1.bf16.msra.mxu0 0
        %1884 = vmatprep.subr.bf16.mxu0 0
        %1885 = vmatpush1.bf16.msra.mxu0 0
        %1886 = vmatprep.subr.bf16.mxu0 0
        %1887 = vmatpush1.bf16.msra.mxu0 0
        %1888 = vmatprep.subr.bf16.mxu0 0
        %1889 = vmatpush1.bf16.msra.mxu0 0
        %1890 = vmatprep.subr.bf16.mxu0 0
        %1891 = vmatpush1.bf16.msra.mxu0 0
        %1892 = vmatprep.subr.bf16.mxu0 0
        %1893 = vmatpush1.bf16.msra.mxu0 0
        %1894 = vmatprep.subr.bf16.mxu0 0
        %1895 = vmatpush1.bf16.msra.mxu0 0
        %1896 = vmatprep.subr.bf16.mxu0 0
        %1897 = vmatpush1.bf16.msra.mxu0 0
        %1898 = vmatprep.subr.bf16.mxu0 0
        %1899 = vmatpush1.bf16.msra.mxu0 0
        %1900 = vmatprep.mubr.bf16.mxu0 0
        %1901 = vmatmul.mubr.bf16.gmra.mrb[0].mxu0 %v1866
        %v1902 = vpop.f32.mrb[0].mxu0
        %v1903 = vadd.f32 0.0, %v1902
        %v1904 = vpop.f32.mrb[0].mxu0
        %v1905 = vpop.f32.mrb[0].mxu0
        %v1906 = vadd.f32 0.0, %v1905
        %v1907 = vpop.f32.mrb[0].mxu0
        %1908 = vdwg.mxu0
        %1911 = vrot.lane.b32.xlu0 %v1657, 32
        %v1912 = vpop.permute.xlu0 %1911
        %1913 = vrot.lane.b32.xlu0 %v1660, 32
        %v1914 = vpop.permute.xlu0 %1913
        %1919 = vrot.lane.b32.xlu0 %v1780, 64
        %v1920 = vpop.permute.xlu0 %1919
        %1921 = vrot.lane.b32.xlu0 %v1783, 64
        %v1922 = vpop.permute.xlu0 %1921
        %1927 = vrot.lane.b32.xlu0 %v1903, 96
        %v1928 = vpop.permute.xlu0 %1927
        %1929 = vrot.lane.b32.xlu0 %v1906, 96
        %v1930 = vpop.permute.xlu0 %1929
        %v1933 = vsel %vm1413, %v1531, %v1912
        %v1934 = vsel %vm1413, %v1534, %v1914
        %vm1935 = vcmask 523264
        %v1936 = vsel %vm1935, %v1933, %v1920
        %v1937 = vsel %vm1935, %v1934, %v1922
        %vm1938 = vcmask 785408
        %v1939 = vsel %vm1938, %v1936, %v1928
        %v1940 = vsel %vm1938, %v1937, %v1930
        %v1941 = vpack.c.bf16 %v1940, %v1939
        %v1943 = vlaneseq
        %v1944 = vshrl.u32 %v1943, 7
        %v1945 = vsub.s32 0, %v1944
        %v1946 = vrot.slane %v1007, %v1945
        %v1964 = vunpack.c.l.b16 %v991
        %v1965 = vunpack.c.l.b16 %v992
        %v1966 = vunpack.c.l.b16 %v993
        %v1967 = vunpack.c.l.b16 %v994
        %v1968 = vunpack.c.l.b16 %v995
        %v1969 = vunpack.c.l.b16 %v996
        %v1970 = vunpack.c.l.b16 %v997
        %v1971 = vunpack.c.l.b16 %v998
        %v1972 = vunpack.c.l.b16 %v999
        %v1973 = vunpack.c.l.b16 %v1000
        %v1974 = vunpack.c.l.b16 %v1001
        %v1975 = vunpack.c.l.b16 %v1002
        %v1976 = vunpack.c.l.b16 %v1003
        %v1977 = vunpack.c.l.b16 %v1004
        %v1978 = vunpack.c.l.b16 %v1005
        %v1979 = vunpack.c.l.b16 %v1006
        %v1980 = vpack.c.b16 %v1965, %v1964
        %v1981 = vpack.c.b16 %v1967, %v1966
        %v1982 = vpack.c.b16 %v1969, %v1968
        %v1983 = vpack.c.b16 %v1971, %v1970
        %v1984 = vpack.c.b16 %v1973, %v1972
        %v1985 = vpack.c.b16 %v1975, %v1974
        %v1986 = vpack.c.b16 %v1977, %v1976
        %v1987 = vpack.c.b16 %v1979, %v1978
        %1996 = vmatprep.subr.bf16.mxu0 0
        %1997 = vmatpush1.bf16.msra.mxu0 %v1980
        %1998 = vmatprep.subr.bf16.mxu0 0
        %1999 = vmatpush1.bf16.msra.mxu0 %v1981
        %2000 = vmatprep.subr.bf16.mxu0 0
        %2001 = vmatpush1.bf16.msra.mxu0 %v1982
        %2002 = vmatprep.subr.bf16.mxu0 0
        %2003 = vmatpush1.bf16.msra.mxu0 %v1983
        %2004 = vmatprep.subr.bf16.mxu0 0
        %2005 = vmatpush1.bf16.msra.mxu0 %v1984
        %2006 = vmatprep.subr.bf16.mxu0 0
        %2007 = vmatpush1.bf16.msra.mxu0 %v1985
        %2008 = vmatprep.subr.bf16.mxu0 0
        %2009 = vmatpush1.bf16.msra.mxu0 %v1986
        %2010 = vmatprep.subr.bf16.mxu0 0
        %2011 = vmatpush1.bf16.msra.mxu0 %v1987
        %2012 = vmatprep.subr.bf16.mxu0 0
        %2013 = vmatpush1.bf16.msra.mxu0 0
        %2014 = vmatprep.subr.bf16.mxu0 0
        %2015 = vmatpush1.bf16.msra.mxu0 0
        %2016 = vmatprep.subr.bf16.mxu0 0
        %2017 = vmatpush1.bf16.msra.mxu0 0
        %2018 = vmatprep.subr.bf16.mxu0 0
        %2019 = vmatpush1.bf16.msra.mxu0 0
        %2020 = vmatprep.subr.bf16.mxu0 0
        %2021 = vmatpush1.bf16.msra.mxu0 0
        %2022 = vmatprep.subr.bf16.mxu0 0
        %2023 = vmatpush1.bf16.msra.mxu0 0
        %2024 = vmatprep.subr.bf16.mxu0 0
        %2025 = vmatpush1.bf16.msra.mxu0 0
        %2026 = vmatprep.subr.bf16.mxu0 0
        %2027 = vmatpush1.bf16.msra.mxu0 0
        %2028 = vmatprep.mubr.bf16.mxu0 0
        %2029 = vmatmul.mubr.bf16.gmra.mrb[0].mxu0 %v1941
        %v2030 = vpop.f32.mrb[0].mxu0
        %v2031 = vadd.f32 %v1946, %v2030
        %v2032 = vpop.f32.mrb[0].mxu0
        %v2033 = vpop.f32.mrb[0].mxu0
        %v2034 = vadd.f32 %v1946, %v2033
        %v2035 = vpop.f32.mrb[0].mxu0
        %2036 = vdwg.mxu0
        %v2037 = vadd.f32 %v1115, %v2031
        %v2038 = vadd.f32 %v1116, %v2034
        %2039 = vadd.xlane.f32.xlu0 %v2037
        %v2040 = vpop.xlane.xlu0 %2039
        %2041 = vadd.xlane.f32.xlu0 %v2038
        %v2042 = vpop.xlane.xlu0 %2041
        %v2043 = vmul.f32 %v2040, %v1127
        %v2044 = vmul.f32 %v2042, %v1127
        %v2045 = vsub.f32 %v2037, %v2043
        %v2046 = vsub.f32 %v2038, %v2044
        %v2047 = vmul.f32 %v2045, %v2045
        %v2048 = vmul.f32 %v2046, %v2046
        %2049 = vadd.xlane.f32.xlu0 %v2047
        %v2050 = vpop.xlane.xlu0 %2049
        %2051 = vadd.xlane.f32.xlu0 %v2048
        %v2052 = vpop.xlane.xlu0 %2051
        %v2053 = vmul.f32 %v2050, %v1138
        %v2054 = vmul.f32 %v2052, %v1138
        %v2056 = vlaneseq
        %v2057 = vshrl.u32 %v2056, 7
        %v2058 = vsub.s32 0, %v2057
        %v2059 = vrot.slane %v1111, %v2058
        %v2061 = vmul.f32 %v2059, %v2045
        %v2062 = vmul.f32 %v2059, %v2046
        %v2063 = vrsqrt.pop %v2053
        %v2064 = vmul.f32 %v2053, %v2063
        %vm2065 = vcmp.eq.f32.partialorder %v2053, inf
        %v2066 = vsel %vm2065, %v2053, %v2064
        %vm2067 = vcmp.eq.f32.partialorder %v2053, 0.0
        %v2068 = vand.u32 %v2053, 2147483648
        %v2069 = vsel %vm2067, %v2068, %v2066
        %v2070 = vrsqrt.pop %v2054
        %v2071 = vmul.f32 %v2054, %v2070
        %vm2072 = vcmp.eq.f32.partialorder %v2054, inf
        %v2073 = vsel %vm2072, %v2054, %v2071
        %vm2074 = vcmp.eq.f32.partialorder %v2054, 0.0
        %v2075 = vand.u32 %v2054, 2147483648
        %v2076 = vsel %vm2074, %v2075, %v2073
        %v2077 = vadd.f32 %v2069, 1e-06
        %v2078 = vadd.f32 %v2076, 1e-06
        %v2079 = vrcp.pop %v2077
        %v2080 = vmul.f32 %v2061, %v2079
        %v2081 = vrcp.pop %v2078
        %v2082 = vmul.f32 %v2062, %v2081
        %v2084 = vlaneseq
        %v2085 = vshrl.u32 %v2084, 7
        %v2086 = vsub.s32 0, %v2085
        %v2087 = vrot.slane %v1112, %v2086
        %v2089 = vadd.f32 %v2080, %v2087
        %v2090 = vadd.f32 %v2082, %v2087
        %v2091 = vpack.c.bf16 %v2090, %v2089
        %v2093 = vlaneseq
        %v2094 = vshrl.u32 %v2093, 7
        %v2095 = vsub.s32 0, %v2094
        %v2096 = vrot.slane %v1024, %v2095
        %v2114 = vunpack.c.l.b16 %v1008
        %v2115 = vunpack.c.l.b16 %v1009
        %v2116 = vunpack.c.l.b16 %v1010
        %v2117 = vunpack.c.l.b16 %v1011
        %v2118 = vunpack.c.l.b16 %v1012
        %v2119 = vunpack.c.l.b16 %v1013
        %v2120 = vunpack.c.l.b16 %v1014
        %v2121 = vunpack.c.l.b16 %v1015
        %v2122 = vunpack.c.l.b16 %v1016
        %v2123 = vunpack.c.l.b16 %v1017
        %v2124 = vunpack.c.l.b16 %v1018
        %v2125 = vunpack.c.l.b16 %v1019
        %v2126 = vunpack.c.l.b16 %v1020
        %v2127 = vunpack.c.l.b16 %v1021
        %v2128 = vunpack.c.l.b16 %v1022
        %v2129 = vunpack.c.l.b16 %v1023
        %v2130 = vpack.c.b16 %v2115, %v2114
        %v2131 = vpack.c.b16 %v2117, %v2116
        %v2132 = vpack.c.b16 %v2119, %v2118
        %v2133 = vpack.c.b16 %v2121, %v2120
        %v2134 = vpack.c.b16 %v2123, %v2122
        %v2135 = vpack.c.b16 %v2125, %v2124
        %v2136 = vpack.c.b16 %v2127, %v2126
        %v2137 = vpack.c.b16 %v2129, %v2128
        %2146 = vmatprep.subr.bf16.mxu0 0
        %2147 = vmatpush1.bf16.msra.mxu0 %v2130
        %2148 = vmatprep.subr.bf16.mxu0 0
        %2149 = vmatpush1.bf16.msra.mxu0 %v2131
        %2150 = vmatprep.subr.bf16.mxu0 0
        %2151 = vmatpush1.bf16.msra.mxu0 %v2132
        %2152 = vmatprep.subr.bf16.mxu0 0
        %2153 = vmatpush1.bf16.msra.mxu0 %v2133
        %2154 = vmatprep.subr.bf16.mxu0 0
        %2155 = vmatpush1.bf16.msra.mxu0 %v2134
        %2156 = vmatprep.subr.bf16.mxu0 0
        %2157 = vmatpush1.bf16.msra.mxu0 %v2135
        %2158 = vmatprep.subr.bf16.mxu0 0
        %2159 = vmatpush1.bf16.msra.mxu0 %v2136
        %2160 = vmatprep.subr.bf16.mxu0 0
        %2161 = vmatpush1.bf16.msra.mxu0 %v2137
        %2162 = vmatprep.subr.bf16.mxu0 0
        %2163 = vmatpush1.bf16.msra.mxu0 0
        %2164 = vmatprep.subr.bf16.mxu0 0
        %2165 = vmatpush1.bf16.msra.mxu0 0
        %2166 = vmatprep.subr.bf16.mxu0 0
        %2167 = vmatpush1.bf16.msra.mxu0 0
        %2168 = vmatprep.subr.bf16.mxu0 0
        %2169 = vmatpush1.bf16.msra.mxu0 0
        %2170 = vmatprep.subr.bf16.mxu0 0
        %2171 = vmatpush1.bf16.msra.mxu0 0
        %2172 = vmatprep.subr.bf16.mxu0 0
        %2173 = vmatpush1.bf16.msra.mxu0 0
        %2174 = vmatprep.subr.bf16.mxu0 0
        %2175 = vmatpush1.bf16.msra.mxu0 0
        %2176 = vmatprep.subr.bf16.mxu0 0
        %2177 = vmatpush1.bf16.msra.mxu0 0
        %2178 = vmatprep.mubr.bf16.mxu0 0
        %2179 = vmatmul.mubr.bf16.gmra.mrb[0].mxu0 %v2091
        %v2180 = vpop.f32.mrb[0].mxu0
        %v2181 = vadd.f32 %v2096, %v2180
        %v2182 = vpop.f32.mrb[0].mxu0
        %v2183 = vpop.f32.mrb[0].mxu0
        %v2184 = vadd.f32 %v2096, %v2183
        %v2185 = vpop.f32.mrb[0].mxu0
        %2186 = vdwg.mxu0
        %v2187 = vmul.f32 %v2181, 0.17677669
        %v2188 = vmul.f32 %v2184, 0.17677669
        %v2189 = vpack.c.bf16 %v1118, %v1117
        %v2191 = vlaneseq
        %v2192 = vshrl.u32 %v2191, 7
        %v2193 = vsub.s32 0, %v2192
        %v2194 = vrot.slane %v1041, %v2193
        %v2195 = vlaneseq
        %v2196 = vshrl.u32 %v2195, 7
        %v2197 = vsub.s32 1, %v2196
        %v2198 = vrot.slane %v1041, %v2197
        %v2217 = vunpack.c.l.b16 %v1025
        %v2218 = vunpack.c.h.b16 %v1025
        %v2219 = vunpack.c.l.b16 %v1026
        %v2220 = vunpack.c.h.b16 %v1026
        %v2221 = vunpack.c.l.b16 %v1027
        %v2222 = vunpack.c.h.b16 %v1027
        %v2223 = vunpack.c.l.b16 %v1028
        %v2224 = vunpack.c.h.b16 %v1028
        %v2225 = vunpack.c.l.b16 %v1029
        %v2226 = vunpack.c.h.b16 %v1029
        %v2227 = vunpack.c.l.b16 %v1030
        %v2228 = vunpack.c.h.b16 %v1030
        %v2229 = vunpack.c.l.b16 %v1031
        %v2230 = vunpack.c.h.b16 %v1031
        %v2231 = vunpack.c.l.b16 %v1032
        %v2232 = vunpack.c.h.b16 %v1032
        %v2233 = vunpack.c.l.b16 %v1033
        %v2234 = vunpack.c.h.b16 %v1033
        %v2235 = vunpack.c.l.b16 %v1034
        %v2236 = vunpack.c.h.b16 %v1034
        %v2237 = vunpack.c.l.b16 %v1035
        %v2238 = vunpack.c.h.b16 %v1035
        %v2239 = vunpack.c.l.b16 %v1036
        %v2240 = vunpack.c.h.b16 %v1036
        %v2241 = vunpack.c.l.b16 %v1037
        %v2242 = vunpack.c.h.b16 %v1037
        %v2243 = vunpack.c.l.b16 %v1038
        %v2244 = vunpack.c.h.b16 %v1038
        %v2245 = vunpack.c.l.b16 %v1039
        %v2246 = vunpack.c.h.b16 %v1039
        %v2247 = vunpack.c.l.b16 %v1040
        %v2248 = vunpack.c.h.b16 %v1040
        %v2249 = vpack.c.b16 %v2219, %v2217
        %v2250 = vpack.c.b16 %v2220, %v2218
        %v2251 = vpack.c.b16 %v2223, %v2221
        %v2252 = vpack.c.b16 %v2224, %v2222
        %v2253 = vpack.c.b16 %v2227, %v2225
        %v2254 = vpack.c.b16 %v2228, %v2226
        %v2255 = vpack.c.b16 %v2231, %v2229
        %v2256 = vpack.c.b16 %v2232, %v2230
        %v2257 = vpack.c.b16 %v2235, %v2233
        %v2258 = vpack.c.b16 %v2236, %v2234
        %v2259 = vpack.c.b16 %v2239, %v2237
        %v2260 = vpack.c.b16 %v2240, %v2238
        %v2261 = vpack.c.b16 %v2243, %v2241
        %v2262 = vpack.c.b16 %v2244, %v2242
        %v2263 = vpack.c.b16 %v2247, %v2245
        %v2264 = vpack.c.b16 %v2248, %v2246
        %2281 = vmatprep.subr.bf16.mxu0 %v2250
        %2282 = vmatpush1.bf16.msra.mxu0 %v2249
        %2283 = vmatprep.subr.bf16.mxu0 %v2252
        %2284 = vmatpush1.bf16.msra.mxu0 %v2251
        %2285 = vmatprep.subr.bf16.mxu0 %v2254
        %2286 = vmatpush1.bf16.msra.mxu0 %v2253
        %2287 = vmatprep.subr.bf16.mxu0 %v2256
        %2288 = vmatpush1.bf16.msra.mxu0 %v2255
        %2289 = vmatprep.subr.bf16.mxu0 %v2258
        %2290 = vmatpush1.bf16.msra.mxu0 %v2257
        %2291 = vmatprep.subr.bf16.mxu0 %v2260
        %2292 = vmatpush1.bf16.msra.mxu0 %v2259
        %2293 = vmatprep.subr.bf16.mxu0 %v2262
        %2294 = vmatpush1.bf16.msra.mxu0 %v2261
        %2295 = vmatprep.subr.bf16.mxu0 %v2264
        %2296 = vmatpush1.bf16.msra.mxu0 %v2263
        %2297 = vmatprep.subr.bf16.mxu0 0
        %2298 = vmatpush1.bf16.msra.mxu0 0
        %2299 = vmatprep.subr.bf16.mxu0 0
        %2300 = vmatpush1.bf16.msra.mxu0 0
        %2301 = vmatprep.subr.bf16.mxu0 0
        %2302 = vmatpush1.bf16.msra.mxu0 0
        %2303 = vmatprep.subr.bf16.mxu0 0
        %2304 = vmatpush1.bf16.msra.mxu0 0
        %2305 = vmatprep.subr.bf16.mxu0 0
        %2306 = vmatpush1.bf16.msra.mxu0 0
        %2307 = vmatprep.subr.bf16.mxu0 0
        %2308 = vmatpush1.bf16.msra.mxu0 0
        %2309 = vmatprep.subr.bf16.mxu0 0
        %2310 = vmatpush1.bf16.msra.mxu0 0
        %2311 = vmatprep.subr.bf16.mxu0 0
        %2312 = vmatpush1.bf16.msra.mxu0 0
        %2313 = vmatprep.mubr.bf16.mxu0 0
        %2314 = vmatmul.mubr.bf16.gmra.mrb[0].mxu0 %v2189
        %v2315 = vpop.f32.mrb[0].mxu0
        %v2316 = vadd.f32 %v2194, %v2315
        %v2317 = vpop.f32.mrb[0].mxu0
        %v2318 = vadd.f32 %v2198, %v2317
        %v2319 = vpop.f32.mrb[0].mxu0
        %v2320 = vadd.f32 %v2194, %v2319
        %v2321 = vpop.f32.mrb[0].mxu0
        %v2322 = vadd.f32 %v2198, %v2321
        %2323 = vdwg.mxu0
        %vm2324 = vnez %v1119
        %vm2325 = vnez %v1120
        %v2326 = vpack.c.bf16 %v2188, %v2187
        %v2327 = vpack.c.bf16 %v2320, %v2316
        %v2328 = vpack.c.bf16 %v2322, %v2318
        %v2330 = vsel %vm1413, %v2326, 0
        %v2333 = vsel %vm1413, %v2327, 0
        %2335 = vmatprep.subr.bf16.mxu0 0
        %2336 = vmatpush1.bf16.xpose.msra.mxu0 %v2333
        %2337 = vmatprep.subr.bf16.mxu0 0
        %2338 = vmatpush1.bf16.xpose.msra.mxu0 0
        %2339 = vmatprep.subr.bf16.mxu0 0
        %2340 = vmatpush1.bf16.xpose.msra.mxu0 0
        %2341 = vmatprep.subr.bf16.mxu0 0
        %2342 = vmatpush1.bf16.xpose.msra.mxu0 0
        %2343 = vmatprep.subr.bf16.mxu0 0
        %2344 = vmatpush1.bf16.xpose.msra.mxu0 0
        %2345 = vmatprep.subr.bf16.mxu0 0
        %2346 = vmatpush1.bf16.xpose.msra.mxu0 0
        %2347 = vmatprep.subr.bf16.mxu0 0
        %2348 = vmatpush1.bf16.xpose.msra.mxu0 0
        %2349 = vmatprep.subr.bf16.mxu0 0
        %2350 = vmatpush1.bf16.xpose.msra.mxu0 0
        %2351 = vmatprep.subr.bf16.mxu0 0
        %2352 = vmatpush1.bf16.xpose.msra.mxu0 0
        %2353 = vmatprep.subr.bf16.mxu0 0
        %2354 = vmatpush1.bf16.xpose.msra.mxu0 0
        %2355 = vmatprep.subr.bf16.mxu0 0
        %2356 = vmatpush1.bf16.xpose.msra.mxu0 0
        %2357 = vmatprep.subr.bf16.mxu0 0
        %2358 = vmatpush1.bf16.xpose.msra.mxu0 0
        %2359 = vmatprep.subr.bf16.mxu0 0
        %2360 = vmatpush1.bf16.xpose.msra.mxu0 0
        %2361 = vmatprep.subr.bf16.mxu0 0
        %2362 = vmatpush1.bf16.xpose.msra.mxu0 0
        %2363 = vmatprep.subr.bf16.mxu0 0
        %2364 = vmatpush1.bf16.xpose.msra.mxu0 0
        %2365 = vmatprep.subr.bf16.mxu0 0
        %2366 = vmatpush1.bf16.xpose.msra.mxu0 0
        %2367 = vmatprep.mubr.bf16.mxu0 0
        %2368 = vmatmul.mubr.bf16.gmra.mrb[0].mxu0 %v2330
        %v2369 = vpop.f32.mrb[0].mxu0
        %v2370 = vadd.f32 0.0, %v2369
        %v2371 = vpop.f32.mrb[0].mxu0
        %v2372 = vpop.f32.mrb[0].mxu0
        %v2373 = vadd.f32 0.0, %v2372
        %v2374 = vpop.f32.mrb[0].mxu0
        %2375 = vdwg.mxu0
        %v2376 = vsel %vm2324, 16843009, 0
        %v2377 = vsel %vm2325, 16843009, 0
        %v2378 = vunpack.c.0.s8 %v2376
        %v2379 = vunpack.c.0.s8 %v2377
        %vm2380 = vcmp.ne.s32.totalorder %v2378, 0
        %vm2381 = vcmp.ne.s32.totalorder %v2379, 0
        %v2382 = vsel %vm2380, %v2370, -1e+09
        %v2383 = vsel %vm2381, %v2373, -1e+09
        %v2384 = vsel %vm1469, %v2382, -inf
        %2385 = vmax.xlane.f32.xlu0 %v2384
        %v2386 = vpop.xlane.xlu0 %2385
        %v2387 = vsel %vm1469, %v2383, -inf
        %2388 = vmax.xlane.f32.xlu0 %v2387
        %v2389 = vpop.xlane.xlu0 %2388
        %v2390 = vsub.f32 %v2382, %v2386
        %v2391 = vsub.f32 %v2383, %v2389
        %v2392 = vmul.f32 %v2390, 1.442695
        %v2393 = vpow.pop %v2392
        %v2394 = vmul.f32 %v2391, 1.442695
        %v2395 = vpow.pop %v2394
        %v2396 = vsel %vm1469, %v2393, 0.0
        %2397 = vadd.xlane.f32.xlu0 %v2396
        %v2398 = vpop.xlane.xlu0 %2397
        %v2399 = vsel %vm1469, %v2395, 0.0
        %2400 = vadd.xlane.f32.xlu0 %v2399
        %v2401 = vpop.xlane.xlu0 %2400
        %v2402 = vrcp.pop %v2398
        %v2403 = vmul.f32 %v2393, %v2402
        %v2404 = vrcp.pop %v2401
        %v2405 = vmul.f32 %v2395, %v2404
        %v2406 = vpack.c.bf16 %v2405, %v2403
        %v2408 = vsel %vm1469, %v2406, 0
        %2410 = vmatprep.subr.bf16.mxu0 0
        %2411 = vmatpush1.bf16.msra.mxu0 %v2328
        %2412 = vmatprep.subr.bf16.mxu0 0
        %2413 = vmatpush1.bf16.msra.mxu0 0
        %2414 = vmatprep.subr.bf16.mxu0 0
        %2415 = vmatpush1.bf16.msra.mxu0 0
        %2416 = vmatprep.subr.bf16.mxu0 0
        %2417 = vmatpush1.bf16.msra.mxu0 0
        %2418 = vmatprep.subr.bf16.mxu0 0
        %2419 = vmatpush1.bf16.msra.mxu0 0
        %2420 = vmatprep.subr.bf16.mxu0 0
        %2421 = vmatpush1.bf16.msra.mxu0 0
        %2422 = vmatprep.subr.bf16.mxu0 0
        %2423 = vmatpush1.bf16.msra.mxu0 0
        %2424 = vmatprep.subr.bf16.mxu0 0
        %2425 = vmatpush1.bf16.msra.mxu0 0
        %2426 = vmatprep.subr.bf16.mxu0 0
        %2427 = vmatpush1.bf16.msra.mxu0 0
        %2428 = vmatprep.subr.bf16.mxu0 0
        %2429 = vmatpush1.bf16.msra.mxu0 0
        %2430 = vmatprep.subr.bf16.mxu0 0
        %2431 = vmatpush1.bf16.msra.mxu0 0
        %2432 = vmatprep.subr.bf16.mxu0 0
        %2433 = vmatpush1.bf16.msra.mxu0 0
        %2434 = vmatprep.subr.bf16.mxu0 0
        %2435 = vmatpush1.bf16.msra.mxu0 0
        %2436 = vmatprep.subr.bf16.mxu0 0
        %2437 = vmatpush1.bf16.msra.mxu0 0
        %2438 = vmatprep.subr.bf16.mxu0 0
        %2439 = vmatpush1.bf16.msra.mxu0 0
        %2440 = vmatprep.subr.bf16.mxu0 0
        %2441 = vmatpush1.bf16.msra.mxu0 0
        %2442 = vmatprep.mubr.bf16.mxu0 0
        %2443 = vmatmul.mubr.bf16.gmra.mrb[0].mxu0 %v2408
        %v2444 = vpop.f32.mrb[0].mxu0
        %v2445 = vadd.f32 0.0, %v2444
        %v2446 = vpop.f32.mrb[0].mxu0
        %v2447 = vpop.f32.mrb[0].mxu0
        %v2448 = vadd.f32 0.0, %v2447
        %v2449 = vpop.f32.mrb[0].mxu0
        %2450 = vdwg.mxu0
        %2452 = vrot.lane.b32.xlu0 %v2326, 96
        %v2453 = vpop.permute.xlu0 %2452
        %2455 = vrot.lane.b32.xlu0 %v2327, 96
        %v2456 = vpop.permute.xlu0 %2455
        %v2458 = vsel %vm1413, %v2453, 0
        %v2461 = vsel %vm1413, %v2456, 0
        %2463 = vmatprep.subr.bf16.mxu0 0
        %2464 = vmatpush1.bf16.xpose.msra.mxu0 %v2461
        %2465 = vmatprep.subr.bf16.mxu0 0
        %2466 = vmatpush1.bf16.xpose.msra.mxu0 0
        %2467 = vmatprep.subr.bf16.mxu0 0
        %2468 = vmatpush1.bf16.xpose.msra.mxu0 0
        %2469 = vmatprep.subr.bf16.mxu0 0
        %2470 = vmatpush1.bf16.xpose.msra.mxu0 0
        %2471 = vmatprep.subr.bf16.mxu0 0
        %2472 = vmatpush1.bf16.xpose.msra.mxu0 0
        %2473 = vmatprep.subr.bf16.mxu0 0
        %2474 = vmatpush1.bf16.xpose.msra.mxu0 0
        %2475 = vmatprep.subr.bf16.mxu0 0
        %2476 = vmatpush1.bf16.xpose.msra.mxu0 0
        %2477 = vmatprep.subr.bf16.mxu0 0
        %2478 = vmatpush1.bf16.xpose.msra.mxu0 0
        %2479 = vmatprep.subr.bf16.mxu0 0
        %2480 = vmatpush1.bf16.xpose.msra.mxu0 0
        %2481 = vmatprep.subr.bf16.mxu0 0
        %2482 = vmatpush1.bf16.xpose.msra.mxu0 0
        %2483 = vmatprep.subr.bf16.mxu0 0
        %2484 = vmatpush1.bf16.xpose.msra.mxu0 0
        %2485 = vmatprep.subr.bf16.mxu0 0
        %2486 = vmatpush1.bf16.xpose.msra.mxu0 0
        %2487 = vmatprep.subr.bf16.mxu0 0
        %2488 = vmatpush1.bf16.xpose.msra.mxu0 0
        %2489 = vmatprep.subr.bf16.mxu0 0
        %2490 = vmatpush1.bf16.xpose.msra.mxu0 0
        %2491 = vmatprep.subr.bf16.mxu0 0
        %2492 = vmatpush1.bf16.xpose.msra.mxu0 0
        %2493 = vmatprep.subr.bf16.mxu0 0
        %2494 = vmatpush1.bf16.xpose.msra.mxu0 0
        %2495 = vmatprep.mubr.bf16.mxu0 0
        %2496 = vmatmul.mubr.bf16.gmra.mrb[0].mxu0 %v2458
        %v2497 = vpop.f32.mrb[0].mxu0
        %v2498 = vadd.f32 0.0, %v2497
        %v2499 = vpop.f32.mrb[0].mxu0
        %v2500 = vpop.f32.mrb[0].mxu0
        %v2501 = vadd.f32 0.0, %v2500
        %v2502 = vpop.f32.mrb[0].mxu0
        %2503 = vdwg.mxu0
        %v2504 = vsel %vm2380, %v2498, -1e+09
        %v2505 = vsel %vm2381, %v2501, -1e+09
        %v2506 = vsel %vm1469, %v2504, -inf
        %2507 = vmax.xlane.f32.xlu0 %v2506
        %v2508 = vpop.xlane.xlu0 %2507
        %v2509 = vsel %vm1469, %v2505, -inf
        %2510 = vmax.xlane.f32.xlu0 %v2509
        %v2511 = vpop.xlane.xlu0 %2510
        %v2512 = vsub.f32 %v2504, %v2508
        %v2513 = vsub.f32 %v2505, %v2511
        %v2514 = vmul.f32 %v2512, 1.442695
        %v2515 = vpow.pop %v2514
        %v2516 = vmul.f32 %v2513, 1.442695
        %v2517 = vpow.pop %v2516
        %v2518 = vsel %vm1469, %v2515, 0.0
        %2519 = vadd.xlane.f32.xlu0 %v2518
        %v2520 = vpop.xlane.xlu0 %2519
        %v2521 = vsel %vm1469, %v2517, 0.0
        %2522 = vadd.xlane.f32.xlu0 %v2521
        %v2523 = vpop.xlane.xlu0 %2522
        %v2524 = vrcp.pop %v2520
        %v2525 = vmul.f32 %v2515, %v2524
        %v2526 = vrcp.pop %v2523
        %v2527 = vmul.f32 %v2517, %v2526
        %v2528 = vpack.c.bf16 %v2527, %v2525
        %2530 = vrot.lane.b32.xlu0 %v2328, 96
        %v2531 = vpop.permute.xlu0 %2530
        %v2534 = vsel %vm1469, %v2528, 0
        %2536 = vmatprep.subr.bf16.mxu0 0
        %2537 = vmatpush1.bf16.msra.mxu0 %v2531
        %2538 = vmatprep.subr.bf16.mxu0 0
        %2539 = vmatpush1.bf16.msra.mxu0 0
        %2540 = vmatprep.subr.bf16.mxu0 0
        %2541 = vmatpush1.bf16.msra.mxu0 0
        %2542 = vmatprep.subr.bf16.mxu0 0
        %2543 = vmatpush1.bf16.msra.mxu0 0
        %2544 = vmatprep.subr.bf16.mxu0 0
        %2545 = vmatpush1.bf16.msra.mxu0 0
        %2546 = vmatprep.subr.bf16.mxu0 0
        %2547 = vmatpush1.bf16.msra.mxu0 0
        %2548 = vmatprep.subr.bf16.mxu0 0
        %2549 = vmatpush1.bf16.msra.mxu0 0
        %2550 = vmatprep.subr.bf16.mxu0 0
        %2551 = vmatpush1.bf16.msra.mxu0 0
        %2552 = vmatprep.subr.bf16.mxu0 0
        %2553 = vmatpush1.bf16.msra.mxu0 0
        %2554 = vmatprep.subr.bf16.mxu0 0
        %2555 = vmatpush1.bf16.msra.mxu0 0
        %2556 = vmatprep.subr.bf16.mxu0 0
        %2557 = vmatpush1.bf16.msra.mxu0 0
        %2558 = vmatprep.subr.bf16.mxu0 0
        %2559 = vmatpush1.bf16.msra.mxu0 0
        %2560 = vmatprep.subr.bf16.mxu0 0
        %2561 = vmatpush1.bf16.msra.mxu0 0
        %2562 = vmatprep.subr.bf16.mxu0 0
        %2563 = vmatpush1.bf16.msra.mxu0 0
        %2564 = vmatprep.subr.bf16.mxu0 0
        %2565 = vmatpush1.bf16.msra.mxu0 0
        %2566 = vmatprep.subr.bf16.mxu0 0
        %2567 = vmatpush1.bf16.msra.mxu0 0
        %2568 = vmatprep.mubr.bf16.mxu0 0
        %2569 = vmatmul.mubr.bf16.gmra.mrb[0].mxu0 %v2534
        %v2570 = vpop.f32.mrb[0].mxu0
        %v2571 = vadd.f32 0.0, %v2570
        %v2572 = vpop.f32.mrb[0].mxu0
        %v2573 = vpop.f32.mrb[0].mxu0
        %v2574 = vadd.f32 0.0, %v2573
        %v2575 = vpop.f32.mrb[0].mxu0
        %2576 = vdwg.mxu0
        %2577 = vrot.lane.b32.xlu0 %v2326, 64
        %v2578 = vpop.permute.xlu0 %2577
        %2579 = vrot.lane.b32.xlu0 %v2327, 64
        %v2580 = vpop.permute.xlu0 %2579
        %v2582 = vsel %vm1413, %v2578, 0
        %v2585 = vsel %vm1413, %v2580, 0
        %2587 = vmatprep.subr.bf16.mxu0 0
        %2588 = vmatpush1.bf16.xpose.msra.mxu0 %v2585
        %2589 = vmatprep.subr.bf16.mxu0 0
        %2590 = vmatpush1.bf16.xpose.msra.mxu0 0
        %2591 = vmatprep.subr.bf16.mxu0 0
        %2592 = vmatpush1.bf16.xpose.msra.mxu0 0
        %2593 = vmatprep.subr.bf16.mxu0 0
        %2594 = vmatpush1.bf16.xpose.msra.mxu0 0
        %2595 = vmatprep.subr.bf16.mxu0 0
        %2596 = vmatpush1.bf16.xpose.msra.mxu0 0
        %2597 = vmatprep.subr.bf16.mxu0 0
        %2598 = vmatpush1.bf16.xpose.msra.mxu0 0
        %2599 = vmatprep.subr.bf16.mxu0 0
        %2600 = vmatpush1.bf16.xpose.msra.mxu0 0
        %2601 = vmatprep.subr.bf16.mxu0 0
        %2602 = vmatpush1.bf16.xpose.msra.mxu0 0
        %2603 = vmatprep.subr.bf16.mxu0 0
        %2604 = vmatpush1.bf16.xpose.msra.mxu0 0
        %2605 = vmatprep.subr.bf16.mxu0 0
        %2606 = vmatpush1.bf16.xpose.msra.mxu0 0
        %2607 = vmatprep.subr.bf16.mxu0 0
        %2608 = vmatpush1.bf16.xpose.msra.mxu0 0
        %2609 = vmatprep.subr.bf16.mxu0 0
        %2610 = vmatpush1.bf16.xpose.msra.mxu0 0
        %2611 = vmatprep.subr.bf16.mxu0 0
        %2612 = vmatpush1.bf16.xpose.msra.mxu0 0
        %2613 = vmatprep.subr.bf16.mxu0 0
        %2614 = vmatpush1.bf16.xpose.msra.mxu0 0
        %2615 = vmatprep.subr.bf16.mxu0 0
        %2616 = vmatpush1.bf16.xpose.msra.mxu0 0
        %2617 = vmatprep.subr.bf16.mxu0 0
        %2618 = vmatpush1.bf16.xpose.msra.mxu0 0
        %2619 = vmatprep.mubr.bf16.mxu0 0
        %2620 = vmatmul.mubr.bf16.gmra.mrb[0].mxu0 %v2582
        %v2621 = vpop.f32.mrb[0].mxu0
        %v2622 = vadd.f32 0.0, %v2621
        %v2623 = vpop.f32.mrb[0].mxu0
        %v2624 = vpop.f32.mrb[0].mxu0
        %v2625 = vadd.f32 0.0, %v2624
        %v2626 = vpop.f32.mrb[0].mxu0
        %2627 = vdwg.mxu0
        %v2628 = vsel %vm2380, %v2622, -1e+09
        %v2629 = vsel %vm2381, %v2625, -1e+09
        %v2630 = vsel %vm1469, %v2628, -inf
        %2631 = vmax.xlane.f32.xlu0 %v2630
        %v2632 = vpop.xlane.xlu0 %2631
        %v2633 = vsel %vm1469, %v2629, -inf
        %2634 = vmax.xlane.f32.xlu0 %v2633
        %v2635 = vpop.xlane.xlu0 %2634
        %v2636 = vsub.f32 %v2628, %v2632
        %v2637 = vsub.f32 %v2629, %v2635
        %v2638 = vmul.f32 %v2636, 1.442695
        %v2639 = vpow.pop %v2638
        %v2640 = vmul.f32 %v2637, 1.442695
        %v2641 = vpow.pop %v2640
        %v2642 = vsel %vm1469, %v2639, 0.0
        %2643 = vadd.xlane.f32.xlu0 %v2642
        %v2644 = vpop.xlane.xlu0 %2643
        %v2645 = vsel %vm1469, %v2641, 0.0
        %2646 = vadd.xlane.f32.xlu0 %v2645
        %v2647 = vpop.xlane.xlu0 %2646
        %v2648 = vrcp.pop %v2644
        %v2649 = vmul.f32 %v2639, %v2648
        %v2650 = vrcp.pop %v2647
        %v2651 = vmul.f32 %v2641, %v2650
        %v2652 = vpack.c.bf16 %v2651, %v2649
        %2653 = vrot.lane.b32.xlu0 %v2328, 64
        %v2654 = vpop.permute.xlu0 %2653
        %v2657 = vsel %vm1469, %v2652, 0
        %2659 = vmatprep.subr.bf16.mxu0 0
        %2660 = vmatpush1.bf16.msra.mxu0 %v2654
        %2661 = vmatprep.subr.bf16.mxu0 0
        %2662 = vmatpush1.bf16.msra.mxu0 0
        %2663 = vmatprep.subr.bf16.mxu0 0
        %2664 = vmatpush1.bf16.msra.mxu0 0
        %2665 = vmatprep.subr.bf16.mxu0 0
        %2666 = vmatpush1.bf16.msra.mxu0 0
        %2667 = vmatprep.subr.bf16.mxu0 0
        %2668 = vmatpush1.bf16.msra.mxu0 0
        %2669 = vmatprep.subr.bf16.mxu0 0
        %2670 = vmatpush1.bf16.msra.mxu0 0
        %2671 = vmatprep.subr.bf16.mxu0 0
        %2672 = vmatpush1.bf16.msra.mxu0 0
        %2673 = vmatprep.subr.bf16.mxu0 0
        %2674 = vmatpush1.bf16.msra.mxu0 0
        %2675 = vmatprep.subr.bf16.mxu0 0
        %2676 = vmatpush1.bf16.msra.mxu0 0
        %2677 = vmatprep.subr.bf16.mxu0 0
        %2678 = vmatpush1.bf16.msra.mxu0 0
        %2679 = vmatprep.subr.bf16.mxu0 0
        %2680 = vmatpush1.bf16.msra.mxu0 0
        %2681 = vmatprep.subr.bf16.mxu0 0
        %2682 = vmatpush1.bf16.msra.mxu0 0
        %2683 = vmatprep.subr.bf16.mxu0 0
        %2684 = vmatpush1.bf16.msra.mxu0 0
        %2685 = vmatprep.subr.bf16.mxu0 0
        %2686 = vmatpush1.bf16.msra.mxu0 0
        %2687 = vmatprep.subr.bf16.mxu0 0
        %2688 = vmatpush1.bf16.msra.mxu0 0
        %2689 = vmatprep.subr.bf16.mxu0 0
        %2690 = vmatpush1.bf16.msra.mxu0 0
        %2691 = vmatprep.mubr.bf16.mxu0 0
        %2692 = vmatmul.mubr.bf16.gmra.mrb[0].mxu0 %v2657
        %v2693 = vpop.f32.mrb[0].mxu0
        %v2694 = vadd.f32 0.0, %v2693
        %v2695 = vpop.f32.mrb[0].mxu0
        %v2696 = vpop.f32.mrb[0].mxu0
        %v2697 = vadd.f32 0.0, %v2696
        %v2698 = vpop.f32.mrb[0].mxu0
        %2699 = vdwg.mxu0
        %2700 = vrot.lane.b32.xlu0 %v2326, 32
        %v2701 = vpop.permute.xlu0 %2700
        %2702 = vrot.lane.b32.xlu0 %v2327, 32
        %v2703 = vpop.permute.xlu0 %2702
        %v2705 = vsel %vm1413, %v2701, 0
        %v2708 = vsel %vm1413, %v2703, 0
        %2710 = vmatprep.subr.bf16.mxu0 0
        %2711 = vmatpush1.bf16.xpose.msra.mxu0 %v2708
        %2712 = vmatprep.subr.bf16.mxu0 0
        %2713 = vmatpush1.bf16.xpose.msra.mxu0 0
        %2714 = vmatprep.subr.bf16.mxu0 0
        %2715 = vmatpush1.bf16.xpose.msra.mxu0 0
        %2716 = vmatprep.subr.bf16.mxu0 0
        %2717 = vmatpush1.bf16.xpose.msra.mxu0 0
        %2718 = vmatprep.subr.bf16.mxu0 0
        %2719 = vmatpush1.bf16.xpose.msra.mxu0 0
        %2720 = vmatprep.subr.bf16.mxu0 0
        %2721 = vmatpush1.bf16.xpose.msra.mxu0 0
        %2722 = vmatprep.subr.bf16.mxu0 0
        %2723 = vmatpush1.bf16.xpose.msra.mxu0 0
        %2724 = vmatprep.subr.bf16.mxu0 0
        %2725 = vmatpush1.bf16.xpose.msra.mxu0 0
        %2726 = vmatprep.subr.bf16.mxu0 0
        %2727 = vmatpush1.bf16.xpose.msra.mxu0 0
        %2728 = vmatprep.subr.bf16.mxu0 0
        %2729 = vmatpush1.bf16.xpose.msra.mxu0 0
        %2730 = vmatprep.subr.bf16.mxu0 0
        %2731 = vmatpush1.bf16.xpose.msra.mxu0 0
        %2732 = vmatprep.subr.bf16.mxu0 0
        %2733 = vmatpush1.bf16.xpose.msra.mxu0 0
        %2734 = vmatprep.subr.bf16.mxu0 0
        %2735 = vmatpush1.bf16.xpose.msra.mxu0 0
        %2736 = vmatprep.subr.bf16.mxu0 0
        %2737 = vmatpush1.bf16.xpose.msra.mxu0 0
        %2738 = vmatprep.subr.bf16.mxu0 0
        %2739 = vmatpush1.bf16.xpose.msra.mxu0 0
        %2740 = vmatprep.subr.bf16.mxu0 0
        %2741 = vmatpush1.bf16.xpose.msra.mxu0 0
        %2742 = vmatprep.mubr.bf16.mxu0 0
        %2743 = vmatmul.mubr.bf16.gmra.mrb[0].mxu0 %v2705
        %v2744 = vpop.f32.mrb[0].mxu0
        %v2745 = vadd.f32 0.0, %v2744
        %v2746 = vpop.f32.mrb[0].mxu0
        %v2747 = vpop.f32.mrb[0].mxu0
        %v2748 = vadd.f32 0.0, %v2747
        %v2749 = vpop.f32.mrb[0].mxu0
        %2750 = vdwg.mxu0
        %v2751 = vsel %vm2380, %v2745, -1e+09
        %v2752 = vsel %vm2381, %v2748, -1e+09
        %v2753 = vsel %vm1469, %v2751, -inf
        %2754 = vmax.xlane.f32.xlu0 %v2753
        %v2755 = vpop.xlane.xlu0 %2754
        %v2756 = vsel %vm1469, %v2752, -inf
        %2757 = vmax.xlane.f32.xlu0 %v2756
        %v2758 = vpop.xlane.xlu0 %2757
        %v2759 = vsub.f32 %v2751, %v2755
        %v2760 = vsub.f32 %v2752, %v2758
        %v2761 = vmul.f32 %v2759, 1.442695
        %v2762 = vpow.pop %v2761
        %v2763 = vmul.f32 %v2760, 1.442695
        %v2764 = vpow.pop %v2763
        %v2765 = vsel %vm1469, %v2762, 0.0
        %2766 = vadd.xlane.f32.xlu0 %v2765
        %v2767 = vpop.xlane.xlu0 %2766
        %v2768 = vsel %vm1469, %v2764, 0.0
        %2769 = vadd.xlane.f32.xlu0 %v2768
        %v2770 = vpop.xlane.xlu0 %2769
        %v2771 = vrcp.pop %v2767
        %v2772 = vmul.f32 %v2762, %v2771
        %v2773 = vrcp.pop %v2770
        %v2774 = vmul.f32 %v2764, %v2773
        %v2775 = vpack.c.bf16 %v2774, %v2772
        %2776 = vrot.lane.b32.xlu0 %v2328, 32
        %v2777 = vpop.permute.xlu0 %2776
        %v2780 = vsel %vm1469, %v2775, 0
        %2782 = vmatprep.subr.bf16.mxu0 0
        %2783 = vmatpush1.bf16.msra.mxu0 %v2777
        %2784 = vmatprep.subr.bf16.mxu0 0
        %2785 = vmatpush1.bf16.msra.mxu0 0
        %2786 = vmatprep.subr.bf16.mxu0 0
        %2787 = vmatpush1.bf16.msra.mxu0 0
        %2788 = vmatprep.subr.bf16.mxu0 0
        %2789 = vmatpush1.bf16.msra.mxu0 0
        %2790 = vmatprep.subr.bf16.mxu0 0
        %2791 = vmatpush1.bf16.msra.mxu0 0
        %2792 = vmatprep.subr.bf16.mxu0 0
        %2793 = vmatpush1.bf16.msra.mxu0 0
        %2794 = vmatprep.subr.bf16.mxu0 0
        %2795 = vmatpush1.bf16.msra.mxu0 0
        %2796 = vmatprep.subr.bf16.mxu0 0
        %2797 = vmatpush1.bf16.msra.mxu0 0
        %2798 = vmatprep.subr.bf16.mxu0 0
        %2799 = vmatpush1.bf16.msra.mxu0 0
        %2800 = vmatprep.subr.bf16.mxu0 0
        %2801 = vmatpush1.bf16.msra.mxu0 0
        %2802 = vmatprep.subr.bf16.mxu0 0
        %2803 = vmatpush1.bf16.msra.mxu0 0
        %2804 = vmatprep.subr.bf16.mxu0 0
        %2805 = vmatpush1.bf16.msra.mxu0 0
        %2806 = vmatprep.subr.bf16.mxu0 0
        %2807 = vmatpush1.bf16.msra.mxu0 0
        %2808 = vmatprep.subr.bf16.mxu0 0
        %2809 = vmatpush1.bf16.msra.mxu0 0
        %2810 = vmatprep.subr.bf16.mxu0 0
        %2811 = vmatpush1.bf16.msra.mxu0 0
        %2812 = vmatprep.subr.bf16.mxu0 0
        %2813 = vmatpush1.bf16.msra.mxu0 0
        %2814 = vmatprep.mubr.bf16.mxu0 0
        %2815 = vmatmul.mubr.bf16.gmra.mrb[0].mxu0 %v2780
        %v2816 = vpop.f32.mrb[0].mxu0
        %v2817 = vadd.f32 0.0, %v2816
        %v2818 = vpop.f32.mrb[0].mxu0
        %v2819 = vpop.f32.mrb[0].mxu0
        %v2820 = vadd.f32 0.0, %v2819
        %v2821 = vpop.f32.mrb[0].mxu0
        %2822 = vdwg.mxu0
        %2825 = vrot.lane.b32.xlu0 %v2571, 32
        %v2826 = vpop.permute.xlu0 %2825
        %2827 = vrot.lane.b32.xlu0 %v2574, 32
        %v2828 = vpop.permute.xlu0 %2827
        %2833 = vrot.lane.b32.xlu0 %v2694, 64
        %v2834 = vpop.permute.xlu0 %2833
        %2835 = vrot.lane.b32.xlu0 %v2697, 64
        %v2836 = vpop.permute.xlu0 %2835
        %2841 = vrot.lane.b32.xlu0 %v2817, 96
        %v2842 = vpop.permute.xlu0 %2841
        %2843 = vrot.lane.b32.xlu0 %v2820, 96
        %v2844 = vpop.permute.xlu0 %2843
        %v2847 = vsel %vm1413, %v2445, %v2826
        %v2848 = vsel %vm1413, %v2448, %v2828
        %v2849 = vsel %vm1935, %v2847, %v2834
        %v2850 = vsel %vm1935, %v2848, %v2836
        %v2851 = vsel %vm1938, %v2849, %v2842
        %v2852 = vsel %vm1938, %v2850, %v2844
        %v2853 = vpack.c.bf16 %v2852, %v2851
        %v2855 = vlaneseq
        %v2856 = vshrl.u32 %v2855, 7
        %v2857 = vsub.s32 0, %v2856
        %v2858 = vrot.slane %v1058, %v2857
        %v2876 = vunpack.c.l.b16 %v1042
        %v2877 = vunpack.c.l.b16 %v1043
        %v2878 = vunpack.c.l.b16 %v1044
        %v2879 = vunpack.c.l.b16 %v1045
        %v2880 = vunpack.c.l.b16 %v1046
        %v2881 = vunpack.c.l.b16 %v1047
        %v2882 = vunpack.c.l.b16 %v1048
        %v2883 = vunpack.c.l.b16 %v1049
        %v2884 = vunpack.c.l.b16 %v1050
        %v2885 = vunpack.c.l.b16 %v1051
        %v2886 = vunpack.c.l.b16 %v1052
        %v2887 = vunpack.c.l.b16 %v1053
        %v2888 = vunpack.c.l.b16 %v1054
        %v2889 = vunpack.c.l.b16 %v1055
        %v2890 = vunpack.c.l.b16 %v1056
        %v2891 = vunpack.c.l.b16 %v1057
        %v2892 = vpack.c.b16 %v2877, %v2876
        %v2893 = vpack.c.b16 %v2879, %v2878
        %v2894 = vpack.c.b16 %v2881, %v2880
        %v2895 = vpack.c.b16 %v2883, %v2882
        %v2896 = vpack.c.b16 %v2885, %v2884
        %v2897 = vpack.c.b16 %v2887, %v2886
        %v2898 = vpack.c.b16 %v2889, %v2888
        %v2899 = vpack.c.b16 %v2891, %v2890
        %2908 = vmatprep.subr.bf16.mxu0 0
        %2909 = vmatpush1.bf16.msra.mxu0 %v2892
        %2910 = vmatprep.subr.bf16.mxu0 0
        %2911 = vmatpush1.bf16.msra.mxu0 %v2893
        %2912 = vmatprep.subr.bf16.mxu0 0
        %2913 = vmatpush1.bf16.msra.mxu0 %v2894
        %2914 = vmatprep.subr.bf16.mxu0 0
        %2915 = vmatpush1.bf16.msra.mxu0 %v2895
        %2916 = vmatprep.subr.bf16.mxu0 0
        %2917 = vmatpush1.bf16.msra.mxu0 %v2896
        %2918 = vmatprep.subr.bf16.mxu0 0
        %2919 = vmatpush1.bf16.msra.mxu0 %v2897
        %2920 = vmatprep.subr.bf16.mxu0 0
        %2921 = vmatpush1.bf16.msra.mxu0 %v2898
        %2922 = vmatprep.subr.bf16.mxu0 0
        %2923 = vmatpush1.bf16.msra.mxu0 %v2899
        %2924 = vmatprep.subr.bf16.mxu0 0
        %2925 = vmatpush1.bf16.msra.mxu0 0
        %2926 = vmatprep.subr.bf16.mxu0 0
        %2927 = vmatpush1.bf16.msra.mxu0 0
        %2928 = vmatprep.subr.bf16.mxu0 0
        %2929 = vmatpush1.bf16.msra.mxu0 0
        %2930 = vmatprep.subr.bf16.mxu0 0
        %2931 = vmatpush1.bf16.msra.mxu0 0
        %2932 = vmatprep.subr.bf16.mxu0 0
        %2933 = vmatpush1.bf16.msra.mxu0 0
        %2934 = vmatprep.subr.bf16.mxu0 0
        %2935 = vmatpush1.bf16.msra.mxu0 0
        %2936 = vmatprep.subr.bf16.mxu0 0
        %2937 = vmatpush1.bf16.msra.mxu0 0
        %2938 = vmatprep.subr.bf16.mxu0 0
        %2939 = vmatpush1.bf16.msra.mxu0 0
        %2940 = vmatprep.mubr.bf16.mxu0 0
        %2941 = vmatmul.mubr.bf16.gmra.mrb[0].mxu0 %v2853
        %v2942 = vpop.f32.mrb[0].mxu0
        %v2943 = vadd.f32 %v2858, %v2942
        %v2944 = vpop.f32.mrb[0].mxu0
        %v2945 = vpop.f32.mrb[0].mxu0
        %v2946 = vadd.f32 %v2858, %v2945
        %v2947 = vpop.f32.mrb[0].mxu0
        %2948 = vdwg.mxu0
        %v2949 = vadd.f32 %v2037, %v2943
        %v2950 = vadd.f32 %v2038, %v2946
        %2951 = vadd.xlane.f32.xlu0 %v2949
        %v2952 = vpop.xlane.xlu0 %2951
        %2953 = vadd.xlane.f32.xlu0 %v2950
        %v2954 = vpop.xlane.xlu0 %2953
        %v2955 = vmul.f32 %v2952, %v1127
        %v2956 = vmul.f32 %v2954, %v1127
        %v2957 = vsub.f32 %v2949, %v2955
        %v2958 = vsub.f32 %v2950, %v2956
        %v2959 = vmul.f32 %v2957, %v2957
        %v2960 = vmul.f32 %v2958, %v2958
        %2961 = vadd.xlane.f32.xlu0 %v2959
        %v2962 = vpop.xlane.xlu0 %2961
        %2963 = vadd.xlane.f32.xlu0 %v2960
        %v2964 = vpop.xlane.xlu0 %2963
        %v2965 = vmul.f32 %v2962, %v1138
        %v2966 = vmul.f32 %v2964, %v1138
        %v2968 = vlaneseq
        %v2969 = vshrl.u32 %v2968, 7
        %v2970 = vsub.s32 0, %v2969
        %v2971 = vrot.slane %v1113, %v2970
        %v2973 = vmul.f32 %v2971, %v2957
        %v2974 = vmul.f32 %v2971, %v2958
        %v2975 = vrsqrt.pop %v2965
        %v2976 = vmul.f32 %v2965, %v2975
        %vm2977 = vcmp.eq.f32.partialorder %v2965, inf
        %v2978 = vsel %vm2977, %v2965, %v2976
        %vm2979 = vcmp.eq.f32.partialorder %v2965, 0.0
        %v2980 = vand.u32 %v2965, 2147483648
        %v2981 = vsel %vm2979, %v2980, %v2978
        %v2982 = vrsqrt.pop %v2966
        %v2983 = vmul.f32 %v2966, %v2982
        %vm2984 = vcmp.eq.f32.partialorder %v2966, inf
        %v2985 = vsel %vm2984, %v2966, %v2983
        %vm2986 = vcmp.eq.f32.partialorder %v2966, 0.0
        %v2987 = vand.u32 %v2966, 2147483648
        %v2988 = vsel %vm2986, %v2987, %v2985
        %v2989 = vadd.f32 %v2981, 1e-06
        %v2990 = vadd.f32 %v2988, 1e-06
        %v2991 = vrcp.pop %v2989
        %v2992 = vmul.f32 %v2973, %v2991
        %v2993 = vrcp.pop %v2990
        %v2994 = vmul.f32 %v2974, %v2993
        %v2996 = vlaneseq
        %v2997 = vshrl.u32 %v2996, 7
        %v2998 = vsub.s32 0, %v2997
        %v2999 = vrot.slane %v1114, %v2998
        %v3001 = vadd.f32 %v2992, %v2999
        %v3002 = vadd.f32 %v2994, %v2999
        %v3003 = vpack.c.bf16 %v3002, %v3001
        %v3005 = vlaneseq
        %v3006 = vshrl.u32 %v3005, 7
        %v3007 = vsub.s32 0, %v3006
        %v3008 = vrot.slane %v1075, %v3007
        %v3009 = vlaneseq
        %v3010 = vshrl.u32 %v3009, 7
        %v3011 = vsub.s32 1, %v3010
        %v3012 = vrot.slane %v1075, %v3011
        %v3031 = vunpack.c.l.b16 %v1059
        %v3032 = vunpack.c.h.b16 %v1059
        %v3033 = vunpack.c.l.b16 %v1060
        %v3034 = vunpack.c.h.b16 %v1060
        %v3035 = vunpack.c.l.b16 %v1061
        %v3036 = vunpack.c.h.b16 %v1061
        %v3037 = vunpack.c.l.b16 %v1062
        %v3038 = vunpack.c.h.b16 %v1062
        %v3039 = vunpack.c.l.b16 %v1063
        %v3040 = vunpack.c.h.b16 %v1063
        %v3041 = vunpack.c.l.b16 %v1064
        %v3042 = vunpack.c.h.b16 %v1064
        %v3043 = vunpack.c.l.b16 %v1065
        %v3044 = vunpack.c.h.b16 %v1065
        %v3045 = vunpack.c.l.b16 %v1066
        %v3046 = vunpack.c.h.b16 %v1066
        %v3047 = vunpack.c.l.b16 %v1067
        %v3048 = vunpack.c.h.b16 %v1067
        %v3049 = vunpack.c.l.b16 %v1068
        %v3050 = vunpack.c.h.b16 %v1068
        %v3051 = vunpack.c.l.b16 %v1069
        %v3052 = vunpack.c.h.b16 %v1069
        %v3053 = vunpack.c.l.b16 %v1070
        %v3054 = vunpack.c.h.b16 %v1070
        %v3055 = vunpack.c.l.b16 %v1071
        %v3056 = vunpack.c.h.b16 %v1071
        %v3057 = vunpack.c.l.b16 %v1072
        %v3058 = vunpack.c.h.b16 %v1072
        %v3059 = vunpack.c.l.b16 %v1073
        %v3060 = vunpack.c.h.b16 %v1073
        %v3061 = vunpack.c.l.b16 %v1074
        %v3062 = vunpack.c.h.b16 %v1074
        %v3063 = vpack.c.b16 %v3033, %v3031
        %v3064 = vpack.c.b16 %v3034, %v3032
        %v3065 = vpack.c.b16 %v3037, %v3035
        %v3066 = vpack.c.b16 %v3038, %v3036
        %v3067 = vpack.c.b16 %v3041, %v3039
        %v3068 = vpack.c.b16 %v3042, %v3040
        %v3069 = vpack.c.b16 %v3045, %v3043
        %v3070 = vpack.c.b16 %v3046, %v3044
        %v3071 = vpack.c.b16 %v3049, %v3047
        %v3072 = vpack.c.b16 %v3050, %v3048
        %v3073 = vpack.c.b16 %v3053, %v3051
        %v3074 = vpack.c.b16 %v3054, %v3052
        %v3075 = vpack.c.b16 %v3057, %v3055
        %v3076 = vpack.c.b16 %v3058, %v3056
        %v3077 = vpack.c.b16 %v3061, %v3059
        %v3078 = vpack.c.b16 %v3062, %v3060
        %3095 = vmatprep.subr.bf16.mxu0 %v3064
        %3096 = vmatpush1.bf16.msra.mxu0 %v3063
        %3097 = vmatprep.subr.bf16.mxu0 %v3066
        %3098 = vmatpush1.bf16.msra.mxu0 %v3065
        %3099 = vmatprep.subr.bf16.mxu0 %v3068
        %3100 = vmatpush1.bf16.msra.mxu0 %v3067
        %3101 = vmatprep.subr.bf16.mxu0 %v3070
        %3102 = vmatpush1.bf16.msra.mxu0 %v3069
        %3103 = vmatprep.subr.bf16.mxu0 %v3072
        %3104 = vmatpush1.bf16.msra.mxu0 %v3071
        %3105 = vmatprep.subr.bf16.mxu0 %v3074
        %3106 = vmatpush1.bf16.msra.mxu0 %v3073
        %3107 = vmatprep.subr.bf16.mxu0 %v3076
        %3108 = vmatpush1.bf16.msra.mxu0 %v3075
        %3109 = vmatprep.subr.bf16.mxu0 %v3078
        %3110 = vmatpush1.bf16.msra.mxu0 %v3077
        %3111 = vmatprep.subr.bf16.mxu0 0
        %3112 = vmatpush1.bf16.msra.mxu0 0
        %3113 = vmatprep.subr.bf16.mxu0 0
        %3114 = vmatpush1.bf16.msra.mxu0 0
        %3115 = vmatprep.subr.bf16.mxu0 0
        %3116 = vmatpush1.bf16.msra.mxu0 0
        %3117 = vmatprep.subr.bf16.mxu0 0
        %3118 = vmatpush1.bf16.msra.mxu0 0
        %3119 = vmatprep.subr.bf16.mxu0 0
        %3120 = vmatpush1.bf16.msra.mxu0 0
        %3121 = vmatprep.subr.bf16.mxu0 0
        %3122 = vmatpush1.bf16.msra.mxu0 0
        %3123 = vmatprep.subr.bf16.mxu0 0
        %3124 = vmatpush1.bf16.msra.mxu0 0
        %3125 = vmatprep.subr.bf16.mxu0 0
        %3126 = vmatpush1.bf16.msra.mxu0 0
        %3127 = vmatprep.mubr.bf16.mxu0 0
        %3128 = vmatmul.mubr.bf16.gmra.mrb[0].mxu0 %v3003
        %v3129 = vpop.f32.mrb[0].mxu0
        %v3130 = vadd.f32 %v3008, %v3129
        %v3131 = vpop.f32.mrb[0].mxu0
        %v3132 = vadd.f32 %v3012, %v3131
        %v3133 = vpop.f32.mrb[0].mxu0
        %v3134 = vadd.f32 %v3008, %v3133
        %v3135 = vpop.f32.mrb[0].mxu0
        %v3136 = vadd.f32 %v3012, %v3135
        %3137 = vdwg.mxu0
        %v3138 = vmax.f32 %v3130, 0.0
        %v3139 = vmax.f32 %v3132, 0.0
        %v3140 = vmax.f32 %v3134, 0.0
        %v3141 = vmax.f32 %v3136, 0.0
        %v3142 = vpack.c.bf16 %v3140, %v3138
        %v3143 = vpack.c.bf16 %v3141, %v3139
        %v3145 = vlaneseq
        %v3146 = vshrl.u32 %v3145, 7
        %v3147 = vsub.s32 0, %v3146
        %v3148 = vrot.slane %v1108, %v3147
        %v3182 = vunpack.c.l.b16 %v1076
        %v3183 = vunpack.c.l.b16 %v1077
        %v3184 = vunpack.c.l.b16 %v1078
        %v3185 = vunpack.c.l.b16 %v1079
        %v3186 = vunpack.c.l.b16 %v1080
        %v3187 = vunpack.c.l.b16 %v1081
        %v3188 = vunpack.c.l.b16 %v1082
        %v3189 = vunpack.c.l.b16 %v1083
        %v3190 = vunpack.c.l.b16 %v1084
        %v3191 = vunpack.c.l.b16 %v1085
        %v3192 = vunpack.c.l.b16 %v1086
        %v3193 = vunpack.c.l.b16 %v1087
        %v3194 = vunpack.c.l.b16 %v1088
        %v3195 = vunpack.c.l.b16 %v1089
        %v3196 = vunpack.c.l.b16 %v1090
        %v3197 = vunpack.c.l.b16 %v1091
        %v3198 = vunpack.c.l.b16 %v1092
        %v3199 = vunpack.c.l.b16 %v1093
        %v3200 = vunpack.c.l.b16 %v1094
        %v3201 = vunpack.c.l.b16 %v1095
        %v3202 = vunpack.c.l.b16 %v1096
        %v3203 = vunpack.c.l.b16 %v1097
        %v3204 = vunpack.c.l.b16 %v1098
        %v3205 = vunpack.c.l.b16 %v1099
        %v3206 = vunpack.c.l.b16 %v1100
        %v3207 = vunpack.c.l.b16 %v1101
        %v3208 = vunpack.c.l.b16 %v1102
        %v3209 = vunpack.c.l.b16 %v1103
        %v3210 = vunpack.c.l.b16 %v1104
        %v3211 = vunpack.c.l.b16 %v1105
        %v3212 = vunpack.c.l.b16 %v1106
        %v3213 = vunpack.c.l.b16 %v1107
        %v3214 = vpack.c.b16 %v3183, %v3182
        %v3215 = vpack.c.b16 %v3185, %v3184
        %v3216 = vpack.c.b16 %v3187, %v3186
        %v3217 = vpack.c.b16 %v3189, %v3188
        %v3218 = vpack.c.b16 %v3191, %v3190
        %v3219 = vpack.c.b16 %v3193, %v3192
        %v3220 = vpack.c.b16 %v3195, %v3194
        %v3221 = vpack.c.b16 %v3197, %v3196
        %v3222 = vpack.c.b16 %v3199, %v3198
        %v3223 = vpack.c.b16 %v3201, %v3200
        %v3224 = vpack.c.b16 %v3203, %v3202
        %v3225 = vpack.c.b16 %v3205, %v3204
        %v3226 = vpack.c.b16 %v3207, %v3206
        %v3227 = vpack.c.b16 %v3209, %v3208
        %v3228 = vpack.c.b16 %v3211, %v3210
        %v3229 = vpack.c.b16 %v3213, %v3212
        %3246 = vmatprep.subr.bf16.mxu0 0
        %3247 = vmatpush1.bf16.msra.mxu0 %v3214
        %3248 = vmatprep.subr.bf16.mxu0 0
        %3249 = vmatpush1.bf16.msra.mxu0 %v3215
        %3250 = vmatprep.subr.bf16.mxu0 0
        %3251 = vmatpush1.bf16.msra.mxu0 %v3216
        %3252 = vmatprep.subr.bf16.mxu0 0
        %3253 = vmatpush1.bf16.msra.mxu0 %v3217
        %3254 = vmatprep.subr.bf16.mxu0 0
        %3255 = vmatpush1.bf16.msra.mxu0 %v3218
        %3256 = vmatprep.subr.bf16.mxu0 0
        %3257 = vmatpush1.bf16.msra.mxu0 %v3219
        %3258 = vmatprep.subr.bf16.mxu0 0
        %3259 = vmatpush1.bf16.msra.mxu0 %v3220
        %3260 = vmatprep.subr.bf16.mxu0 0
        %3261 = vmatpush1.bf16.msra.mxu0 %v3221
        %3262 = vmatprep.subr.bf16.mxu0 0
        %3263 = vmatpush1.bf16.msra.mxu0 %v3222
        %3264 = vmatprep.subr.bf16.mxu0 0
        %3265 = vmatpush1.bf16.msra.mxu0 %v3223
        %3266 = vmatprep.subr.bf16.mxu0 0
        %3267 = vmatpush1.bf16.msra.mxu0 %v3224
        %3268 = vmatprep.subr.bf16.mxu0 0
        %3269 = vmatpush1.bf16.msra.mxu0 %v3225
        %3270 = vmatprep.subr.bf16.mxu0 0
        %3271 = vmatpush1.bf16.msra.mxu0 %v3226
        %3272 = vmatprep.subr.bf16.mxu0 0
        %3273 = vmatpush1.bf16.msra.mxu0 %v3227
        %3274 = vmatprep.subr.bf16.mxu0 0
        %3275 = vmatpush1.bf16.msra.mxu0 %v3228
        %3276 = vmatprep.subr.bf16.mxu0 0
        %3277 = vmatpush1.bf16.msra.mxu0 %v3229
        %3278 = vmatprep.mubr.bf16.mxu0 %v3143
        %3279 = vmatmul.mubr.bf16.gmra.mrb[0].mxu0 %v3142
        %v3280 = vpop.f32.mrb[0].mxu0
        %v3281 = vadd.f32 %v3148, %v3280
        %v3282 = vpop.f32.mrb[0].mxu0
        %v3283 = vpop.f32.mrb[0].mxu0
        %v3284 = vadd.f32 %v3148, %v3283
        %v3285 = vpop.f32.mrb[0].mxu0
        %3286 = vdwg.mxu0
        %v3287 = vadd.f32 %v2949, %v3281
        %v3288 = vadd.f32 %v2950, %v3284
        %3289 = vst [vmem:[%s949] sm:$0xff] %v3287
        %3290 = vst [vmem:[%s949 + $0x8] sm:$0xff] %v3288
        %s3291 = sand.u32 %s580, 1
        %s3292 = scalar_lea.sflag [#allocation4], %s3291
        %s3293 = sand.u32 %s580, 1
        %s3294 = smul.addr %s3293, 16
        %s3295 = scalar_lea.vmem [#allocation19], %s3294
        // Predicated region
        $region157: #{tpu_custom_call.1} parent=115 // pred_check
          %p3296 = pneg %p590
        $region158: #{tpu_custom_call.1} parent=115 // pred_check_branch
          %3298 = sbr.rel (%p3296) target = $region160
        $region159: #{tpu_custom_call.1} parent=115 // pred_region
          %s3300 = ssub.s32 256, 256
          %3301 = vsyncadd %s3292, %s3300
          %s3302 = smul.addr %s48, 2
          %s3303 = smul.addr %s3302, 128
          %s3304 = scalar_lea.hbm %s24, %s3303
          %s3305 = sshll.u32 %s3295, 4
          %s3306 = int_to_ptr.vmem [resolvable:$true] %s3305
          %3311 = dma.vmem_to_hbm [thread:$0]  %s3306, 256, %s3304, %s3292, 128, 128, 8
        $region160: #{tpu_custom_call.1} parent=115 // pred_fallthru
          _
      $region116: #{tpu_custom_call.1} parent=5 // pred_fallthru
        _
      %p3312 = scmp.le.s32.totalorder 2, %s43
      // Predicated region
      $region161: #{tpu_custom_call.1} parent=5 // pred_check
        %p3313 = pneg %p3312
      $region162: #{tpu_custom_call.1} parent=5 // pred_check_branch
        %3315 = sbr.rel (%p3313) target = $region164
      $region163: #{tpu_custom_call.1} parent=5 // pred_region
        %s3316 = ssub.s32 %s43, 2
        // Predicated region
        $region165: #{tpu_custom_call.1} parent=163 // pred_check
          %p3317 = pneg %p596
        $region166: #{tpu_custom_call.1} parent=163 // pred_check_branch
          %3319 = sbr.rel (%p3317) target = $region168
        $region167: #{tpu_custom_call.1} parent=163 // pred_region
          %s3320 = sand.u32 %s581, 1
          %s3321 = scalar_lea.sflag [#allocation4], %s3320
          %s3322 = sand.u32 %s581, 1
          %s3323 = smul.addr %s3322, 16
          %s3324 = scalar_lea.vmem [#allocation19], %s3323
          %3325 = dma.done %s3321, 256
        $region168: #{tpu_custom_call.1} parent=163 // pred_fallthru
          _
      $region164: #{tpu_custom_call.1} parent=5 // pred_fallthru
        _
    $region6: #{tpu_custom_call.1} parent=1 // loop_footer
      %s47 = sadd.s32 1, %s43
    $region7: #{tpu_custom_call.1} parent=1 // loop_footer_branch
      %42 = sbr.rel target = $region3
    $region8: #{tpu_custom_call.1} parent=1 // loop_exit
      _
    %3326 = vsyncpa [#allocation3], 1
    %s3327 = scalar_lea.sflag [#allocation3], 1
    %3328 = vsyncpa %s3327, 1
    %3329 = vsyncpa [#allocation6], 1
    %s3330 = scalar_lea.sflag [#allocation6], 1
    %3331 = vsyncpa %s3330, 1
    %3332 = vsyncpa [#allocation9], 1
    %3333 = vsyncpa [#allocation12], 1
    %3334 = vsyncpa [#allocation15], 1
    %3335 = vsyncpa [#allocation18], 1
    %3336 = vsyncpa [#allocation4], 1
    %s3337 = scalar_lea.sflag [#allocation4], 1
    %3338 = vsyncpa %s3337, 1

</llo_original>
